<compile_context>
chip_gen: v5e
topology: v5e:2x2
jax: 0.10.0
libtpu: 0.0.40
codegen_flags: <defaults>
</compile_context>

<pallas_src>
import functools

import jax
import jax.numpy as jnp
from jax.experimental import pallas as pl
from jax.experimental.pallas import tpu as pltpu


_VMEM_LIMIT = 48 * 1024 * 1024  # fits v7x's 64 MiB physical VMEM; plenty for v5e/v6e too


# ---------------------------------------------------------------------------
# Kernel 1: 3x3 Conv (BN folded) + bias + ReLU, in-kernel patch gather, bf16 out
# ---------------------------------------------------------------------------
def _conv3x3_relu_kernel(x_ref, w_ref, b_ref, o_ref, *, kh, kw, wp):
    # x_ref: (1, FH, Cin) bf16  -- one image, spatially padded + halo row, rows flattened
    # w_ref: (kh, kw, Cin, tn) bf16 (resident), b_ref: (1, tn) f32, o_ref: (1, M, tn) bf16
    m = o_ref.shape[1]
    tn = o_ref.shape[2]
    acc = jnp.zeros((m, tn), jnp.float32)
    for dy in range(kh):            # static tap loop == the whole K reduction (no K grid axis)
        for dx in range(kw):
            win = x_ref[0, pl.ds(dy * wp + dx, m), :]          # shifted full-width rows (2-D)
            acc += jnp.dot(win, w_ref[dy, dx], preferred_element_type=jnp.float32)
    out = jnp.maximum(acc + b_ref[...], 0.0)                   # f32 epilogue on the VPU
    o_ref[0] = out.astype(o_ref.dtype)


# ---------------------------------------------------------------------------
# Kernel 2: last conv + bias + ReLU with the global-average-pool fused in the epilogue
# ---------------------------------------------------------------------------
def _conv3x3_relu_gap_kernel(x_ref, w_ref, b_ref, mask_ref, o_ref, *, kh, kw, wp, inv_hw):
    # Same conv as kernel 1, but the feature map never leaves VMEM: mask out the full-width
    # halo columns and emit the spatial mean directly.  o_ref: (1, 1, tn) f32.
    m = mask_ref.shape[0]
    tn = o_ref.shape[2]
    acc = jnp.zeros((m, tn), jnp.float32)
    for dy in range(kh):
        for dx in range(kw):
            win = x_ref[0, pl.ds(dy * wp + dx, m), :]
            acc += jnp.dot(win, w_ref[dy, dx], preferred_element_type=jnp.float32)
    act = jnp.maximum(acc + b_ref[...], 0.0) * mask_ref[...]   # zero the invalid halo columns
    o_ref[0] = (jnp.sum(act, axis=0, keepdims=True) * inv_hw).astype(o_ref.dtype)


# ---------------------------------------------------------------------------
# Kernel 3: replaced fc head  (pooled @ W + b -> ReLU; Dropout(0.5) eval-identity)
# ---------------------------------------------------------------------------
def _fc_relu_kernel(x_ref, w_ref, b_ref, o_ref):
    y = jnp.dot(x_ref[...], w_ref[...], preferred_element_type=jnp.float32) + b_ref[...]
    o_ref[...] = jnp.maximum(y, 0.0).astype(o_ref.dtype)


# ---------------------------------------------------------------------------
# Wrappers
# ---------------------------------------------------------------------------
def _flatten_with_halo(x, kh, kw):
    """(B,H,W,C) -> SAME-pad spatially (+1 halo row for the tap shifts), flatten rows: (B,FH,C)."""
    B, H, W, C = x.shape
    ph, pw = (kh - 1) // 2, (kw - 1) // 2
    xp = jnp.pad(x, ((0, 0), (ph, ph + 1), (pw, pw), (0, 0)))   # +1 bottom row: shift halo
    Hp, Wp = H + 2 * ph + 1, W + 2 * pw
    return xp.reshape(B, Hp * Wp, C), Wp


def _pick_tn(cout):
    return 256 if cout % 256 == 0 else 128   # 256-wide N tiles fill the v6e/v7x MXU when possible


def conv3x3_bn_relu(x, w, b):
    """Pallas Conv2d(3x3, stride 1, SAME) + folded-BN bias + ReLU.  x:(B,H,W,Cin) bf16 -> bf16."""
    B, H, W, Cin = x.shape
    kh, kw, _, Cout = w.shape
    tn = _pick_tn(Cout)
    assert Cout % tn == 0 and Cin % 128 == 0, "channels are padded to 128-multiples at setup"
    xf, Wp = _flatten_with_halo(x, kh, kw)
    FH = xf.shape[1]
    M = H * Wp                                   # full-width output rows (halo cols sliced below)
    kernel = functools.partial(_conv3x3_relu_kernel, kh=kh, kw=kw, wp=Wp)
    outf = pl.pallas_call(
        kernel,
        out_shape=jax.ShapeDtypeStruct((B, M, Cout), jnp.bfloat16),
        grid_spec=pltpu.PrefetchScalarGridSpec(
            num_scalar_prefetch=0,
            grid=(B, Cout // tn),
            in_specs=[
                pl.BlockSpec((1, FH, Cin), lambda bb, n: (bb, 0, 0)),       # one padded image
                pl.BlockSpec((kh, kw, Cin, tn), lambda bb, n: (0, 0, 0, n)),  # resident weight
                pl.BlockSpec((1, tn), lambda bb, n: (0, n)),
            ],
            out_specs=pl.BlockSpec((1, M, tn), lambda bb, n: (bb, 0, n)),
        ),
        compiler_params=pltpu.CompilerParams(
            dimension_semantics=("parallel", "parallel"),
            vmem_limit_bytes=_VMEM_LIMIT,
        ),
    )(xf, w, b.reshape(1, Cout))
    # Drop the (kw-1) halo columns of each full-width row (one small fused slice, not a 9x im2col).
    return outf.reshape(B, H, Wp, Cout)[:, :, :W, :]


def conv3x3_bn_relu_gap(x, w, b):
    """Last BasicConv2d fused with adaptive_avg_pool2d(1): returns (B, Cout) pooled means (f32)."""
    B, H, W, Cin = x.shape
    kh, kw, _, Cout = w.shape
    tn = _pick_tn(Cout)
    assert Cout % tn == 0 and Cin % 128 == 0
    xf, Wp = _flatten_with_halo(x, kh, kw)
    FH = xf.shape[1]
    M = H * Wp
    mask = ((jnp.arange(M) % Wp) < W).astype(jnp.float32).reshape(M, 1)   # valid-column mask
    kernel = functools.partial(_conv3x3_relu_gap_kernel, kh=kh, kw=kw, wp=Wp, inv_hw=1.0 / (H * W))
    pooled = pl.pallas_call(
        kernel,
        out_shape=jax.ShapeDtypeStruct((B, 1, Cout), jnp.float32),
        grid_spec=pltpu.PrefetchScalarGridSpec(
            num_scalar_prefetch=0,
            grid=(B, Cout // tn),
            in_specs=[
                pl.BlockSpec((1, FH, Cin), lambda bb, n: (bb, 0, 0)),
                pl.BlockSpec((kh, kw, Cin, tn), lambda bb, n: (0, 0, 0, n)),
                pl.BlockSpec((1, tn), lambda bb, n: (0, n)),
                pl.BlockSpec((M, 1), lambda bb, n: (0, 0)),
            ],
            out_specs=pl.BlockSpec((1, 1, tn), lambda bb, n: (bb, 0, n)),
        ),
        compiler_params=pltpu.CompilerParams(
            dimension_semantics=("parallel", "parallel"),
            vmem_limit_bytes=_VMEM_LIMIT,
        ),
    )(xf, w, b.reshape(1, Cout), mask)
    return pooled.reshape(B, Cout)


def fc_relu(pooled, w_fc, b_fc):
    """EncoderCNN head: replaced nn.Linear + ReLU (+ Dropout eval-identity)."""
    B, C = pooled.shape
    _, E = w_fc.shape
    return pl.pallas_call(
        _fc_relu_kernel,
        out_shape=jax.ShapeDtypeStruct((B, E), jnp.float32),
        grid_spec=pltpu.PrefetchScalarGridSpec(
            num_scalar_prefetch=0,
            grid=(1,),
            in_specs=[
                pl.BlockSpec((B, C), lambda i: (0, 0)),
                pl.BlockSpec((C, E), lambda i: (0, 0)),
                pl.BlockSpec((1, E), lambda i: (0, 0)),
            ],
            out_specs=pl.BlockSpec((B, E), lambda i: (0, 0)),
        ),
        compiler_params=pltpu.CompilerParams(
            dimension_semantics=("arbitrary",),
            vmem_limit_bytes=_VMEM_LIMIT,
        ),
    )(pooled, w_fc, b_fc.reshape(1, E))


# ---------------------------------------------------------------------------
# Stem (3 input channels) stays on XLA's conv: K = kh*kw*3 = 27 would waste the 128-wide MXU lanes.
# ---------------------------------------------------------------------------
def _stem_conv_relu(x, layer, *, stride=2):
    y = jax.lax.conv_general_dilated(
        x, layer["w"], (stride, stride), padding="VALID",
        dimension_numbers=("NHWC", "HWIO", "NHWC"),
        precision=jax.lax.Precision.HIGHEST)
    return jnp.maximum(y + layer["b"], 0.0).astype(jnp.bfloat16)


# ---------------------------------------------------------------------------
# EncoderCNN forward (reduced backbone) + pure-JAX reference
# ---------------------------------------------------------------------------
def encoder_cnn_forward(images, params):
    """images: (B, 3, H, W) NCHW (PyTorch layout). Returns (B, embed_size)."""
    x = jnp.transpose(images, (0, 2, 3, 1))                 # NHWC: channels last -> lane-dense
    x = _stem_conv_relu(x, params["stem"])                  # XLA conv (thin-K stem), bf16 out
    x = conv3x3_bn_relu(x, params["conv2"]["w"], params["conv2"]["b"])          # Pallas
    pooled = conv3x3_bn_relu_gap(x, params["conv3"]["w"], params["conv3"]["b"])  # Pallas, GAP fused
    return fc_relu(pooled, params["w_fc"], params["b_fc"])  # Pallas head; Dropout(0.5) eval-identity


def _reference_forward(images, params):
    """Pure-JAX reference with identical dtype flow (bf16 operands, f32 accumulation)."""
    x = jnp.transpose(images, (0, 2, 3, 1))
    x = _stem_conv_relu(x, params["stem"])
    y = jax.lax.conv_general_dilated(
        x, params["conv2"]["w"], (1, 1), padding=[(1, 1), (1, 1)],
        dimension_numbers=("NHWC", "HWIO", "NHWC"), preferred_element_type=jnp.float32)
    x = jnp.maximum(y + params["conv2"]["b"], 0.0).astype(jnp.bfloat16)
    y = jax.lax.conv_general_dilated(
        x, params["conv3"]["w"], (1, 1), padding=[(1, 1), (1, 1)],
        dimension_numbers=("NHWC", "HWIO", "NHWC"), preferred_element_type=jnp.float32)
    a = jnp.maximum(y + params["conv3"]["b"], 0.0)
    pooled = jnp.mean(a, axis=(1, 2))
    feats = jnp.dot(pooled, params["w_fc"], precision=jax.lax.Precision.HIGHEST) + params["b_fc"]
    return jnp.maximum(feats, 0.0)   # Dropout(0.5) eval-mode identity


def make_params(key, *, embed_size):
    """Reduced backbone (stem + 2 BasicConv2d) + replaced fc head; eval-mode BN folded; channel
    dims chosen as multiples of 128 at setup so the kernels never pad channels at runtime."""
    keys = jax.random.split(key, 17)
    eps = 1e-3  # BatchNorm2d eps used by inception's BasicConv2d

    def basic_conv(k0, cin, cout, dtype):
        w = 0.1 * jax.random.normal(keys[k0], (3, 3, cin, cout), jnp.float32)
        gamma = 1.0 + 0.1 * jax.random.normal(keys[k0 + 1], (cout,), jnp.float32)
        beta = 0.1 * jax.random.normal(keys[k0 + 2], (cout,), jnp.float32)
        mean = 0.1 * jax.random.normal(keys[k0 + 3], (cout,), jnp.float32)
        var = 0.5 + jax.random.uniform(keys[k0 + 4], (cout,), jnp.float32)
        scale = gamma * jax.lax.rsqrt(var + eps)
        return {"w": (w * scale).astype(dtype), "b": beta - mean * scale}  # BN folded (eval)

    params = {
        "stem": basic_conv(0, 3, 128, jnp.float32),        # stride-2 stem (lax.conv path)
        "conv2": basic_conv(5, 128, 128, jnp.bfloat16),    # Pallas conv+ReLU
        "conv3": basic_conv(10, 128, 128, jnp.bfloat16),   # Pallas conv+ReLU+GAP (fused)
        "w_fc": 0.1 * jax.random.normal(keys[15], (128, embed_size), jnp.float32),
        "b_fc": 0.1 * jax.random.normal(keys[16], (embed_size,), jnp.float32),
    }
    return params


if __name__ == "__main__":
    batch, spatial, embed_size = 2, 33, 256   # small shapes (inception nominally uses 299x299)

    key = jax.random.PRNGKey(0)
    k_img, k_params = jax.random.split(key)
    images = jax.random.normal(k_img, (batch, 3, spatial, spatial), jnp.float32)
    params = make_params(k_params, embed_size=embed_size)

    out = jax.jit(encoder_cnn_forward)(images, params)
    out = jax.block_until_ready(out)

    ref = jax.jit(_reference_forward)(images, params)
    ref = jax.block_until_ready(ref)

    assert out.shape == (batch, embed_size), out.shape
    assert jnp.allclose(out, ref, atol=1e-2, rtol=1e-2), "mismatch vs JAX reference"

    print("KERNEL_OK")
</pallas_src>

<mosaic_0001>
module attributes {stable_mosaic.version = 11 : i64} {
  func.func @_conv3x3_relu_kernel(%arg0: i32, %arg1: i32, %arg2: memref<1x342x128xbf16, #tpu.memory_space<vmem>>, %arg3: memref<3x3x128x128xbf16, #tpu.memory_space<vmem>>, %arg4: memref<1x128xf32, #tpu.memory_space<vmem>>, %arg5: memref<1x288x128xbf16, #tpu.memory_space<vmem>>) attributes {dimension_semantics = [#tpu.dimension_semantics<parallel>, #tpu.dimension_semantics<parallel>], iteration_bounds = array<i64: 2, 1>, scalar_prefetch = 0 : i64, scratch_operands = 0 : i64, tpu.core_type = #tpu.core_type<tc>, window_params = [{transform_indices = @transform_0, window_bounds = array<i64: 1, 342, 128>}, {transform_indices = @transform_1, window_bounds = array<i64: 3, 3, 128, 128>}, {transform_indices = @transform_2, window_bounds = array<i64: 1, 128>}, {transform_indices = @transform_3, window_bounds = array<i64: 1, 288, 128>}]} {
    %cst = arith.constant 0.000000e+00 : f32
    %0 = vector.broadcast %cst : f32 to vector<288x128xf32>
    %c0 = arith.constant 0 : index
    %c0_0 = arith.constant 0 : index
    %c0_1 = arith.constant 0 : index
    %1 = vector.load %arg2[%c0, %c0_0, %c0_1] : memref<1x342x128xbf16, #tpu.memory_space<vmem>>, vector<1x288x128xbf16>
    %2 = vector.shape_cast %1 : vector<1x288x128xbf16> to vector<288x128xbf16>
    %c0_2 = arith.constant 0 : index
    %c0_3 = arith.constant 0 : index
    %c0_4 = arith.constant 0 : index
    %c0_5 = arith.constant 0 : index
    %3 = vector.load %arg3[%c0_2, %c0_3, %c0_4, %c0_5] : memref<3x3x128x128xbf16, #tpu.memory_space<vmem>>, vector<1x1x128x128xbf16>
    %4 = vector.shape_cast %3 : vector<1x1x128x128xbf16> to vector<128x128xbf16>
    %cst_6 = arith.constant dense<0.000000e+00> : vector<288x128xf32>
    %5 = tpu.matmul %2, %4, %cst_6 {dimension_numbers = #tpu.dot_dimension_numbers<[1], [0], [0], [1], [0, 0, 1, 1], [], []>} : vector<288x128xbf16>, vector<128x128xbf16>, vector<288x128xf32> -> vector<288x128xf32>
    %6 = arith.addf %0, %5 : vector<288x128xf32>
    %c0_7 = arith.constant 0 : index
    %c1 = arith.constant 1 : index
    %c0_8 = arith.constant 0 : index
    %7 = vector.load %arg2[%c0_7, %c1, %c0_8] : memref<1x342x128xbf16, #tpu.memory_space<vmem>>, vector<1x288x128xbf16>
    %8 = vector.shape_cast %7 : vector<1x288x128xbf16> to vector<288x128xbf16>
    %c0_9 = arith.constant 0 : index
    %c1_10 = arith.constant 1 : index
    %c0_11 = arith.constant 0 : index
    %c0_12 = arith.constant 0 : index
    %9 = vector.load %arg3[%c0_9, %c1_10, %c0_11, %c0_12] : memref<3x3x128x128xbf16, #tpu.memory_space<vmem>>, vector<1x1x128x128xbf16>
    %10 = vector.shape_cast %9 : vector<1x1x128x128xbf16> to vector<128x128xbf16>
    %cst_13 = arith.constant dense<0.000000e+00> : vector<288x128xf32>
    %11 = tpu.matmul %8, %10, %cst_13 {dimension_numbers = #tpu.dot_dimension_numbers<[1], [0], [0], [1], [0, 0, 1, 1], [], []>} : vector<288x128xbf16>, vector<128x128xbf16>, vector<288x128xf32> -> vector<288x128xf32>
    %12 = arith.addf %6, %11 : vector<288x128xf32>
    %c0_14 = arith.constant 0 : index
    %c2 = arith.constant 2 : index
    %c0_15 = arith.constant 0 : index
    %13 = vector.load %arg2[%c0_14, %c2, %c0_15] : memref<1x342x128xbf16, #tpu.memory_space<vmem>>, vector<1x288x128xbf16>
    %14 = vector.shape_cast %13 : vector<1x288x128xbf16> to vector<288x128xbf16>
    %c0_16 = arith.constant 0 : index
    %c2_17 = arith.constant 2 : index
    %c0_18 = arith.constant 0 : index
    %c0_19 = arith.constant 0 : index
    %15 = vector.load %arg3[%c0_16, %c2_17, %c0_18, %c0_19] : memref<3x3x128x128xbf16, #tpu.memory_space<vmem>>, vector<1x1x128x128xbf16>
    %16 = vector.shape_cast %15 : vector<1x1x128x128xbf16> to vector<128x128xbf16>
    %cst_20 = arith.constant dense<0.000000e+00> : vector<288x128xf32>
    %17 = tpu.matmul %14, %16, %cst_20 {dimension_numbers = #tpu.dot_dimension_numbers<[1], [0], [0], [1], [0, 0, 1, 1], [], []>} : vector<288x128xbf16>, vector<128x128xbf16>, vector<288x128xf32> -> vector<288x128xf32>
    %18 = arith.addf %12, %17 : vector<288x128xf32>
    %c0_21 = arith.constant 0 : index
    %c18 = arith.constant 18 : index
    %c0_22 = arith.constant 0 : index
    %19 = vector.load %arg2[%c0_21, %c18, %c0_22] : memref<1x342x128xbf16, #tpu.memory_space<vmem>>, vector<1x288x128xbf16>
    %20 = vector.shape_cast %19 : vector<1x288x128xbf16> to vector<288x128xbf16>
    %c1_23 = arith.constant 1 : index
    %c0_24 = arith.constant 0 : index
    %c0_25 = arith.constant 0 : index
    %c0_26 = arith.constant 0 : index
    %21 = vector.load %arg3[%c1_23, %c0_24, %c0_25, %c0_26] : memref<3x3x128x128xbf16, #tpu.memory_space<vmem>>, vector<1x1x128x128xbf16>
    %22 = vector.shape_cast %21 : vector<1x1x128x128xbf16> to vector<128x128xbf16>
    %cst_27 = arith.constant dense<0.000000e+00> : vector<288x128xf32>
    %23 = tpu.matmul %20, %22, %cst_27 {dimension_numbers = #tpu.dot_dimension_numbers<[1], [0], [0], [1], [0, 0, 1, 1], [], []>} : vector<288x128xbf16>, vector<128x128xbf16>, vector<288x128xf32> -> vector<288x128xf32>
    %24 = arith.addf %18, %23 : vector<288x128xf32>
    %c0_28 = arith.constant 0 : index
    %c19 = arith.constant 19 : index
    %c0_29 = arith.constant 0 : index
    %25 = vector.load %arg2[%c0_28, %c19, %c0_29] : memref<1x342x128xbf16, #tpu.memory_space<vmem>>, vector<1x288x128xbf16>
    %26 = vector.shape_cast %25 : vector<1x288x128xbf16> to vector<288x128xbf16>
    %c1_30 = arith.constant 1 : index
    %c1_31 = arith.constant 1 : index
    %c0_32 = arith.constant 0 : index
    %c0_33 = arith.constant 0 : index
    %27 = vector.load %arg3[%c1_30, %c1_31, %c0_32, %c0_33] : memref<3x3x128x128xbf16, #tpu.memory_space<vmem>>, vector<1x1x128x128xbf16>
    %28 = vector.shape_cast %27 : vector<1x1x128x128xbf16> to vector<128x128xbf16>
    %cst_34 = arith.constant dense<0.000000e+00> : vector<288x128xf32>
    %29 = tpu.matmul %26, %28, %cst_34 {dimension_numbers = #tpu.dot_dimension_numbers<[1], [0], [0], [1], [0, 0, 1, 1], [], []>} : vector<288x128xbf16>, vector<128x128xbf16>, vector<288x128xf32> -> vector<288x128xf32>
    %30 = arith.addf %24, %29 : vector<288x128xf32>
    %c0_35 = arith.constant 0 : index
    %c20 = arith.constant 20 : index
    %c0_36 = arith.constant 0 : index
    %31 = vector.load %arg2[%c0_35, %c20, %c0_36] : memref<1x342x128xbf16, #tpu.memory_space<vmem>>, vector<1x288x128xbf16>
    %32 = vector.shape_cast %31 : vector<1x288x128xbf16> to vector<288x128xbf16>
    %c1_37 = arith.constant 1 : index
    %c2_38 = arith.constant 2 : index
    %c0_39 = arith.constant 0 : index
    %c0_40 = arith.constant 0 : index
    %33 = vector.load %arg3[%c1_37, %c2_38, %c0_39, %c0_40] : memref<3x3x128x128xbf16, #tpu.memory_space<vmem>>, vector<1x1x128x128xbf16>
    %34 = vector.shape_cast %33 : vector<1x1x128x128xbf16> to vector<128x128xbf16>
    %cst_41 = arith.constant dense<0.000000e+00> : vector<288x128xf32>
    %35 = tpu.matmul %32, %34, %cst_41 {dimension_numbers = #tpu.dot_dimension_numbers<[1], [0], [0], [1], [0, 0, 1, 1], [], []>} : vector<288x128xbf16>, vector<128x128xbf16>, vector<288x128xf32> -> vector<288x128xf32>
    %36 = arith.addf %30, %35 : vector<288x128xf32>
    %c0_42 = arith.constant 0 : index
    %c36 = arith.constant 36 : index
    %c0_43 = arith.constant 0 : index
    %37 = vector.load %arg2[%c0_42, %c36, %c0_43] : memref<1x342x128xbf16, #tpu.memory_space<vmem>>, vector<1x288x128xbf16>
    %38 = vector.shape_cast %37 : vector<1x288x128xbf16> to vector<288x128xbf16>
    %c2_44 = arith.constant 2 : index
    %c0_45 = arith.constant 0 : index
    %c0_46 = arith.constant 0 : index
    %c0_47 = arith.constant 0 : index
    %39 = vector.load %arg3[%c2_44, %c0_45, %c0_46, %c0_47] : memref<3x3x128x128xbf16, #tpu.memory_space<vmem>>, vector<1x1x128x128xbf16>
    %40 = vector.shape_cast %39 : vector<1x1x128x128xbf16> to vector<128x128xbf16>
    %cst_48 = arith.constant dense<0.000000e+00> : vector<288x128xf32>
    %41 = tpu.matmul %38, %40, %cst_48 {dimension_numbers = #tpu.dot_dimension_numbers<[1], [0], [0], [1], [0, 0, 1, 1], [], []>} : vector<288x128xbf16>, vector<128x128xbf16>, vector<288x128xf32> -> vector<288x128xf32>
    %42 = arith.addf %36, %41 : vector<288x128xf32>
    %c0_49 = arith.constant 0 : index
    %c37 = arith.constant 37 : index
    %c0_50 = arith.constant 0 : index
    %43 = vector.load %arg2[%c0_49, %c37, %c0_50] : memref<1x342x128xbf16, #tpu.memory_space<vmem>>, vector<1x288x128xbf16>
    %44 = vector.shape_cast %43 : vector<1x288x128xbf16> to vector<288x128xbf16>
    %c2_51 = arith.constant 2 : index
    %c1_52 = arith.constant 1 : index
    %c0_53 = arith.constant 0 : index
    %c0_54 = arith.constant 0 : index
    %45 = vector.load %arg3[%c2_51, %c1_52, %c0_53, %c0_54] : memref<3x3x128x128xbf16, #tpu.memory_space<vmem>>, vector<1x1x128x128xbf16>
    %46 = vector.shape_cast %45 : vector<1x1x128x128xbf16> to vector<128x128xbf16>
    %cst_55 = arith.constant dense<0.000000e+00> : vector<288x128xf32>
    %47 = tpu.matmul %44, %46, %cst_55 {dimension_numbers = #tpu.dot_dimension_numbers<[1], [0], [0], [1], [0, 0, 1, 1], [], []>} : vector<288x128xbf16>, vector<128x128xbf16>, vector<288x128xf32> -> vector<288x128xf32>
    %48 = arith.addf %42, %47 : vector<288x128xf32>
    %c0_56 = arith.constant 0 : index
    %c38 = arith.constant 38 : index
    %c0_57 = arith.constant 0 : index
    %49 = vector.load %arg2[%c0_56, %c38, %c0_57] : memref<1x342x128xbf16, #tpu.memory_space<vmem>>, vector<1x288x128xbf16>
    %50 = vector.shape_cast %49 : vector<1x288x128xbf16> to vector<288x128xbf16>
    %c2_58 = arith.constant 2 : index
    %c2_59 = arith.constant 2 : index
    %c0_60 = arith.constant 0 : index
    %c0_61 = arith.constant 0 : index
    %51 = vector.load %arg3[%c2_58, %c2_59, %c0_60, %c0_61] : memref<3x3x128x128xbf16, #tpu.memory_space<vmem>>, vector<1x1x128x128xbf16>
    %52 = vector.shape_cast %51 : vector<1x1x128x128xbf16> to vector<128x128xbf16>
    %cst_62 = arith.constant dense<0.000000e+00> : vector<288x128xf32>
    %53 = tpu.matmul %50, %52, %cst_62 {dimension_numbers = #tpu.dot_dimension_numbers<[1], [0], [0], [1], [0, 0, 1, 1], [], []>} : vector<288x128xbf16>, vector<128x128xbf16>, vector<288x128xf32> -> vector<288x128xf32>
    %54 = arith.addf %48, %53 : vector<288x128xf32>
    %c0_63 = arith.constant 0 : index
    %c0_64 = arith.constant 0 : index
    %55 = vector.load %arg4[%c0_63, %c0_64] : memref<1x128xf32, #tpu.memory_space<vmem>>, vector<1x128xf32>
    %56 = vector.broadcast %55 : vector<1x128xf32> to vector<288x128xf32>
    %57 = arith.addf %54, %56 : vector<288x128xf32>
    %cst_65 = arith.constant 0.000000e+00 : f32
    %58 = vector.broadcast %cst_65 : f32 to vector<288x128xf32>
    %59 = arith.maximumf %57, %58 : vector<288x128xf32>
    %60 = arith.truncf %59 : vector<288x128xf32> to vector<288x128xbf16>
    %c0_66 = arith.constant 0 : index
    %c0_67 = arith.constant 0 : index
    %c0_68 = arith.constant 0 : index
    %61 = vector.load %arg5[%c0_66, %c0_67, %c0_68] : memref<1x288x128xbf16, #tpu.memory_space<vmem>>, vector<1x288x128xbf16>
    %62 = vector.shape_cast %61 : vector<1x288x128xbf16> to vector<288x128xbf16>
    %63 = vector.shape_cast %60 : vector<288x128xbf16> to vector<1x288x128xbf16>
    tpu.vector_store %arg5[%c0_66, %c0_67, %c0_68], %63 {strides = array<i32>} : memref<1x288x128xbf16, #tpu.memory_space<vmem>>, vector<1x288x128xbf16>,
    return
  }
  func.func @transform_0(%arg0: i32, %arg1: i32) -> (i32, i32, i32) {
    %c0_i32 = arith.constant 0 : i32
    %c0_i32_0 = arith.constant 0 : i32
    %c0_i32_1 = arith.constant 0 : i32
    return %arg0, %c0_i32, %c0_i32_0 : i32, i32, i32
  }
  func.func @transform_1(%arg0: i32, %arg1: i32) -> (i32, i32, i32, i32) {
    %c0_i32 = arith.constant 0 : i32
    %c0_i32_0 = arith.constant 0 : i32
    %c0_i32_1 = arith.constant 0 : i32
    %c0_i32_2 = arith.constant 0 : i32
    return %c0_i32, %c0_i32_0, %c0_i32_1, %arg1 : i32, i32, i32, i32
  }
  func.func @transform_2(%arg0: i32, %arg1: i32) -> (i32, i32) {
    %c0_i32 = arith.constant 0 : i32
    %c0_i32_0 = arith.constant 0 : i32
    return %c0_i32, %arg1 : i32, i32
  }
  func.func @transform_3(%arg0: i32, %arg1: i32) -> (i32, i32, i32) {
    %c0_i32 = arith.constant 0 : i32
    %c0_i32_0 = arith.constant 0 : i32
    return %arg0, %c0_i32, %arg1 : i32, i32, i32
  }
}

module attributes {stable_mosaic.version = 11 : i64} {
  func.func @_conv3x3_relu_gap_kernel(%arg0: i32, %arg1: i32, %arg2: memref<1x342x128xbf16, #tpu.memory_space<vmem>>, %arg3: memref<3x3x128x128xbf16, #tpu.memory_space<vmem>>, %arg4: memref<1x128xf32, #tpu.memory_space<vmem>>, %arg5: memref<288x1xf32, #tpu.memory_space<vmem>>, %arg6: memref<1x1x128xf32, #tpu.memory_space<vmem>>) attributes {dimension_semantics = [#tpu.dimension_semantics<parallel>, #tpu.dimension_semantics<parallel>], iteration_bounds = array<i64: 2, 1>, scalar_prefetch = 0 : i64, scratch_operands = 0 : i64, tpu.core_type = #tpu.core_type<tc>, window_params = [{transform_indices = @transform_0, window_bounds = array<i64: 1, 342, 128>}, {transform_indices = @transform_1, window_bounds = array<i64: 3, 3, 128, 128>}, {transform_indices = @transform_2, window_bounds = array<i64: 1, 128>}, {pipeline_mode = #tpu.pipeline_mode<synchronous>, transform_indices = @transform_3, window_bounds = array<i64: 288, 1>}, {transform_indices = @transform_4, window_bounds = array<i64: 1, 1, 128>}]} {
    %cst = arith.constant 0.000000e+00 : f32
    %0 = vector.broadcast %cst : f32 to vector<288x128xf32>
    %c0 = arith.constant 0 : index
    %c0_0 = arith.constant 0 : index
    %c0_1 = arith.constant 0 : index
    %1 = vector.load %arg2[%c0, %c0_0, %c0_1] : memref<1x342x128xbf16, #tpu.memory_space<vmem>>, vector<1x288x128xbf16>
    %2 = vector.shape_cast %1 : vector<1x288x128xbf16> to vector<288x128xbf16>
    %c0_2 = arith.constant 0 : index
    %c0_3 = arith.constant 0 : index
    %c0_4 = arith.constant 0 : index
    %c0_5 = arith.constant 0 : index
    %3 = vector.load %arg3[%c0_2, %c0_3, %c0_4, %c0_5] : memref<3x3x128x128xbf16, #tpu.memory_space<vmem>>, vector<1x1x128x128xbf16>
    %4 = vector.shape_cast %3 : vector<1x1x128x128xbf16> to vector<128x128xbf16>
    %cst_6 = arith.constant dense<0.000000e+00> : vector<288x128xf32>
    %5 = tpu.matmul %2, %4, %cst_6 {dimension_numbers = #tpu.dot_dimension_numbers<[1], [0], [0], [1], [0, 0, 1, 1], [], []>} : vector<288x128xbf16>, vector<128x128xbf16>, vector<288x128xf32> -> vector<288x128xf32>
    %6 = arith.addf %0, %5 : vector<288x128xf32>
    %c0_7 = arith.constant 0 : index
    %c1 = arith.constant 1 : index
    %c0_8 = arith.constant 0 : index
    %7 = vector.load %arg2[%c0_7, %c1, %c0_8] : memref<1x342x128xbf16, #tpu.memory_space<vmem>>, vector<1x288x128xbf16>
    %8 = vector.shape_cast %7 : vector<1x288x128xbf16> to vector<288x128xbf16>
    %c0_9 = arith.constant 0 : index
    %c1_10 = arith.constant 1 : index
    %c0_11 = arith.constant 0 : index
    %c0_12 = arith.constant 0 : index
    %9 = vector.load %arg3[%c0_9, %c1_10, %c0_11, %c0_12] : memref<3x3x128x128xbf16, #tpu.memory_space<vmem>>, vector<1x1x128x128xbf16>
    %10 = vector.shape_cast %9 : vector<1x1x128x128xbf16> to vector<128x128xbf16>
    %cst_13 = arith.constant dense<0.000000e+00> : vector<288x128xf32>
    %11 = tpu.matmul %8, %10, %cst_13 {dimension_numbers = #tpu.dot_dimension_numbers<[1], [0], [0], [1], [0, 0, 1, 1], [], []>} : vector<288x128xbf16>, vector<128x128xbf16>, vector<288x128xf32> -> vector<288x128xf32>
    %12 = arith.addf %6, %11 : vector<288x128xf32>
    %c0_14 = arith.constant 0 : index
    %c2 = arith.constant 2 : index
    %c0_15 = arith.constant 0 : index
    %13 = vector.load %arg2[%c0_14, %c2, %c0_15] : memref<1x342x128xbf16, #tpu.memory_space<vmem>>, vector<1x288x128xbf16>
    %14 = vector.shape_cast %13 : vector<1x288x128xbf16> to vector<288x128xbf16>
    %c0_16 = arith.constant 0 : index
    %c2_17 = arith.constant 2 : index
    %c0_18 = arith.constant 0 : index
    %c0_19 = arith.constant 0 : index
    %15 = vector.load %arg3[%c0_16, %c2_17, %c0_18, %c0_19] : memref<3x3x128x128xbf16, #tpu.memory_space<vmem>>, vector<1x1x128x128xbf16>
    %16 = vector.shape_cast %15 : vector<1x1x128x128xbf16> to vector<128x128xbf16>
    %cst_20 = arith.constant dense<0.000000e+00> : vector<288x128xf32>
    %17 = tpu.matmul %14, %16, %cst_20 {dimension_numbers = #tpu.dot_dimension_numbers<[1], [0], [0], [1], [0, 0, 1, 1], [], []>} : vector<288x128xbf16>, vector<128x128xbf16>, vector<288x128xf32> -> vector<288x128xf32>
    %18 = arith.addf %12, %17 : vector<288x128xf32>
    %c0_21 = arith.constant 0 : index
    %c18 = arith.constant 18 : index
    %c0_22 = arith.constant 0 : index
    %19 = vector.load %arg2[%c0_21, %c18, %c0_22] : memref<1x342x128xbf16, #tpu.memory_space<vmem>>, vector<1x288x128xbf16>
    %20 = vector.shape_cast %19 : vector<1x288x128xbf16> to vector<288x128xbf16>
    %c1_23 = arith.constant 1 : index
    %c0_24 = arith.constant 0 : index
    %c0_25 = arith.constant 0 : index
    %c0_26 = arith.constant 0 : index
    %21 = vector.load %arg3[%c1_23, %c0_24, %c0_25, %c0_26] : memref<3x3x128x128xbf16, #tpu.memory_space<vmem>>, vector<1x1x128x128xbf16>
    %22 = vector.shape_cast %21 : vector<1x1x128x128xbf16> to vector<128x128xbf16>
    %cst_27 = arith.constant dense<0.000000e+00> : vector<288x128xf32>
    %23 = tpu.matmul %20, %22, %cst_27 {dimension_numbers = #tpu.dot_dimension_numbers<[1], [0], [0], [1], [0, 0, 1, 1], [], []>} : vector<288x128xbf16>, vector<128x128xbf16>, vector<288x128xf32> -> vector<288x128xf32>
    %24 = arith.addf %18, %23 : vector<288x128xf32>
    %c0_28 = arith.constant 0 : index
    %c19 = arith.constant 19 : index
    %c0_29 = arith.constant 0 : index
    %25 = vector.load %arg2[%c0_28, %c19, %c0_29] : memref<1x342x128xbf16, #tpu.memory_space<vmem>>, vector<1x288x128xbf16>
    %26 = vector.shape_cast %25 : vector<1x288x128xbf16> to vector<288x128xbf16>
    %c1_30 = arith.constant 1 : index
    %c1_31 = arith.constant 1 : index
    %c0_32 = arith.constant 0 : index
    %c0_33 = arith.constant 0 : index
    %27 = vector.load %arg3[%c1_30, %c1_31, %c0_32, %c0_33] : memref<3x3x128x128xbf16, #tpu.memory_space<vmem>>, vector<1x1x128x128xbf16>
    %28 = vector.shape_cast %27 : vector<1x1x128x128xbf16> to vector<128x128xbf16>
    %cst_34 = arith.constant dense<0.000000e+00> : vector<288x128xf32>
    %29 = tpu.matmul %26, %28, %cst_34 {dimension_numbers = #tpu.dot_dimension_numbers<[1], [0], [0], [1], [0, 0, 1, 1], [], []>} : vector<288x128xbf16>, vector<128x128xbf16>, vector<288x128xf32> -> vector<288x128xf32>
    %30 = arith.addf %24, %29 : vector<288x128xf32>
    %c0_35 = arith.constant 0 : index
    %c20 = arith.constant 20 : index
    %c0_36 = arith.constant 0 : index
    %31 = vector.load %arg2[%c0_35, %c20, %c0_36] : memref<1x342x128xbf16, #tpu.memory_space<vmem>>, vector<1x288x128xbf16>
    %32 = vector.shape_cast %31 : vector<1x288x128xbf16> to vector<288x128xbf16>
    %c1_37 = arith.constant 1 : index
    %c2_38 = arith.constant 2 : index
    %c0_39 = arith.constant 0 : index
    %c0_40 = arith.constant 0 : index
    %33 = vector.load %arg3[%c1_37, %c2_38, %c0_39, %c0_40] : memref<3x3x128x128xbf16, #tpu.memory_space<vmem>>, vector<1x1x128x128xbf16>
    %34 = vector.shape_cast %33 : vector<1x1x128x128xbf16> to vector<128x128xbf16>
    %cst_41 = arith.constant dense<0.000000e+00> : vector<288x128xf32>
    %35 = tpu.matmul %32, %34, %cst_41 {dimension_numbers = #tpu.dot_dimension_numbers<[1], [0], [0], [1], [0, 0, 1, 1], [], []>} : vector<288x128xbf16>, vector<128x128xbf16>, vector<288x128xf32> -> vector<288x128xf32>
    %36 = arith.addf %30, %35 : vector<288x128xf32>
    %c0_42 = arith.constant 0 : index
    %c36 = arith.constant 36 : index
    %c0_43 = arith.constant 0 : index
    %37 = vector.load %arg2[%c0_42, %c36, %c0_43] : memref<1x342x128xbf16, #tpu.memory_space<vmem>>, vector<1x288x128xbf16>
    %38 = vector.shape_cast %37 : vector<1x288x128xbf16> to vector<288x128xbf16>
    %c2_44 = arith.constant 2 : index
    %c0_45 = arith.constant 0 : index
    %c0_46 = arith.constant 0 : index
    %c0_47 = arith.constant 0 : index
    %39 = vector.load %arg3[%c2_44, %c0_45, %c0_46, %c0_47] : memref<3x3x128x128xbf16, #tpu.memory_space<vmem>>, vector<1x1x128x128xbf16>
    %40 = vector.shape_cast %39 : vector<1x1x128x128xbf16> to vector<128x128xbf16>
    %cst_48 = arith.constant dense<0.000000e+00> : vector<288x128xf32>
    %41 = tpu.matmul %38, %40, %cst_48 {dimension_numbers = #tpu.dot_dimension_numbers<[1], [0], [0], [1], [0, 0, 1, 1], [], []>} : vector<288x128xbf16>, vector<128x128xbf16>, vector<288x128xf32> -> vector<288x128xf32>
    %42 = arith.addf %36, %41 : vector<288x128xf32>
    %c0_49 = arith.constant 0 : index
    %c37 = arith.constant 37 : index
    %c0_50 = arith.constant 0 : index
    %43 = vector.load %arg2[%c0_49, %c37, %c0_50] : memref<1x342x128xbf16, #tpu.memory_space<vmem>>, vector<1x288x128xbf16>
    %44 = vector.shape_cast %43 : vector<1x288x128xbf16> to vector<288x128xbf16>
    %c2_51 = arith.constant 2 : index
    %c1_52 = arith.constant 1 : index
    %c0_53 = arith.constant 0 : index
    %c0_54 = arith.constant 0 : index
    %45 = vector.load %arg3[%c2_51, %c1_52, %c0_53, %c0_54] : memref<3x3x128x128xbf16, #tpu.memory_space<vmem>>, vector<1x1x128x128xbf16>
    %46 = vector.shape_cast %45 : vector<1x1x128x128xbf16> to vector<128x128xbf16>
    %cst_55 = arith.constant dense<0.000000e+00> : vector<288x128xf32>
    %47 = tpu.matmul %44, %46, %cst_55 {dimension_numbers = #tpu.dot_dimension_numbers<[1], [0], [0], [1], [0, 0, 1, 1], [], []>} : vector<288x128xbf16>, vector<128x128xbf16>, vector<288x128xf32> -> vector<288x128xf32>
    %48 = arith.addf %42, %47 : vector<288x128xf32>
    %c0_56 = arith.constant 0 : index
    %c38 = arith.constant 38 : index
    %c0_57 = arith.constant 0 : index
    %49 = vector.load %arg2[%c0_56, %c38, %c0_57] : memref<1x342x128xbf16, #tpu.memory_space<vmem>>, vector<1x288x128xbf16>
    %50 = vector.shape_cast %49 : vector<1x288x128xbf16> to vector<288x128xbf16>
    %c2_58 = arith.constant 2 : index
    %c2_59 = arith.constant 2 : index
    %c0_60 = arith.constant 0 : index
    %c0_61 = arith.constant 0 : index
    %51 = vector.load %arg3[%c2_58, %c2_59, %c0_60, %c0_61] : memref<3x3x128x128xbf16, #tpu.memory_space<vmem>>, vector<1x1x128x128xbf16>
    %52 = vector.shape_cast %51 : vector<1x1x128x128xbf16> to vector<128x128xbf16>
    %cst_62 = arith.constant dense<0.000000e+00> : vector<288x128xf32>
    %53 = tpu.matmul %50, %52, %cst_62 {dimension_numbers = #tpu.dot_dimension_numbers<[1], [0], [0], [1], [0, 0, 1, 1], [], []>} : vector<288x128xbf16>, vector<128x128xbf16>, vector<288x128xf32> -> vector<288x128xf32>
    %54 = arith.addf %48, %53 : vector<288x128xf32>
    %c0_63 = arith.constant 0 : index
    %c0_64 = arith.constant 0 : index
    %55 = vector.load %arg4[%c0_63, %c0_64] : memref<1x128xf32, #tpu.memory_space<vmem>>, vector<1x128xf32>
    %56 = vector.broadcast %55 : vector<1x128xf32> to vector<288x128xf32>
    %57 = arith.addf %54, %56 : vector<288x128xf32>
    %cst_65 = arith.constant 0.000000e+00 : f32
    %58 = vector.broadcast %cst_65 : f32 to vector<288x128xf32>
    %59 = arith.maximumf %57, %58 : vector<288x128xf32>
    %c0_66 = arith.constant 0 : index
    %c0_67 = arith.constant 0 : index
    %60 = vector.load %arg5[%c0_66, %c0_67] : memref<288x1xf32, #tpu.memory_space<vmem>>, vector<288x1xf32>
    %61 = vector.broadcast %60 : vector<288x1xf32> to vector<288x128xf32>
    %62 = arith.mulf %59, %61 : vector<288x128xf32>
    %cst_68 = arith.constant dense<0.000000e+00> : vector<128xf32>
    %63 = vector.multi_reduction <add>, %62, %cst_68 [0] : vector<288x128xf32> to vector<128xf32>
    %64 = vector.shape_cast %63 : vector<128xf32> to vector<1x128xf32>
    %cst_69 = arith.constant 3.906250e-03 : f32
    %65 = vector.broadcast %cst_69 : f32 to vector<1x128xf32>
    %66 = arith.mulf %64, %65 : vector<1x128xf32>
    %c0_70 = arith.constant 0 : index
    %c0_71 = arith.constant 0 : index
    %c0_72 = arith.constant 0 : index
    %67 = vector.load %arg6[%c0_70, %c0_71, %c0_72] : memref<1x1x128xf32, #tpu.memory_space<vmem>>, vector<1x1x128xf32>
    %68 = vector.shape_cast %67 : vector<1x1x128xf32> to vector<1x128xf32>
    %69 = vector.shape_cast %66 : vector<1x128xf32> to vector<1x1x128xf32>
    tpu.vector_store %arg6[%c0_70, %c0_71, %c0_72], %69 {strides = array<i32>} : memref<1x1x128xf32, #tpu.memory_space<vmem>>, vector<1x1x128xf32>,
    return
  }
  func.func @transform_0(%arg0: i32, %arg1: i32) -> (i32, i32, i32) {
    %c0_i32 = arith.constant 0 : i32
    %c0_i32_0 = arith.constant 0 : i32
    %c0_i32_1 = arith.constant 0 : i32
    return %arg0, %c0_i32, %c0_i32_0 : i32, i32, i32
  }
  func.func @transform_1(%arg0: i32, %arg1: i32) -> (i32, i32, i32, i32) {
    %c0_i32 = arith.constant 0 : i32
    %c0_i32_0 = arith.constant 0 : i32
    %c0_i32_1 = arith.constant 0 : i32
    %c0_i32_2 = arith.constant 0 : i32
    return %c0_i32, %c0_i32_0, %c0_i32_1, %arg1 : i32, i32, i32, i32
  }
  func.func @transform_2(%arg0: i32, %arg1: i32) -> (i32, i32) {
    %c0_i32 = arith.constant 0 : i32
    %c0_i32_0 = arith.constant 0 : i32
    return %c0_i32, %arg1 : i32, i32
  }
  func.func @transform_3(%arg0: i32, %arg1: i32) -> (i32, i32) {
    %c0_i32 = arith.constant 0 : i32
    %c0_i32_0 = arith.constant 0 : i32
    %c0_i32_1 = arith.constant 0 : i32
    return %c0_i32, %c0_i32_0 : i32, i32
  }
  func.func @transform_4(%arg0: i32, %arg1: i32) -> (i32, i32, i32) {
    %c0_i32 = arith.constant 0 : i32
    %c0_i32_0 = arith.constant 0 : i32
    return %arg0, %c0_i32, %arg1 : i32, i32, i32
  }
}

module attributes {stable_mosaic.version = 11 : i64} {
  func.func @_fc_relu_kernel(%arg0: i32, %arg1: memref<2x128xf32, #tpu.memory_space<vmem>>, %arg2: memref<128x256xf32, #tpu.memory_space<vmem>>, %arg3: memref<1x256xf32, #tpu.memory_space<vmem>>, %arg4: memref<2x256xf32, #tpu.memory_space<vmem>>) attributes {dimension_semantics = [#tpu.dimension_semantics<arbitrary>], iteration_bounds = array<i64: 1>, scalar_prefetch = 0 : i64, scratch_operands = 0 : i64, tpu.core_type = #tpu.core_type<tc>, window_params = [{pipeline_mode = #tpu.pipeline_mode<synchronous>, transform_indices = @transform_0, window_bounds = array<i64: 2, 128>}, {pipeline_mode = #tpu.pipeline_mode<synchronous>, transform_indices = @transform_1, window_bounds = array<i64: 128, 256>}, {pipeline_mode = #tpu.pipeline_mode<synchronous>, transform_indices = @transform_2, window_bounds = array<i64: 1, 256>}, {pipeline_mode = #tpu.pipeline_mode<synchronous>, transform_indices = @transform_3, window_bounds = array<i64: 2, 256>}]} {
    %c0 = arith.constant 0 : index
    %c0_0 = arith.constant 0 : index
    %0 = vector.load %arg1[%c0, %c0_0] : memref<2x128xf32, #tpu.memory_space<vmem>>, vector<2x128xf32>
    %c0_1 = arith.constant 0 : index
    %c0_2 = arith.constant 0 : index
    %1 = vector.load %arg2[%c0_1, %c0_2] : memref<128x256xf32, #tpu.memory_space<vmem>>, vector<128x256xf32>
    %cst = arith.constant dense<0.000000e+00> : vector<2x256xf32>
    %2 = tpu.matmul %0, %1, %cst {dimension_numbers = #tpu.dot_dimension_numbers<[1], [0], [0], [1], [0, 0, 1, 1], [], []>} : vector<2x128xf32>, vector<128x256xf32>, vector<2x256xf32> -> vector<2x256xf32>
    %c0_3 = arith.constant 0 : index
    %c0_4 = arith.constant 0 : index
    %3 = vector.load %arg3[%c0_3, %c0_4] : memref<1x256xf32, #tpu.memory_space<vmem>>, vector<1x256xf32>
    %4 = vector.broadcast %3 : vector<1x256xf32> to vector<2x256xf32>
    %5 = arith.addf %2, %4 : vector<2x256xf32>
    %cst_5 = arith.constant 0.000000e+00 : f32
    %6 = vector.broadcast %cst_5 : f32 to vector<2x256xf32>
    %7 = arith.maximumf %5, %6 : vector<2x256xf32>
    %c0_6 = arith.constant 0 : index
    %c0_7 = arith.constant 0 : index
    %8 = vector.load %arg4[%c0_6, %c0_7] : memref<2x256xf32, #tpu.memory_space<vmem>>, vector<2x256xf32>
    tpu.vector_store %arg4[%c0_6, %c0_7], %7 {strides = array<i32>} : memref<2x256xf32, #tpu.memory_space<vmem>>, vector<2x256xf32>,
    return
  }
  func.func @transform_0(%arg0: i32) -> (i32, i32) {
    %c0_i32 = arith.constant 0 : i32
    %c0_i32_0 = arith.constant 0 : i32
    %c0_i32_1 = arith.constant 0 : i32
    return %c0_i32, %c0_i32_0 : i32, i32
  }
  func.func @transform_1(%arg0: i32) -> (i32, i32) {
    %c0_i32 = arith.constant 0 : i32
    %c0_i32_0 = arith.constant 0 : i32
    %c0_i32_1 = arith.constant 0 : i32
    return %c0_i32, %c0_i32_0 : i32, i32
  }
  func.func @transform_2(%arg0: i32) -> (i32, i32) {
    %c0_i32 = arith.constant 0 : i32
    %c0_i32_0 = arith.constant 0 : i32
    %c0_i32_1 = arith.constant 0 : i32
    return %c0_i32, %c0_i32_0 : i32, i32
  }
  func.func @transform_3(%arg0: i32) -> (i32, i32) {
    %c0_i32 = arith.constant 0 : i32
    %c0_i32_0 = arith.constant 0 : i32
    %c0_i32_1 = arith.constant 0 : i32
    return %c0_i32, %c0_i32_0 : i32, i32
  }
}

</mosaic_0001>

<llo_original>
// kernel: encoder_cnn_forward.5
$region0: #{encoder_cnn_forward.5}
  #allocation0 [shape = 'u32[]', space=smem, size = 0x4, offset = 0x4, fixed_abs, tag = 'smem constant byte address 0x4 - core index']
  #allocation1 [shape = 'u32[72,128]{1,0:T(1,128)}', space=vmem, size = 0x9000, scoped, tag = 'internal scratch']
  %s0 = inlined_call_operand.vmem [shape: f32[2,128], index: 0, kind: input, shape index: {}]
  %s1 = inlined_call_operand.vmem [shape: f32[128,256], index: 1, kind: input, shape index: {}]
  %s2 = inlined_call_operand.vmem [shape: f32[1,256], index: 2, kind: input, shape index: {}]
  %s3 = inlined_call_operand.hbm [shape: f32[2,256], index: 3, kind: output, shape index: {}]
  %s4 = sld [smem:[#allocation0]]
  $region22: #{encoder_cnn_forward.5} parent=0
    _
  %s6 = ssub.s32 1, %s4
  %s7 = scalar_select 0, %s6, %s4
  $region1: #{encoder_cnn_forward.5} parent=0
    #allocation2 [shape = 'u8[2048]{0}', space=vmem, size = 0x800, scoped, tag = 'output window, operand 0, single buffered']
    #allocation3 [shape = 's32[1]{0}', space=sflag, size = 0x4, scoped, tag = 'scoped memory for encoder_cnn_forward.5']
    %8 = vsyncpa [#allocation3], 0
    // Predicated region
    $region2: #{encoder_cnn_forward.5} parent=1 // pred_check
      _
    $region3: #{encoder_cnn_forward.5} parent=1 // pred_check_branch
      %10 = sbr.rel (0) target = $region5
    $region4: #{encoder_cnn_forward.5} parent=1 // pred_region
      _
    $region5: #{encoder_cnn_forward.5} parent=1 // pred_fallthru
      _
    // Predicated region
    $region6: #{encoder_cnn_forward.5} parent=1 // pred_check
      _
    $region7: #{encoder_cnn_forward.5} parent=1 // pred_check_branch
      %12 = sbr.rel (0) target = $region9
    $region8: #{encoder_cnn_forward.5} parent=1 // pred_region
      _
    $region9: #{encoder_cnn_forward.5} parent=1 // pred_fallthru
      _
    // Predicated region
    $region10: #{encoder_cnn_forward.5} parent=1 // pred_check
      _
    $region11: #{encoder_cnn_forward.5} parent=1 // pred_check_branch
      %14 = sbr.rel (0) target = $region13
    $region12: #{encoder_cnn_forward.5} parent=1 // pred_region
      _
    $region13: #{encoder_cnn_forward.5} parent=1 // pred_fallthru
      _
    %v15 = vld [vmem:[%s0] sm:$0x3]
    %v16 = vld [vmem:[%s1] sm:$0xff]
    %v17 = vld [vmem:[%s1 + $0x8] sm:$0xff]
    %v18 = vld [vmem:[%s1 + $0x10] sm:$0xff]
    %v19 = vld [vmem:[%s1 + $0x18] sm:$0xff]
    %v20 = vld [vmem:[%s1 + $0x20] sm:$0xff]
    %v21 = vld [vmem:[%s1 + $0x28] sm:$0xff]
    %v22 = vld [vmem:[%s1 + $0x30] sm:$0xff]
    %v23 = vld [vmem:[%s1 + $0x38] sm:$0xff]
    %v24 = vld [vmem:[%s1 + $0x40] sm:$0xff]
    %v25 = vld [vmem:[%s1 + $0x48] sm:$0xff]
    %v26 = vld [vmem:[%s1 + $0x50] sm:$0xff]
    %v27 = vld [vmem:[%s1 + $0x58] sm:$0xff]
    %v28 = vld [vmem:[%s1 + $0x60] sm:$0xff]
    %v29 = vld [vmem:[%s1 + $0x68] sm:$0xff]
    %v30 = vld [vmem:[%s1 + $0x70] sm:$0xff]
    %v31 = vld [vmem:[%s1 + $0x78] sm:$0xff]
    %v32 = vld [vmem:[%s1 + $0x80] sm:$0xff]
    %v33 = vld [vmem:[%s1 + $0x88] sm:$0xff]
    %v34 = vld [vmem:[%s1 + $0x90] sm:$0xff]
    %v35 = vld [vmem:[%s1 + $0x98] sm:$0xff]
    %v36 = vld [vmem:[%s1 + $0xa0] sm:$0xff]
    %v37 = vld [vmem:[%s1 + $0xa8] sm:$0xff]
    %v38 = vld [vmem:[%s1 + $0xb0] sm:$0xff]
    %v39 = vld [vmem:[%s1 + $0xb8] sm:$0xff]
    %v40 = vld [vmem:[%s1 + $0xc0] sm:$0xff]
    %v41 = vld [vmem:[%s1 + $0xc8] sm:$0xff]
    %v42 = vld [vmem:[%s1 + $0xd0] sm:$0xff]
    %v43 = vld [vmem:[%s1 + $0xd8] sm:$0xff]
    %v44 = vld [vmem:[%s1 + $0xe0] sm:$0xff]
    %v45 = vld [vmem:[%s1 + $0xe8] sm:$0xff]
    %v46 = vld [vmem:[%s1 + $0xf0] sm:$0xff]
    %v47 = vld [vmem:[%s1 + $0xf8] sm:$0xff]
    %v48 = vld [vmem:[%s2] sm:$0x3]
    %v50 = vperm.slane %v48, 0
    %v51 = vperm.slane %v48, 1
    %54 = vmatpush.msra.mxu0 %v46
    %55 = vmatpush.msra.mxu0 %v44
    %56 = vmatpush.msra.mxu0 %v42
    %57 = vmatpush.msra.mxu0 %v40
    %58 = vmatpush.msra.mxu0 %v38
    %59 = vmatpush.msra.mxu0 %v36
    %60 = vmatpush.msra.mxu0 %v34
    %61 = vmatpush.msra.mxu0 %v32
    %62 = vmatpush.msra.mxu0 %v30
    %63 = vmatpush.msra.mxu0 %v28
    %64 = vmatpush.msra.mxu0 %v26
    %65 = vmatpush.msra.mxu0 %v24
    %66 = vmatpush.msra.mxu0 %v22
    %67 = vmatpush.msra.mxu0 %v20
    %68 = vmatpush.msra.mxu0 %v18
    %69 = vmatpush.msra.mxu0 %v16
    %70 = vmatmul.f32.gmra.mxu0 %v15
    %v71 = vpop.f32.mrf.mxu0
    %v72 = vadd.f32 %v50, %v71
    %73 = vdwg.mxu0
    %74 = vmatpush.msra.mxu0 %v47
    %75 = vmatpush.msra.mxu0 %v45
    %76 = vmatpush.msra.mxu0 %v43
    %77 = vmatpush.msra.mxu0 %v41
    %78 = vmatpush.msra.mxu0 %v39
    %79 = vmatpush.msra.mxu0 %v37
    %80 = vmatpush.msra.mxu0 %v35
    %81 = vmatpush.msra.mxu0 %v33
    %82 = vmatpush.msra.mxu0 %v31
    %83 = vmatpush.msra.mxu0 %v29
    %84 = vmatpush.msra.mxu0 %v27
    %85 = vmatpush.msra.mxu0 %v25
    %86 = vmatpush.msra.mxu0 %v23
    %87 = vmatpush.msra.mxu0 %v21
    %88 = vmatpush.msra.mxu0 %v19
    %89 = vmatpush.msra.mxu0 %v17
    %90 = vmatmul.f32.gmra.mxu0 %v15
    %v91 = vpop.f32.mrf.mxu0
    %v92 = vadd.f32 %v51, %v91
    %93 = vdwg.mxu0
    %v94 = vmax.f32 %v72, 0.0
    %v95 = vmax.f32 %v92, 0.0
    %v98 = vrot.slane %v95, 6
    %vm99 = vcmask 1041408
    %v100 = vsel %vm99, %v94, %v98
    %102 = vst [vmem:[#allocation2] sm:$0xf] %v100
    // Predicated region
    $region14: #{encoder_cnn_forward.5} parent=1 // pred_check
      _
    $region15: #{encoder_cnn_forward.5} parent=1 // pred_check_branch
      %104 = sbr.rel (0) target = $region17
    $region16: #{encoder_cnn_forward.5} parent=1 // pred_region
      %106 = vsyncadd [#allocation3], 0
      %s108 = sshll.u32 [#allocation2], 4
      %s109 = int_to_ptr.vmem [resolvable:$true] %s108
      %s110 = sshll.u32 %s3, 4
      %s111 = int_to_ptr.hbm [resolvable:$true] %s110
      %113 = dma.vmem_to_hbm [thread:$0]  %s109, 64, %s111, [#allocation3]
    $region17: #{encoder_cnn_forward.5} parent=1 // pred_fallthru
      _
    // Predicated region
    $region18: #{encoder_cnn_forward.5} parent=1 // pred_check
      _
    $region19: #{encoder_cnn_forward.5} parent=1 // pred_check_branch
      %115 = sbr.rel (0) target = $region21
    $region20: #{encoder_cnn_forward.5} parent=1 // pred_region
      %117 = dma.done [#allocation3], 64
    $region21: #{encoder_cnn_forward.5} parent=1 // pred_fallthru
      _
    %118 = vsyncpa [#allocation3], 1

// kernel: encoder_cnn_forward.3
$region0: #{encoder_cnn_forward.3}
  #allocation0 [shape = 'u32[]', space=smem, size = 0x4, offset = 0x4, fixed_abs, tag = 'smem constant byte address 0x4 - core index']
  #allocation1 [shape = 'u32[72,128]{1,0:T(1,128)}', space=vmem, size = 0x9000, scoped, tag = 'internal scratch']
  %s0 = inlined_call_operand.vmem [shape: bf16[2,342,128], index: 0, kind: input, shape index: {}]
  %s1 = inlined_call_operand.vmem [shape: bf16[3,3,128,128], index: 1, kind: input, shape index: {}]
  %s2 = inlined_call_operand.vmem [shape: f32[1,128], index: 2, kind: input, shape index: {}]
  %s3 = inlined_call_operand.vmem [shape: bf16[2,288,128], index: 3, kind: output, shape index: {}]
  %s4 = sld [smem:[#allocation0]]
  $region45: #{encoder_cnn_forward.3} parent=0
    _
  %s6 = ssub.s32 1, %s4
  %s7 = scalar_select 0, %s6, %s4
  loop: start=0, step=1, limit=4
  $region2: #{encoder_cnn_forward.3} parent=0 // loop_pre_header
    _
  $region3: #{encoder_cnn_forward.3} parent=0 // loop_header
    %s9 = sphi 0, %s13
    %p10 = scmp.ge.s32.totalorder %s9, 4
    %s16 = sphi 0, %s28
    %s17 = sphi 0, %s24
    %s18 = sphi 0, %s16
    %s19 = sphi 0, %s17
    %s20 = sphi 0, %s18
    %s21 = sphi 0, %s19
    %s31 = sphi 0, %s33
    %s34 = sphi 0, %s31
    %s35 = sphi 0, %s34
    %s51 = sphi 0, %s35
    %s57 = sphi 0, %s59
    %s60 = sphi 0, %s57
    %s61 = sphi 0, %s60
    %s77 = sphi 0, %s61
    %s83 = sphi 0, %s85
    %s86 = sphi 0, %s83
    %s87 = sphi 0, %s86
    %s103 = sphi 0, %s87
    %s111 = sphi 0, %s113
    %s114 = sphi 0, %s111
    %s115 = sphi 0, %s114
    %s131 = sphi 0, %s115
  $region4: #{encoder_cnn_forward.3} parent=0 // loop_header_branch
    %12 = sbr.rel (%p10) target = $region8
  $region5: #{encoder_cnn_forward.3} parent=0 // loop_body
    %s14 = ssub.s32 %s9, 1
    %s15 = ssub.s32 %s9, 2
    %s22 = sadd.s32 1, %s17
    %p23 = scmp.ge.s32.totalorder %s22, 1
    %s24 = scalar_select %p23, 0, %s22
    %s25 = sadd.s32 1, %s16
    %s26 = scalar_select %p23, %s25, %s16
    %p27 = scmp.ge.s32.totalorder %s26, 2
    %s28 = scalar_select %p27, 0, %s26
    %s29 = ssub.s32 %s16, %s28
    %p30 = scmp.eq.s32.totalorder %s29, 0
    %s32 = sadd.s32 %s31, 1
    %s33 = scalar_select %p30, %s31, %s32
    %p36 = pneg %p30
    %p37 = scmp.eq.s32.totalorder %s9, 1
    %p38 = por %p36, %p37
    %p39 = scmp.ne.s32.totalorder %s31, %s34
    %p40 = scmp.eq.s32.totalorder %s9, 0
    %p41 = por %p39, %p40
    %p42 = scmp.ne.s32.totalorder %s31, %s34
    %p43 = scmp.eq.s32.totalorder %s14, 1
    %p44 = por %p42, %p43
    %p45 = scmp.ne.s32.totalorder %s34, %s35
    %p46 = scmp.eq.s32.totalorder %s14, 0
    %p47 = por %p45, %p46
    %p48 = scmp.ne.s32.totalorder %s34, %s35
    %p49 = scmp.eq.s32.totalorder %s15, 1
    %p50 = por %p48, %p49
    %p52 = scmp.ne.s32.totalorder %s35, %s51
    %p53 = scmp.eq.s32.totalorder %s15, 0
    %p54 = por %p52, %p53
    %s55 = ssub.s32 %s17, %s24
    %p56 = scmp.eq.s32.totalorder %s55, 0
    %s58 = sadd.s32 %s57, 1
    %s59 = scalar_select %p56, %s57, %s58
    %p62 = pneg %p56
    %p63 = scmp.eq.s32.totalorder %s9, 1
    %p64 = por %p62, %p63
    %p65 = scmp.ne.s32.totalorder %s57, %s60
    %p66 = scmp.eq.s32.totalorder %s9, 0
    %p67 = por %p65, %p66
    %p68 = scmp.ne.s32.totalorder %s57, %s60
    %p69 = scmp.eq.s32.totalorder %s14, 1
    %p70 = por %p68, %p69
    %p71 = scmp.ne.s32.totalorder %s60, %s61
    %p72 = scmp.eq.s32.totalorder %s14, 0
    %p73 = por %p71, %p72
    %p74 = scmp.ne.s32.totalorder %s60, %s61
    %p75 = scmp.eq.s32.totalorder %s15, 1
    %p76 = por %p74, %p75
    %p78 = scmp.ne.s32.totalorder %s61, %s77
    %p79 = scmp.eq.s32.totalorder %s15, 0
    %p80 = por %p78, %p79
    %s81 = ssub.s32 %s17, %s24
    %p82 = scmp.eq.s32.totalorder %s81, 0
    %s84 = sadd.s32 %s83, 1
    %s85 = scalar_select %p82, %s83, %s84
    %p88 = pneg %p82
    %p89 = scmp.eq.s32.totalorder %s9, 1
    %p90 = por %p88, %p89
    %p91 = scmp.ne.s32.totalorder %s83, %s86
    %p92 = scmp.eq.s32.totalorder %s9, 0
    %p93 = por %p91, %p92
    %p94 = scmp.ne.s32.totalorder %s83, %s86
    %p95 = scmp.eq.s32.totalorder %s14, 1
    %p96 = por %p94, %p95
    %p97 = scmp.ne.s32.totalorder %s86, %s87
    %p98 = scmp.eq.s32.totalorder %s14, 0
    %p99 = por %p97, %p98
    %p100 = scmp.ne.s32.totalorder %s86, %s87
    %p101 = scmp.eq.s32.totalorder %s15, 1
    %p102 = por %p100, %p101
    %p104 = scmp.ne.s32.totalorder %s87, %s103
    %p105 = scmp.eq.s32.totalorder %s15, 0
    %p106 = por %p104, %p105
    %s107 = ssub.s32 %s16, %s28
    %s108 = ssub.s32 %s17, %s24
    %s109 = sor.u32 %s107, %s108
    %p110 = scmp.eq.s32.totalorder %s109, 0
    %s112 = sadd.s32 %s111, 1
    %s113 = scalar_select %p110, %s111, %s112
    %p116 = pneg %p110
    %p117 = scmp.eq.s32.totalorder %s9, 1
    %p118 = por %p116, %p117
    %p119 = scmp.ne.s32.totalorder %s111, %s114
    %p120 = scmp.eq.s32.totalorder %s9, 0
    %p121 = por %p119, %p120
    %p122 = scmp.ne.s32.totalorder %s111, %s114
    %p123 = scmp.eq.s32.totalorder %s14, 1
    %p124 = por %p122, %p123
    %p125 = scmp.ne.s32.totalorder %s114, %s115
    %p126 = scmp.eq.s32.totalorder %s14, 0
    %p127 = por %p125, %p126
    %p128 = scmp.ne.s32.totalorder %s114, %s115
    %p129 = scmp.eq.s32.totalorder %s15, 1
    %p130 = por %p128, %p129
    %p132 = scmp.ne.s32.totalorder %s115, %s131
    %p133 = scmp.eq.s32.totalorder %s15, 0
    %p134 = por %p132, %p133
    %p135 = scmp.le.s32.totalorder 1, %s9
    %p136 = scmp.lt.s32.totalorder %s9, 3
    %p137 = pnand %p135, %p136
    %p138 = pneg %p137
    // Predicated region
    $region9: #{encoder_cnn_forward.3} parent=5 // pred_check
      _
    $region10: #{encoder_cnn_forward.3} parent=5 // pred_check_branch
      %140 = sbr.rel (%p137) target = $region12
    $region11: #{encoder_cnn_forward.3} parent=5 // pred_region
      %s141 = ssub.s32 %s9, 1
      // Predicated region
      $region13: #{encoder_cnn_forward.3} parent=11 // pred_check
        %p142 = pneg %p73
      $region14: #{encoder_cnn_forward.3} parent=11 // pred_check_branch
        %144 = sbr.rel (%p142) target = $region16
      $region15: #{encoder_cnn_forward.3} parent=11 // pred_region
        %p145 = scmp.lt.s32.totalorder %s19, 0
        %s146 = scalar_select %p145, %s19, 0
        %s147 = smul.addr %s146, 4
        %s148 = scalar_lea.vmem %s1, %s147
      $region16: #{encoder_cnn_forward.3} parent=11 // pred_fallthru
        _
      // Predicated region
      $region17: #{encoder_cnn_forward.3} parent=11 // pred_check
        %p149 = pneg %p99
      $region18: #{encoder_cnn_forward.3} parent=11 // pred_check_branch
        %151 = sbr.rel (%p149) target = $region20
      $region19: #{encoder_cnn_forward.3} parent=11 // pred_region
        %p152 = scmp.lt.s32.totalorder %s19, 0
        %s153 = scalar_select %p152, %s19, 0
        %s154 = scalar_lea.vmem %s2, %s153
      $region20: #{encoder_cnn_forward.3} parent=11 // pred_fallthru
        _
    $region12: #{encoder_cnn_forward.3} parent=5 // pred_fallthru
      _
    %p155 = scmp.lt.s32.totalorder %s9, 2
    // Predicated region
    $region21: #{encoder_cnn_forward.3} parent=5 // pred_check
      %p156 = pneg %p155
    $region22: #{encoder_cnn_forward.3} parent=5 // pred_check_branch
      %158 = sbr.rel (%p156) target = $region24
    $region23: #{encoder_cnn_forward.3} parent=5 // pred_region
      // Predicated region
      $region25: #{encoder_cnn_forward.3} parent=23 // pred_check
        %p159 = pneg %p41
      $region26: #{encoder_cnn_forward.3} parent=23 // pred_check_branch
        %161 = sbr.rel (%p159) target = $region28
      $region27: #{encoder_cnn_forward.3} parent=23 // pred_region
        %p162 = scmp.lt.s32.totalorder %s16, 1
        %s163 = scalar_select %p162, %s16, 1
        %s164 = smul.addr %s163, 43
        %s165 = smul.addr %s164, 4
        %s166 = scalar_lea.vmem %s0, %s165
      $region28: #{encoder_cnn_forward.3} parent=23 // pred_fallthru
        _
    $region24: #{encoder_cnn_forward.3} parent=5 // pred_fallthru
      _
    %p167 = scmp.le.s32.totalorder 1, %s9
    %p168 = scmp.lt.s32.totalorder %s9, 3
    %p169 = pnand %p167, %p168
    %p170 = pneg %p169
    // Predicated region
    $region29: #{encoder_cnn_forward.3} parent=5 // pred_check
      _
    $region30: #{encoder_cnn_forward.3} parent=5 // pred_check_branch
      %172 = sbr.rel (%p169) target = $region32
    $region31: #{encoder_cnn_forward.3} parent=5 // pred_region
      %s173 = ssub.s32 %s9, 1
      %p174 = scmp.lt.s32.totalorder %s18, 1
      %s175 = scalar_select %p174, %s18, 1
      %s176 = smul.addr %s175, 43
      %s177 = smul.addr %s176, 4
      %s178 = scalar_lea.vmem %s0, %s177
      %p179 = pneg %p47
      %p180 = pneg %p44
      %p181 = scmp.lt.s32.totalorder %s19, 0
      %s182 = scalar_select %p181, %s19, 0
      %s183 = smul.addr %s182, 4
      %s184 = scalar_lea.vmem %s1, %s183
      %p185 = pneg %p73
      %p186 = pneg %p70
      %p187 = scmp.lt.s32.totalorder %s19, 0
      %s188 = scalar_select %p187, %s19, 0
      %s189 = scalar_lea.vmem %s2, %s188
      %p190 = pneg %p99
      %p191 = pneg %p96
      %p192 = pneg %p127
      %p193 = pneg %p124
      %p194 = scmp.lt.s32.totalorder %s18, 1
      %s195 = scalar_select %p194, %s18, 1
      %p196 = scmp.lt.s32.totalorder %s19, 0
      %s197 = scalar_select %p196, %s19, 0
      %s198 = smul.addr %s195, 36
      %s199 = sadd.s32 %s197, %s198
      %s200 = smul.addr %s199, 4
      %s201 = scalar_lea.vmem %s3, %s200
      %p202 = scmp.lt.s32.totalorder %s18, 1
      %s203 = scalar_select %p202, %s18, 1
      %s204 = smul.addr %s203, 43
      %s205 = smul.addr %s204, 4
      %s206 = scalar_lea.vmem %s0, %s205
      %p207 = scmp.lt.s32.totalorder %s19, 0
      %s208 = scalar_select %p207, %s19, 0
      %s209 = smul.addr %s208, 4
      %s210 = scalar_lea.vmem %s1, %s209
      %p211 = scmp.lt.s32.totalorder %s19, 0
      %s212 = scalar_select %p211, %s19, 0
      %s213 = scalar_lea.vmem %s2, %s212
      %p214 = scmp.lt.s32.totalorder %s18, 1
      %s215 = scalar_select %p214, %s18, 1
      %p216 = scmp.lt.s32.totalorder %s19, 0
      %s217 = scalar_select %p216, %s19, 0
      %s218 = smul.addr %s215, 36
      %s219 = sadd.s32 %s217, %s218
      %s220 = smul.addr %s219, 4
      %s221 = scalar_lea.vmem %s3, %s220
      %v222 = vld [vmem:[%s206] sm:$0xf]
      %v223 = vld [vmem:[%s206 + $0x4] sm:$0xf]
      %v224 = vld [vmem:[%s206 + $0x8] sm:$0xf]
      %v225 = vld [vmem:[%s206 + $0xc] sm:$0xf]
      %v226 = vld [vmem:[%s206 + $0x10] sm:$0xf]
      %v227 = vld [vmem:[%s206 + $0x14] sm:$0xf]
      %v228 = vld [vmem:[%s206 + $0x18] sm:$0xf]
      %v229 = vld [vmem:[%s206 + $0x1c] sm:$0xf]
      %v230 = vld [vmem:[%s206 + $0x20] sm:$0xf]
      %v231 = vld [vmem:[%s206 + $0x24] sm:$0xf]
      %v232 = vld [vmem:[%s206 + $0x28] sm:$0xf]
      %v233 = vld [vmem:[%s206 + $0x2c] sm:$0xf]
      %v234 = vld [vmem:[%s206 + $0x30] sm:$0xf]
      %v235 = vld [vmem:[%s206 + $0x34] sm:$0xf]
      %v236 = vld [vmem:[%s206 + $0x38] sm:$0xf]
      %v237 = vld [vmem:[%s206 + $0x3c] sm:$0xf]
      %v238 = vld [vmem:[%s206 + $0x40] sm:$0xf]
      %v239 = vld [vmem:[%s206 + $0x44] sm:$0xf]
      %v240 = vld [vmem:[%s206 + $0x48] sm:$0xf]
      %v241 = vld [vmem:[%s206 + $0x4c] sm:$0xf]
      %v242 = vld [vmem:[%s206 + $0x50] sm:$0xf]
      %v243 = vld [vmem:[%s206 + $0x54] sm:$0xf]
      %v244 = vld [vmem:[%s206 + $0x58] sm:$0xf]
      %v245 = vld [vmem:[%s206 + $0x5c] sm:$0xf]
      %v246 = vld [vmem:[%s206 + $0x60] sm:$0xf]
      %v247 = vld [vmem:[%s206 + $0x64] sm:$0xf]
      %v248 = vld [vmem:[%s206 + $0x68] sm:$0xf]
      %v249 = vld [vmem:[%s206 + $0x6c] sm:$0xf]
      %v250 = vld [vmem:[%s206 + $0x70] sm:$0xf]
      %v251 = vld [vmem:[%s206 + $0x74] sm:$0xf]
      %v252 = vld [vmem:[%s206 + $0x78] sm:$0xf]
      %v253 = vld [vmem:[%s206 + $0x7c] sm:$0xf]
      %v254 = vld [vmem:[%s206 + $0x80] sm:$0xf]
      %v255 = vld [vmem:[%s206 + $0x84] sm:$0xf]
      %v256 = vld [vmem:[%s206 + $0x88] sm:$0xf]
      %v257 = vld [vmem:[%s206 + $0x8c] sm:$0xf]
      %v258 = vld [vmem:[%s210] sm:$0xf]
      %v259 = vld [vmem:[%s210 + $0x4] sm:$0xf]
      %v260 = vld [vmem:[%s210 + $0x8] sm:$0xf]
      %v261 = vld [vmem:[%s210 + $0xc] sm:$0xf]
      %v262 = vld [vmem:[%s210 + $0x10] sm:$0xf]
      %v263 = vld [vmem:[%s210 + $0x14] sm:$0xf]
      %v264 = vld [vmem:[%s210 + $0x18] sm:$0xf]
      %v265 = vld [vmem:[%s210 + $0x1c] sm:$0xf]
      %v266 = vld [vmem:[%s210 + $0x20] sm:$0xf]
      %v267 = vld [vmem:[%s210 + $0x24] sm:$0xf]
      %v268 = vld [vmem:[%s210 + $0x28] sm:$0xf]
      %v269 = vld [vmem:[%s210 + $0x2c] sm:$0xf]
      %v270 = vld [vmem:[%s210 + $0x30] sm:$0xf]
      %v271 = vld [vmem:[%s210 + $0x34] sm:$0xf]
      %v272 = vld [vmem:[%s210 + $0x38] sm:$0xf]
      %v273 = vld [vmem:[%s210 + $0x3c] sm:$0xf]
      %v274 = vld [vmem:[%s206 + $0x90] sm:$0x1]
      %s275 = scalar_lea.vmem %s210, 64
      %v276 = vld [vmem:[%s275] sm:$0xf]
      %v277 = vld [vmem:[%s275 + $0x4] sm:$0xf]
      %v278 = vld [vmem:[%s275 + $0x8] sm:$0xf]
      %v279 = vld [vmem:[%s275 + $0xc] sm:$0xf]
      %v280 = vld [vmem:[%s275 + $0x10] sm:$0xf]
      %v281 = vld [vmem:[%s275 + $0x14] sm:$0xf]
      %v282 = vld [vmem:[%s275 + $0x18] sm:$0xf]
      %v283 = vld [vmem:[%s275 + $0x1c] sm:$0xf]
      %v284 = vld [vmem:[%s275 + $0x20] sm:$0xf]
      %v285 = vld [vmem:[%s275 + $0x24] sm:$0xf]
      %v286 = vld [vmem:[%s275 + $0x28] sm:$0xf]
      %v287 = vld [vmem:[%s275 + $0x2c] sm:$0xf]
      %v288 = vld [vmem:[%s275 + $0x30] sm:$0xf]
      %v289 = vld [vmem:[%s275 + $0x34] sm:$0xf]
      %v290 = vld [vmem:[%s275 + $0x38] sm:$0xf]
      %v291 = vld [vmem:[%s275 + $0x3c] sm:$0xf]
      %v329 = vunpack.c.l.b16 %v222
      %v330 = vunpack.c.l.b16 %v223
      %v331 = vunpack.c.l.b16 %v224
      %v332 = vunpack.c.l.b16 %v225
      %v333 = vunpack.c.l.b16 %v226
      %v334 = vunpack.c.l.b16 %v227
      %v335 = vunpack.c.l.b16 %v228
      %v336 = vunpack.c.l.b16 %v229
      %v337 = vunpack.c.l.b16 %v230
      %v338 = vunpack.c.l.b16 %v231
      %v339 = vunpack.c.l.b16 %v232
      %v340 = vunpack.c.l.b16 %v233
      %v341 = vunpack.c.l.b16 %v234
      %v342 = vunpack.c.l.b16 %v235
      %v343 = vunpack.c.l.b16 %v236
      %v344 = vunpack.c.l.b16 %v237
      %v345 = vunpack.c.l.b16 %v238
      %v346 = vunpack.c.l.b16 %v239
      %v347 = vunpack.c.l.b16 %v240
      %v348 = vunpack.c.l.b16 %v241
      %v349 = vunpack.c.l.b16 %v242
      %v350 = vunpack.c.l.b16 %v243
      %v351 = vunpack.c.l.b16 %v244
      %v352 = vunpack.c.l.b16 %v245
      %v353 = vunpack.c.l.b16 %v246
      %v354 = vunpack.c.l.b16 %v247
      %v355 = vunpack.c.l.b16 %v248
      %v356 = vunpack.c.l.b16 %v249
      %v357 = vunpack.c.l.b16 %v250
      %v358 = vunpack.c.l.b16 %v251
      %v359 = vunpack.c.l.b16 %v252
      %v360 = vunpack.c.l.b16 %v253
      %v361 = vunpack.c.l.b16 %v254
      %v362 = vunpack.c.l.b16 %v255
      %v363 = vunpack.c.l.b16 %v256
      %v364 = vunpack.c.l.b16 %v257
      %v365 = vunpack.c.l.b16 %v274
      %v366 = vpack.c.b16 %v330, %v329
      %v367 = vpack.c.b16 %v332, %v331
      %v368 = vpack.c.b16 %v334, %v333
      %v369 = vpack.c.b16 %v336, %v335
      %v370 = vpack.c.b16 %v338, %v337
      %v371 = vpack.c.b16 %v340, %v339
      %v372 = vpack.c.b16 %v342, %v341
      %v373 = vpack.c.b16 %v344, %v343
      %v374 = vpack.c.b16 %v346, %v345
      %v375 = vpack.c.b16 %v348, %v347
      %v376 = vpack.c.b16 %v350, %v349
      %v377 = vpack.c.b16 %v352, %v351
      %v378 = vpack.c.b16 %v354, %v353
      %v379 = vpack.c.b16 %v356, %v355
      %v380 = vpack.c.b16 %v358, %v357
      %v381 = vpack.c.b16 %v360, %v359
      %v382 = vpack.c.b16 %v362, %v361
      %v383 = vpack.c.b16 %v364, %v363
      %v384 = vpack.c.b16 %v365, %v365
      %vm385 = vsmask.f32 7424
      %v387 = vshrl.u32 %v366, 16
      %v389 = vshll.u32 %v366, 16
      %v391 = vrot.slane %v389, 1
      %v392 = vor.u32 %v387, %v391
      %v394 = vshll.u32 %v367, 16
      %v396 = vrot.slane %v394, 1
      %v397 = vsel %vm385, %v392, %v396
      %v398 = vshrl.u32 %v367, 16
      %v400 = vor.u32 %v398, %v396
      %v402 = vshll.u32 %v368, 16
      %v404 = vrot.slane %v402, 1
      %v405 = vsel %vm385, %v400, %v404
      %v406 = vshrl.u32 %v368, 16
      %v408 = vor.u32 %v406, %v404
      %v410 = vshll.u32 %v369, 16
      %v412 = vrot.slane %v410, 1
      %v413 = vsel %vm385, %v408, %v412
      %v414 = vshrl.u32 %v369, 16
      %v416 = vor.u32 %v414, %v412
      %v418 = vshll.u32 %v370, 16
      %v420 = vrot.slane %v418, 1
      %v421 = vsel %vm385, %v416, %v420
      %v422 = vshrl.u32 %v370, 16
      %v424 = vor.u32 %v422, %v420
      %v426 = vshll.u32 %v371, 16
      %v428 = vrot.slane %v426, 1
      %v429 = vsel %vm385, %v424, %v428
      %v430 = vshrl.u32 %v371, 16
      %v432 = vor.u32 %v430, %v428
      %v434 = vshll.u32 %v372, 16
      %v436 = vrot.slane %v434, 1
      %v437 = vsel %vm385, %v432, %v436
      %v438 = vshrl.u32 %v372, 16
      %v440 = vor.u32 %v438, %v436
      %v442 = vshll.u32 %v373, 16
      %v444 = vrot.slane %v442, 1
      %v445 = vsel %vm385, %v440, %v444
      %v446 = vshrl.u32 %v373, 16
      %v448 = vor.u32 %v446, %v444
      %v450 = vshll.u32 %v374, 16
      %v452 = vrot.slane %v450, 1
      %v453 = vsel %vm385, %v448, %v452
      %v454 = vshrl.u32 %v374, 16
      %v456 = vor.u32 %v454, %v452
      %v458 = vshll.u32 %v375, 16
      %v460 = vrot.slane %v458, 1
      %v461 = vsel %vm385, %v456, %v460
      %v462 = vshrl.u32 %v375, 16
      %v464 = vor.u32 %v462, %v460
      %v466 = vshll.u32 %v376, 16
      %v468 = vrot.slane %v466, 1
      %v469 = vsel %vm385, %v464, %v468
      %v470 = vshrl.u32 %v376, 16
      %v472 = vor.u32 %v470, %v468
      %v474 = vshll.u32 %v377, 16
      %v476 = vrot.slane %v474, 1
      %v477 = vsel %vm385, %v472, %v476
      %v478 = vshrl.u32 %v377, 16
      %v480 = vor.u32 %v478, %v476
      %v482 = vshll.u32 %v378, 16
      %v484 = vrot.slane %v482, 1
      %v485 = vsel %vm385, %v480, %v484
      %v486 = vshrl.u32 %v378, 16
      %v488 = vor.u32 %v486, %v484
      %v490 = vshll.u32 %v379, 16
      %v492 = vrot.slane %v490, 1
      %v493 = vsel %vm385, %v488, %v492
      %v494 = vshrl.u32 %v379, 16
      %v496 = vor.u32 %v494, %v492
      %v498 = vshll.u32 %v380, 16
      %v500 = vrot.slane %v498, 1
      %v501 = vsel %vm385, %v496, %v500
      %v502 = vshrl.u32 %v380, 16
      %v504 = vor.u32 %v502, %v500
      %v506 = vshll.u32 %v381, 16
      %v508 = vrot.slane %v506, 1
      %v509 = vsel %vm385, %v504, %v508
      %v510 = vshrl.u32 %v381, 16
      %v512 = vor.u32 %v510, %v508
      %v514 = vshll.u32 %v382, 16
      %v516 = vrot.slane %v514, 1
      %v517 = vsel %vm385, %v512, %v516
      %v518 = vshrl.u32 %v382, 16
      %v520 = vor.u32 %v518, %v516
      %v522 = vshll.u32 %v383, 16
      %v524 = vrot.slane %v522, 1
      %v525 = vsel %vm385, %v520, %v524
      %v526 = vshrl.u32 %v383, 16
      %v528 = vor.u32 %v526, %v524
      %v530 = vshll.u32 %v384, 16
      %v532 = vrot.slane %v530, 1
      %v533 = vsel %vm385, %v528, %v532
      %v568 = vunpack.c.l.b16 %v276
      %v569 = vunpack.c.l.b16 %v277
      %v570 = vunpack.c.l.b16 %v278
      %v571 = vunpack.c.l.b16 %v279
      %v572 = vunpack.c.l.b16 %v280
      %v573 = vunpack.c.l.b16 %v281
      %v574 = vunpack.c.l.b16 %v282
      %v575 = vunpack.c.l.b16 %v283
      %v576 = vunpack.c.l.b16 %v284
      %v577 = vunpack.c.l.b16 %v285
      %v578 = vunpack.c.l.b16 %v286
      %v579 = vunpack.c.l.b16 %v287
      %v580 = vunpack.c.l.b16 %v288
      %v581 = vunpack.c.l.b16 %v289
      %v582 = vunpack.c.l.b16 %v290
      %v583 = vunpack.c.l.b16 %v291
      %v584 = vpack.c.b16 %v569, %v568
      %v585 = vpack.c.b16 %v571, %v570
      %v586 = vpack.c.b16 %v573, %v572
      %v587 = vpack.c.b16 %v575, %v574
      %v588 = vpack.c.b16 %v577, %v576
      %v589 = vpack.c.b16 %v579, %v578
      %v590 = vpack.c.b16 %v581, %v580
      %v591 = vpack.c.b16 %v583, %v582
      %600 = vmatpush.bf16.msra.mxu0 %v591
      %601 = vmatpush.bf16.msra.mxu0 %v590
      %602 = vmatpush.bf16.msra.mxu0 %v589
      %603 = vmatpush.bf16.msra.mxu0 %v588
      %604 = vmatpush.bf16.msra.mxu0 %v587
      %605 = vmatpush.bf16.msra.mxu0 %v586
      %606 = vmatpush.bf16.msra.mxu0 %v585
      %607 = vmatpush.bf16.msra.mxu0 %v584
      %608 = vmatmul.bf16.gmra.mxu0 %v397
      %v609 = vpop.f32.mrf.mxu0
      %v610 = vadd.f32 0.0, %v609
      %v611 = vpop.f32.mrf.mxu0
      %v612 = vadd.f32 0.0, %v611
      %613 = vmatmul.bf16.gmra.mxu0 %v405
      %v614 = vpop.f32.mrf.mxu0
      %v615 = vadd.f32 0.0, %v614
      %v616 = vpop.f32.mrf.mxu0
      %v617 = vadd.f32 0.0, %v616
      %618 = vmatmul.bf16.gmra.mxu0 %v413
      %v619 = vpop.f32.mrf.mxu0
      %v620 = vadd.f32 0.0, %v619
      %v621 = vpop.f32.mrf.mxu0
      %v622 = vadd.f32 0.0, %v621
      %623 = vmatmul.bf16.gmra.mxu0 %v421
      %v624 = vpop.f32.mrf.mxu0
      %v625 = vadd.f32 0.0, %v624
      %v626 = vpop.f32.mrf.mxu0
      %v627 = vadd.f32 0.0, %v626
      %628 = vmatmul.bf16.gmra.mxu0 %v429
      %v629 = vpop.f32.mrf.mxu0
      %v630 = vadd.f32 0.0, %v629
      %v631 = vpop.f32.mrf.mxu0
      %v632 = vadd.f32 0.0, %v631
      %633 = vmatmul.bf16.gmra.mxu0 %v437
      %v634 = vpop.f32.mrf.mxu0
      %v635 = vadd.f32 0.0, %v634
      %v636 = vpop.f32.mrf.mxu0
      %v637 = vadd.f32 0.0, %v636
      %638 = vmatmul.bf16.gmra.mxu0 %v445
      %v639 = vpop.f32.mrf.mxu0
      %v640 = vadd.f32 0.0, %v639
      %v641 = vpop.f32.mrf.mxu0
      %v642 = vadd.f32 0.0, %v641
      %643 = vmatmul.bf16.gmra.mxu0 %v453
      %v644 = vpop.f32.mrf.mxu0
      %v645 = vadd.f32 0.0, %v644
      %v646 = vpop.f32.mrf.mxu0
      %v647 = vadd.f32 0.0, %v646
      %648 = vmatmul.bf16.gmra.mxu0 %v461
      %v649 = vpop.f32.mrf.mxu0
      %v650 = vadd.f32 0.0, %v649
      %v651 = vpop.f32.mrf.mxu0
      %v652 = vadd.f32 0.0, %v651
      %653 = vmatmul.bf16.gmra.mxu0 %v469
      %v654 = vpop.f32.mrf.mxu0
      %v655 = vadd.f32 0.0, %v654
      %v656 = vpop.f32.mrf.mxu0
      %v657 = vadd.f32 0.0, %v656
      %658 = vmatmul.bf16.gmra.mxu0 %v477
      %v659 = vpop.f32.mrf.mxu0
      %v660 = vadd.f32 0.0, %v659
      %v661 = vpop.f32.mrf.mxu0
      %v662 = vadd.f32 0.0, %v661
      %663 = vmatmul.bf16.gmra.mxu0 %v485
      %v664 = vpop.f32.mrf.mxu0
      %v665 = vadd.f32 0.0, %v664
      %v666 = vpop.f32.mrf.mxu0
      %v667 = vadd.f32 0.0, %v666
      %668 = vmatmul.bf16.gmra.mxu0 %v493
      %v669 = vpop.f32.mrf.mxu0
      %v670 = vadd.f32 0.0, %v669
      %v671 = vpop.f32.mrf.mxu0
      %v672 = vadd.f32 0.0, %v671
      %673 = vmatmul.bf16.gmra.mxu0 %v501
      %v674 = vpop.f32.mrf.mxu0
      %v675 = vadd.f32 0.0, %v674
      %v676 = vpop.f32.mrf.mxu0
      %v677 = vadd.f32 0.0, %v676
      %678 = vmatmul.bf16.gmra.mxu0 %v509
      %v679 = vpop.f32.mrf.mxu0
      %v680 = vadd.f32 0.0, %v679
      %v681 = vpop.f32.mrf.mxu0
      %v682 = vadd.f32 0.0, %v681
      %683 = vmatmul.bf16.gmra.mxu0 %v517
      %v684 = vpop.f32.mrf.mxu0
      %v685 = vadd.f32 0.0, %v684
      %v686 = vpop.f32.mrf.mxu0
      %v687 = vadd.f32 0.0, %v686
      %688 = vmatmul.bf16.gmra.mxu0 %v525
      %v689 = vpop.f32.mrf.mxu0
      %v690 = vadd.f32 0.0, %v689
      %v691 = vpop.f32.mrf.mxu0
      %v692 = vadd.f32 0.0, %v691
      %693 = vmatmul.bf16.gmra.mxu0 %v533
      %v694 = vpop.f32.mrf.mxu0
      %v695 = vadd.f32 0.0, %v694
      %v696 = vpop.f32.mrf.mxu0
      %v697 = vadd.f32 0.0, %v696
      %698 = vdwg.mxu0
      %v733 = vunpack.c.l.b16 %v258
      %v734 = vunpack.c.l.b16 %v259
      %v735 = vunpack.c.l.b16 %v260
      %v736 = vunpack.c.l.b16 %v261
      %v737 = vunpack.c.l.b16 %v262
      %v738 = vunpack.c.l.b16 %v263
      %v739 = vunpack.c.l.b16 %v264
      %v740 = vunpack.c.l.b16 %v265
      %v741 = vunpack.c.l.b16 %v266
      %v742 = vunpack.c.l.b16 %v267
      %v743 = vunpack.c.l.b16 %v268
      %v744 = vunpack.c.l.b16 %v269
      %v745 = vunpack.c.l.b16 %v270
      %v746 = vunpack.c.l.b16 %v271
      %v747 = vunpack.c.l.b16 %v272
      %v748 = vunpack.c.l.b16 %v273
      %v749 = vpack.c.b16 %v734, %v733
      %v750 = vpack.c.b16 %v736, %v735
      %v751 = vpack.c.b16 %v738, %v737
      %v752 = vpack.c.b16 %v740, %v739
      %v753 = vpack.c.b16 %v742, %v741
      %v754 = vpack.c.b16 %v744, %v743
      %v755 = vpack.c.b16 %v746, %v745
      %v756 = vpack.c.b16 %v748, %v747
      %765 = vmatpush.bf16.msra.mxu0 %v756
      %766 = vmatpush.bf16.msra.mxu0 %v755
      %767 = vmatpush.bf16.msra.mxu0 %v754
      %768 = vmatpush.bf16.msra.mxu0 %v753
      %769 = vmatpush.bf16.msra.mxu0 %v752
      %770 = vmatpush.bf16.msra.mxu0 %v751
      %771 = vmatpush.bf16.msra.mxu0 %v750
      %772 = vmatpush.bf16.msra.mxu0 %v749
      %773 = vmatmul.bf16.gmra.mxu0 %v366
      %v774 = vpop.f32.mrf.mxu0
      %v775 = vadd.f32 %v610, %v774
      %v776 = vpop.f32.mrf.mxu0
      %v777 = vadd.f32 %v612, %v776
      %778 = vmatmul.bf16.gmra.mxu0 %v367
      %v779 = vpop.f32.mrf.mxu0
      %v780 = vadd.f32 %v615, %v779
      %v781 = vpop.f32.mrf.mxu0
      %v782 = vadd.f32 %v617, %v781
      %783 = vmatmul.bf16.gmra.mxu0 %v368
      %v784 = vpop.f32.mrf.mxu0
      %v785 = vadd.f32 %v620, %v784
      %v786 = vpop.f32.mrf.mxu0
      %v787 = vadd.f32 %v622, %v786
      %788 = vmatmul.bf16.gmra.mxu0 %v369
      %v789 = vpop.f32.mrf.mxu0
      %v790 = vadd.f32 %v625, %v789
      %v791 = vpop.f32.mrf.mxu0
      %v792 = vadd.f32 %v627, %v791
      %793 = vmatmul.bf16.gmra.mxu0 %v370
      %v794 = vpop.f32.mrf.mxu0
      %v795 = vadd.f32 %v630, %v794
      %v796 = vpop.f32.mrf.mxu0
      %v797 = vadd.f32 %v632, %v796
      %798 = vmatmul.bf16.gmra.mxu0 %v371
      %v799 = vpop.f32.mrf.mxu0
      %v800 = vadd.f32 %v635, %v799
      %v801 = vpop.f32.mrf.mxu0
      %v802 = vadd.f32 %v637, %v801
      %803 = vmatmul.bf16.gmra.mxu0 %v372
      %v804 = vpop.f32.mrf.mxu0
      %v805 = vadd.f32 %v640, %v804
      %v806 = vpop.f32.mrf.mxu0
      %v807 = vadd.f32 %v642, %v806
      %808 = vmatmul.bf16.gmra.mxu0 %v373
      %v809 = vpop.f32.mrf.mxu0
      %v810 = vadd.f32 %v645, %v809
      %v811 = vpop.f32.mrf.mxu0
      %v812 = vadd.f32 %v647, %v811
      %813 = vmatmul.bf16.gmra.mxu0 %v374
      %v814 = vpop.f32.mrf.mxu0
      %v815 = vadd.f32 %v650, %v814
      %v816 = vpop.f32.mrf.mxu0
      %v817 = vadd.f32 %v652, %v816
      %818 = vmatmul.bf16.gmra.mxu0 %v375
      %v819 = vpop.f32.mrf.mxu0
      %v820 = vadd.f32 %v655, %v819
      %v821 = vpop.f32.mrf.mxu0
      %v822 = vadd.f32 %v657, %v821
      %823 = vmatmul.bf16.gmra.mxu0 %v376
      %v824 = vpop.f32.mrf.mxu0
      %v825 = vadd.f32 %v660, %v824
      %v826 = vpop.f32.mrf.mxu0
      %v827 = vadd.f32 %v662, %v826
      %828 = vmatmul.bf16.gmra.mxu0 %v377
      %v829 = vpop.f32.mrf.mxu0
      %v830 = vadd.f32 %v665, %v829
      %v831 = vpop.f32.mrf.mxu0
      %v832 = vadd.f32 %v667, %v831
      %833 = vmatmul.bf16.gmra.mxu0 %v378
      %v834 = vpop.f32.mrf.mxu0
      %v835 = vadd.f32 %v670, %v834
      %v836 = vpop.f32.mrf.mxu0
      %v837 = vadd.f32 %v672, %v836
      %838 = vmatmul.bf16.gmra.mxu0 %v379
      %v839 = vpop.f32.mrf.mxu0
      %v840 = vadd.f32 %v675, %v839
      %v841 = vpop.f32.mrf.mxu0
      %v842 = vadd.f32 %v677, %v841
      %843 = vmatmul.bf16.gmra.mxu0 %v380
      %v844 = vpop.f32.mrf.mxu0
      %v845 = vadd.f32 %v680, %v844
      %v846 = vpop.f32.mrf.mxu0
      %v847 = vadd.f32 %v682, %v846
      %848 = vmatmul.bf16.gmra.mxu0 %v381
      %v849 = vpop.f32.mrf.mxu0
      %v850 = vadd.f32 %v685, %v849
      %v851 = vpop.f32.mrf.mxu0
      %v852 = vadd.f32 %v687, %v851
      %853 = vmatmul.bf16.gmra.mxu0 %v382
      %v854 = vpop.f32.mrf.mxu0
      %v855 = vadd.f32 %v690, %v854
      %v856 = vpop.f32.mrf.mxu0
      %v857 = vadd.f32 %v692, %v856
      %858 = vmatmul.bf16.gmra.mxu0 %v383
      %v859 = vpop.f32.mrf.mxu0
      %v860 = vadd.f32 %v695, %v859
      %v861 = vpop.f32.mrf.mxu0
      %v862 = vadd.f32 %v697, %v861
      %863 = vdwg.mxu0
      %v864 = vld [vmem:[%s206] sm:$0xe]
      %s865 = scalar_lea.vmem %s210, 128
      %v866 = vld [vmem:[%s865] sm:$0xf]
      %v867 = vld [vmem:[%s865 + $0x4] sm:$0xf]
      %v868 = vld [vmem:[%s865 + $0x8] sm:$0xf]
      %v869 = vld [vmem:[%s865 + $0xc] sm:$0xf]
      %v870 = vld [vmem:[%s865 + $0x10] sm:$0xf]
      %v871 = vld [vmem:[%s865 + $0x14] sm:$0xf]
      %v872 = vld [vmem:[%s865 + $0x18] sm:$0xf]
      %v873 = vld [vmem:[%s865 + $0x1c] sm:$0xf]
      %v874 = vld [vmem:[%s865 + $0x20] sm:$0xf]
      %v875 = vld [vmem:[%s865 + $0x24] sm:$0xf]
      %v876 = vld [vmem:[%s865 + $0x28] sm:$0xf]
      %v877 = vld [vmem:[%s865 + $0x2c] sm:$0xf]
      %v878 = vld [vmem:[%s865 + $0x30] sm:$0xf]
      %v879 = vld [vmem:[%s865 + $0x34] sm:$0xf]
      %v880 = vld [vmem:[%s865 + $0x38] sm:$0xf]
      %v881 = vld [vmem:[%s865 + $0x3c] sm:$0xf]
      %v883 = vunpack.c.l.b16 %v864
      %v884 = vpack.c.b16 %v330, %v883
      %vm885 = vcmask 1046528
      %v886 = vrot.slane %v884, 1
      %v887 = vrot.slane %v367, 1
      %v888 = vsel %vm885, %v886, %v887
      %v889 = vrot.slane %v368, 1
      %v890 = vsel %vm885, %v887, %v889
      %v891 = vrot.slane %v369, 1
      %v892 = vsel %vm885, %v889, %v891
      %v893 = vrot.slane %v370, 1
      %v894 = vsel %vm885, %v891, %v893
      %v895 = vrot.slane %v371, 1
      %v896 = vsel %vm885, %v893, %v895
      %v897 = vrot.slane %v372, 1
      %v898 = vsel %vm885, %v895, %v897
      %v899 = vrot.slane %v373, 1
      %v900 = vsel %vm885, %v897, %v899
      %v901 = vrot.slane %v374, 1
      %v902 = vsel %vm885, %v899, %v901
      %v903 = vrot.slane %v375, 1
      %v904 = vsel %vm885, %v901, %v903
      %v905 = vrot.slane %v376, 1
      %v906 = vsel %vm885, %v903, %v905
      %v907 = vrot.slane %v377, 1
      %v908 = vsel %vm885, %v905, %v907
      %v909 = vrot.slane %v378, 1
      %v910 = vsel %vm885, %v907, %v909
      %v911 = vrot.slane %v379, 1
      %v912 = vsel %vm885, %v909, %v911
      %v913 = vrot.slane %v380, 1
      %v914 = vsel %vm885, %v911, %v913
      %v915 = vrot.slane %v381, 1
      %v916 = vsel %vm885, %v913, %v915
      %v917 = vrot.slane %v382, 1
      %v918 = vsel %vm885, %v915, %v917
      %v919 = vrot.slane %v383, 1
      %v920 = vsel %vm885, %v917, %v919
      %v921 = vrot.slane %v384, 1
      %v922 = vsel %vm885, %v919, %v921
      %v957 = vunpack.c.l.b16 %v866
      %v958 = vunpack.c.l.b16 %v867
      %v959 = vunpack.c.l.b16 %v868
      %v960 = vunpack.c.l.b16 %v869
      %v961 = vunpack.c.l.b16 %v870
      %v962 = vunpack.c.l.b16 %v871
      %v963 = vunpack.c.l.b16 %v872
      %v964 = vunpack.c.l.b16 %v873
      %v965 = vunpack.c.l.b16 %v874
      %v966 = vunpack.c.l.b16 %v875
      %v967 = vunpack.c.l.b16 %v876
      %v968 = vunpack.c.l.b16 %v877
      %v969 = vunpack.c.l.b16 %v878
      %v970 = vunpack.c.l.b16 %v879
      %v971 = vunpack.c.l.b16 %v880
      %v972 = vunpack.c.l.b16 %v881
      %v973 = vpack.c.b16 %v958, %v957
      %v974 = vpack.c.b16 %v960, %v959
      %v975 = vpack.c.b16 %v962, %v961
      %v976 = vpack.c.b16 %v964, %v963
      %v977 = vpack.c.b16 %v966, %v965
      %v978 = vpack.c.b16 %v968, %v967
      %v979 = vpack.c.b16 %v970, %v969
      %v980 = vpack.c.b16 %v972, %v971
      %989 = vmatpush.bf16.msra.mxu0 %v980
      %990 = vmatpush.bf16.msra.mxu0 %v979
      %991 = vmatpush.bf16.msra.mxu0 %v978
      %992 = vmatpush.bf16.msra.mxu0 %v977
      %993 = vmatpush.bf16.msra.mxu0 %v976
      %994 = vmatpush.bf16.msra.mxu0 %v975
      %995 = vmatpush.bf16.msra.mxu0 %v974
      %996 = vmatpush.bf16.msra.mxu0 %v973
      %997 = vmatmul.bf16.gmra.mxu0 %v888
      %v998 = vpop.f32.mrf.mxu0
      %v999 = vadd.f32 0.0, %v998
      %v1000 = vpop.f32.mrf.mxu0
      %v1001 = vadd.f32 0.0, %v1000
      %1002 = vmatmul.bf16.gmra.mxu0 %v890
      %v1003 = vpop.f32.mrf.mxu0
      %v1004 = vadd.f32 0.0, %v1003
      %v1005 = vpop.f32.mrf.mxu0
      %v1006 = vadd.f32 0.0, %v1005
      %1007 = vmatmul.bf16.gmra.mxu0 %v892
      %v1008 = vpop.f32.mrf.mxu0
      %v1009 = vadd.f32 0.0, %v1008
      %v1010 = vpop.f32.mrf.mxu0
      %v1011 = vadd.f32 0.0, %v1010
      %1012 = vmatmul.bf16.gmra.mxu0 %v894
      %v1013 = vpop.f32.mrf.mxu0
      %v1014 = vadd.f32 0.0, %v1013
      %v1015 = vpop.f32.mrf.mxu0
      %v1016 = vadd.f32 0.0, %v1015
      %1017 = vmatmul.bf16.gmra.mxu0 %v896
      %v1018 = vpop.f32.mrf.mxu0
      %v1019 = vadd.f32 0.0, %v1018
      %v1020 = vpop.f32.mrf.mxu0
      %v1021 = vadd.f32 0.0, %v1020
      %1022 = vmatmul.bf16.gmra.mxu0 %v898
      %v1023 = vpop.f32.mrf.mxu0
      %v1024 = vadd.f32 0.0, %v1023
      %v1025 = vpop.f32.mrf.mxu0
      %v1026 = vadd.f32 0.0, %v1025
      %1027 = vmatmul.bf16.gmra.mxu0 %v900
      %v1028 = vpop.f32.mrf.mxu0
      %v1029 = vadd.f32 0.0, %v1028
      %v1030 = vpop.f32.mrf.mxu0
      %v1031 = vadd.f32 0.0, %v1030
      %1032 = vmatmul.bf16.gmra.mxu0 %v902
      %v1033 = vpop.f32.mrf.mxu0
      %v1034 = vadd.f32 0.0, %v1033
      %v1035 = vpop.f32.mrf.mxu0
      %v1036 = vadd.f32 0.0, %v1035
      %1037 = vmatmul.bf16.gmra.mxu0 %v904
      %v1038 = vpop.f32.mrf.mxu0
      %v1039 = vadd.f32 0.0, %v1038
      %v1040 = vpop.f32.mrf.mxu0
      %v1041 = vadd.f32 0.0, %v1040
      %1042 = vmatmul.bf16.gmra.mxu0 %v906
      %v1043 = vpop.f32.mrf.mxu0
      %v1044 = vadd.f32 0.0, %v1043
      %v1045 = vpop.f32.mrf.mxu0
      %v1046 = vadd.f32 0.0, %v1045
      %1047 = vmatmul.bf16.gmra.mxu0 %v908
      %v1048 = vpop.f32.mrf.mxu0
      %v1049 = vadd.f32 0.0, %v1048
      %v1050 = vpop.f32.mrf.mxu0
      %v1051 = vadd.f32 0.0, %v1050
      %1052 = vmatmul.bf16.gmra.mxu0 %v910
      %v1053 = vpop.f32.mrf.mxu0
      %v1054 = vadd.f32 0.0, %v1053
      %v1055 = vpop.f32.mrf.mxu0
      %v1056 = vadd.f32 0.0, %v1055
      %1057 = vmatmul.bf16.gmra.mxu0 %v912
      %v1058 = vpop.f32.mrf.mxu0
      %v1059 = vadd.f32 0.0, %v1058
      %v1060 = vpop.f32.mrf.mxu0
      %v1061 = vadd.f32 0.0, %v1060
      %1062 = vmatmul.bf16.gmra.mxu0 %v914
      %v1063 = vpop.f32.mrf.mxu0
      %v1064 = vadd.f32 0.0, %v1063
      %v1065 = vpop.f32.mrf.mxu0
      %v1066 = vadd.f32 0.0, %v1065
      %1067 = vmatmul.bf16.gmra.mxu0 %v916
      %v1068 = vpop.f32.mrf.mxu0
      %v1069 = vadd.f32 0.0, %v1068
      %v1070 = vpop.f32.mrf.mxu0
      %v1071 = vadd.f32 0.0, %v1070
      %1072 = vmatmul.bf16.gmra.mxu0 %v918
      %v1073 = vpop.f32.mrf.mxu0
      %v1074 = vadd.f32 0.0, %v1073
      %v1075 = vpop.f32.mrf.mxu0
      %v1076 = vadd.f32 0.0, %v1075
      %1077 = vmatmul.bf16.gmra.mxu0 %v920
      %v1078 = vpop.f32.mrf.mxu0
      %v1079 = vadd.f32 0.0, %v1078
      %v1080 = vpop.f32.mrf.mxu0
      %v1081 = vadd.f32 0.0, %v1080
      %1082 = vmatmul.bf16.gmra.mxu0 %v922
      %v1083 = vpop.f32.mrf.mxu0
      %v1084 = vadd.f32 0.0, %v1083
      %v1085 = vpop.f32.mrf.mxu0
      %v1086 = vadd.f32 0.0, %v1085
      %1087 = vdwg.mxu0
      %v1088 = vadd.f32 %v775, %v999
      %v1089 = vadd.f32 %v777, %v1001
      %v1090 = vadd.f32 %v780, %v1004
      %v1091 = vadd.f32 %v782, %v1006
      %v1092 = vadd.f32 %v785, %v1009
      %v1093 = vadd.f32 %v787, %v1011
      %v1094 = vadd.f32 %v790, %v1014
      %v1095 = vadd.f32 %v792, %v1016
      %v1096 = vadd.f32 %v795, %v1019
      %v1097 = vadd.f32 %v797, %v1021
      %v1098 = vadd.f32 %v800, %v1024
      %v1099 = vadd.f32 %v802, %v1026
      %v1100 = vadd.f32 %v805, %v1029
      %v1101 = vadd.f32 %v807, %v1031
      %v1102 = vadd.f32 %v810, %v1034
      %v1103 = vadd.f32 %v812, %v1036
      %v1104 = vadd.f32 %v815, %v1039
      %v1105 = vadd.f32 %v817, %v1041
      %v1106 = vadd.f32 %v820, %v1044
      %v1107 = vadd.f32 %v822, %v1046
      %v1108 = vadd.f32 %v825, %v1049
      %v1109 = vadd.f32 %v827, %v1051
      %v1110 = vadd.f32 %v830, %v1054
      %v1111 = vadd.f32 %v832, %v1056
      %v1112 = vadd.f32 %v835, %v1059
      %v1113 = vadd.f32 %v837, %v1061
      %v1114 = vadd.f32 %v840, %v1064
      %v1115 = vadd.f32 %v842, %v1066
      %v1116 = vadd.f32 %v845, %v1069
      %v1117 = vadd.f32 %v847, %v1071
      %v1118 = vadd.f32 %v850, %v1074
      %v1119 = vadd.f32 %v852, %v1076
      %v1120 = vadd.f32 %v855, %v1079
      %v1121 = vadd.f32 %v857, %v1081
      %v1122 = vadd.f32 %v860, %v1084
      %v1123 = vadd.f32 %v862, %v1086
      %v1124 = vld [vmem:[%s206 + $0x8] sm:$0xe]
      %v1125 = vld [vmem:[%s206 + $0xc] sm:$0xf]
      %v1126 = vld [vmem:[%s206 + $0x10] sm:$0xf]
      %v1127 = vld [vmem:[%s206 + $0x14] sm:$0xf]
      %v1128 = vld [vmem:[%s206 + $0x18] sm:$0xf]
      %v1129 = vld [vmem:[%s206 + $0x1c] sm:$0xf]
      %v1130 = vld [vmem:[%s206 + $0x20] sm:$0xf]
      %v1131 = vld [vmem:[%s206 + $0x24] sm:$0xf]
      %v1132 = vld [vmem:[%s206 + $0x28] sm:$0xf]
      %v1133 = vld [vmem:[%s206 + $0x2c] sm:$0xf]
      %v1134 = vld [vmem:[%s206 + $0x30] sm:$0xf]
      %v1135 = vld [vmem:[%s206 + $0x34] sm:$0xf]
      %v1136 = vld [vmem:[%s206 + $0x38] sm:$0xf]
      %v1137 = vld [vmem:[%s206 + $0x3c] sm:$0xf]
      %v1138 = vld [vmem:[%s206 + $0x40] sm:$0xf]
      %v1139 = vld [vmem:[%s206 + $0x44] sm:$0xf]
      %v1140 = vld [vmem:[%s206 + $0x48] sm:$0xf]
      %v1141 = vld [vmem:[%s206 + $0x4c] sm:$0xf]
      %v1142 = vld [vmem:[%s206 + $0x50] sm:$0xf]
      %v1143 = vld [vmem:[%s206 + $0x54] sm:$0xf]
      %v1144 = vld [vmem:[%s206 + $0x58] sm:$0xf]
      %v1145 = vld [vmem:[%s206 + $0x5c] sm:$0xf]
      %v1146 = vld [vmem:[%s206 + $0x60] sm:$0xf]
      %v1147 = vld [vmem:[%s206 + $0x64] sm:$0xf]
      %v1148 = vld [vmem:[%s206 + $0x68] sm:$0xf]
      %v1149 = vld [vmem:[%s206 + $0x6c] sm:$0xf]
      %v1150 = vld [vmem:[%s206 + $0x70] sm:$0xf]
      %v1151 = vld [vmem:[%s206 + $0x74] sm:$0xf]
      %v1152 = vld [vmem:[%s206 + $0x78] sm:$0xf]
      %v1153 = vld [vmem:[%s206 + $0x7c] sm:$0xf]
      %v1154 = vld [vmem:[%s206 + $0x80] sm:$0xf]
      %v1155 = vld [vmem:[%s206 + $0x84] sm:$0xf]
      %v1156 = vld [vmem:[%s206 + $0x88] sm:$0xf]
      %v1157 = vld [vmem:[%s206 + $0x8c] sm:$0xf]
      %v1158 = vld [vmem:[%s206 + $0x90] sm:$0xf]
      %v1159 = vld [vmem:[%s206 + $0x94] sm:$0xf]
      %v1160 = vld [vmem:[%s206 + $0x98] sm:$0x1]
      %s1161 = scalar_lea.vmem %s210, 192
      %v1162 = vld [vmem:[%s1161] sm:$0xf]
      %v1163 = vld [vmem:[%s1161 + $0x4] sm:$0xf]
      %v1164 = vld [vmem:[%s1161 + $0x8] sm:$0xf]
      %v1165 = vld [vmem:[%s1161 + $0xc] sm:$0xf]
      %v1166 = vld [vmem:[%s1161 + $0x10] sm:$0xf]
      %v1167 = vld [vmem:[%s1161 + $0x14] sm:$0xf]
      %v1168 = vld [vmem:[%s1161 + $0x18] sm:$0xf]
      %v1169 = vld [vmem:[%s1161 + $0x1c] sm:$0xf]
      %v1170 = vld [vmem:[%s1161 + $0x20] sm:$0xf]
      %v1171 = vld [vmem:[%s1161 + $0x24] sm:$0xf]
      %v1172 = vld [vmem:[%s1161 + $0x28] sm:$0xf]
      %v1173 = vld [vmem:[%s1161 + $0x2c] sm:$0xf]
      %v1174 = vld [vmem:[%s1161 + $0x30] sm:$0xf]
      %v1175 = vld [vmem:[%s1161 + $0x34] sm:$0xf]
      %v1176 = vld [vmem:[%s1161 + $0x38] sm:$0xf]
      %v1177 = vld [vmem:[%s1161 + $0x3c] sm:$0xf]
      %v1215 = vunpack.c.l.b16 %v1124
      %v1216 = vunpack.c.l.b16 %v1125
      %v1217 = vunpack.c.l.b16 %v1126
      %v1218 = vunpack.c.l.b16 %v1127
      %v1219 = vunpack.c.l.b16 %v1128
      %v1220 = vunpack.c.l.b16 %v1129
      %v1221 = vunpack.c.l.b16 %v1130
      %v1222 = vunpack.c.l.b16 %v1131
      %v1223 = vunpack.c.l.b16 %v1132
      %v1224 = vunpack.c.l.b16 %v1133
      %v1225 = vunpack.c.l.b16 %v1134
      %v1226 = vunpack.c.l.b16 %v1135
      %v1227 = vunpack.c.l.b16 %v1136
      %v1228 = vunpack.c.l.b16 %v1137
      %v1229 = vunpack.c.l.b16 %v1138
      %v1230 = vunpack.c.l.b16 %v1139
      %v1231 = vunpack.c.l.b16 %v1140
      %v1232 = vunpack.c.l.b16 %v1141
      %v1233 = vunpack.c.l.b16 %v1142
      %v1234 = vunpack.c.l.b16 %v1143
      %v1235 = vunpack.c.l.b16 %v1144
      %v1236 = vunpack.c.l.b16 %v1145
      %v1237 = vunpack.c.l.b16 %v1146
      %v1238 = vunpack.c.l.b16 %v1147
      %v1239 = vunpack.c.l.b16 %v1148
      %v1240 = vunpack.c.l.b16 %v1149
      %v1241 = vunpack.c.l.b16 %v1150
      %v1242 = vunpack.c.l.b16 %v1151
      %v1243 = vunpack.c.l.b16 %v1152
      %v1244 = vunpack.c.l.b16 %v1153
      %v1245 = vunpack.c.l.b16 %v1154
      %v1246 = vunpack.c.l.b16 %v1155
      %v1247 = vunpack.c.l.b16 %v1156
      %v1248 = vunpack.c.l.b16 %v1157
      %v1249 = vunpack.c.l.b16 %v1158
      %v1250 = vunpack.c.l.b16 %v1159
      %v1251 = vunpack.c.l.b16 %v1160
      %v1252 = vpack.c.b16 %v1216, %v1215
      %v1253 = vpack.c.b16 %v1218, %v1217
      %v1254 = vpack.c.b16 %v1220, %v1219
      %v1255 = vpack.c.b16 %v1222, %v1221
      %v1256 = vpack.c.b16 %v1224, %v1223
      %v1257 = vpack.c.b16 %v1226, %v1225
      %v1258 = vpack.c.b16 %v1228, %v1227
      %v1259 = vpack.c.b16 %v1230, %v1229
      %v1260 = vpack.c.b16 %v1232, %v1231
      %v1261 = vpack.c.b16 %v1234, %v1233
      %v1262 = vpack.c.b16 %v1236, %v1235
      %v1263 = vpack.c.b16 %v1238, %v1237
      %v1264 = vpack.c.b16 %v1240, %v1239
      %v1265 = vpack.c.b16 %v1242, %v1241
      %v1266 = vpack.c.b16 %v1244, %v1243
      %v1267 = vpack.c.b16 %v1246, %v1245
      %v1268 = vpack.c.b16 %v1248, %v1247
      %v1269 = vpack.c.b16 %v1250, %v1249
      %v1270 = vpack.c.b16 %v1251, %v1251
      %v1271 = vrot.slane %v1252, 1
      %v1272 = vrot.slane %v1253, 1
      %v1273 = vsel %vm885, %v1271, %v1272
      %v1274 = vrot.slane %v1254, 1
      %v1275 = vsel %vm885, %v1272, %v1274
      %v1276 = vrot.slane %v1255, 1
      %v1277 = vsel %vm885, %v1274, %v1276
      %v1278 = vrot.slane %v1256, 1
      %v1279 = vsel %vm885, %v1276, %v1278
      %v1280 = vrot.slane %v1257, 1
      %v1281 = vsel %vm885, %v1278, %v1280
      %v1282 = vrot.slane %v1258, 1
      %v1283 = vsel %vm885, %v1280, %v1282
      %v1284 = vrot.slane %v1259, 1
      %v1285 = vsel %vm885, %v1282, %v1284
      %v1286 = vrot.slane %v1260, 1
      %v1287 = vsel %vm885, %v1284, %v1286
      %v1288 = vrot.slane %v1261, 1
      %v1289 = vsel %vm885, %v1286, %v1288
      %v1290 = vrot.slane %v1262, 1
      %v1291 = vsel %vm885, %v1288, %v1290
      %v1292 = vrot.slane %v1263, 1
      %v1293 = vsel %vm885, %v1290, %v1292
      %v1294 = vrot.slane %v1264, 1
      %v1295 = vsel %vm885, %v1292, %v1294
      %v1296 = vrot.slane %v1265, 1
      %v1297 = vsel %vm885, %v1294, %v1296
      %v1298 = vrot.slane %v1266, 1
      %v1299 = vsel %vm885, %v1296, %v1298
      %v1300 = vrot.slane %v1267, 1
      %v1301 = vsel %vm885, %v1298, %v1300
      %v1302 = vrot.slane %v1268, 1
      %v1303 = vsel %vm885, %v1300, %v1302
      %v1304 = vrot.slane %v1269, 1
      %v1305 = vsel %vm885, %v1302, %v1304
      %v1306 = vrot.slane %v1270, 1
      %v1307 = vsel %vm885, %v1304, %v1306
      %v1342 = vunpack.c.l.b16 %v1162
      %v1343 = vunpack.c.l.b16 %v1163
      %v1344 = vunpack.c.l.b16 %v1164
      %v1345 = vunpack.c.l.b16 %v1165
      %v1346 = vunpack.c.l.b16 %v1166
      %v1347 = vunpack.c.l.b16 %v1167
      %v1348 = vunpack.c.l.b16 %v1168
      %v1349 = vunpack.c.l.b16 %v1169
      %v1350 = vunpack.c.l.b16 %v1170
      %v1351 = vunpack.c.l.b16 %v1171
      %v1352 = vunpack.c.l.b16 %v1172
      %v1353 = vunpack.c.l.b16 %v1173
      %v1354 = vunpack.c.l.b16 %v1174
      %v1355 = vunpack.c.l.b16 %v1175
      %v1356 = vunpack.c.l.b16 %v1176
      %v1357 = vunpack.c.l.b16 %v1177
      %v1358 = vpack.c.b16 %v1343, %v1342
      %v1359 = vpack.c.b16 %v1345, %v1344
      %v1360 = vpack.c.b16 %v1347, %v1346
      %v1361 = vpack.c.b16 %v1349, %v1348
      %v1362 = vpack.c.b16 %v1351, %v1350
      %v1363 = vpack.c.b16 %v1353, %v1352
      %v1364 = vpack.c.b16 %v1355, %v1354
      %v1365 = vpack.c.b16 %v1357, %v1356
      %1374 = vmatpush.bf16.msra.mxu0 %v1365
      %1375 = vmatpush.bf16.msra.mxu0 %v1364
      %1376 = vmatpush.bf16.msra.mxu0 %v1363
      %1377 = vmatpush.bf16.msra.mxu0 %v1362
      %1378 = vmatpush.bf16.msra.mxu0 %v1361
      %1379 = vmatpush.bf16.msra.mxu0 %v1360
      %1380 = vmatpush.bf16.msra.mxu0 %v1359
      %1381 = vmatpush.bf16.msra.mxu0 %v1358
      %1382 = vmatmul.bf16.gmra.mxu0 %v1273
      %v1383 = vpop.f32.mrf.mxu0
      %v1384 = vadd.f32 0.0, %v1383
      %v1385 = vpop.f32.mrf.mxu0
      %v1386 = vadd.f32 0.0, %v1385
      %1387 = vmatmul.bf16.gmra.mxu0 %v1275
      %v1388 = vpop.f32.mrf.mxu0
      %v1389 = vadd.f32 0.0, %v1388
      %v1390 = vpop.f32.mrf.mxu0
      %v1391 = vadd.f32 0.0, %v1390
      %1392 = vmatmul.bf16.gmra.mxu0 %v1277
      %v1393 = vpop.f32.mrf.mxu0
      %v1394 = vadd.f32 0.0, %v1393
      %v1395 = vpop.f32.mrf.mxu0
      %v1396 = vadd.f32 0.0, %v1395
      %1397 = vmatmul.bf16.gmra.mxu0 %v1279
      %v1398 = vpop.f32.mrf.mxu0
      %v1399 = vadd.f32 0.0, %v1398
      %v1400 = vpop.f32.mrf.mxu0
      %v1401 = vadd.f32 0.0, %v1400
      %1402 = vmatmul.bf16.gmra.mxu0 %v1281
      %v1403 = vpop.f32.mrf.mxu0
      %v1404 = vadd.f32 0.0, %v1403
      %v1405 = vpop.f32.mrf.mxu0
      %v1406 = vadd.f32 0.0, %v1405
      %1407 = vmatmul.bf16.gmra.mxu0 %v1283
      %v1408 = vpop.f32.mrf.mxu0
      %v1409 = vadd.f32 0.0, %v1408
      %v1410 = vpop.f32.mrf.mxu0
      %v1411 = vadd.f32 0.0, %v1410
      %1412 = vmatmul.bf16.gmra.mxu0 %v1285
      %v1413 = vpop.f32.mrf.mxu0
      %v1414 = vadd.f32 0.0, %v1413
      %v1415 = vpop.f32.mrf.mxu0
      %v1416 = vadd.f32 0.0, %v1415
      %1417 = vmatmul.bf16.gmra.mxu0 %v1287
      %v1418 = vpop.f32.mrf.mxu0
      %v1419 = vadd.f32 0.0, %v1418
      %v1420 = vpop.f32.mrf.mxu0
      %v1421 = vadd.f32 0.0, %v1420
      %1422 = vmatmul.bf16.gmra.mxu0 %v1289
      %v1423 = vpop.f32.mrf.mxu0
      %v1424 = vadd.f32 0.0, %v1423
      %v1425 = vpop.f32.mrf.mxu0
      %v1426 = vadd.f32 0.0, %v1425
      %1427 = vmatmul.bf16.gmra.mxu0 %v1291
      %v1428 = vpop.f32.mrf.mxu0
      %v1429 = vadd.f32 0.0, %v1428
      %v1430 = vpop.f32.mrf.mxu0
      %v1431 = vadd.f32 0.0, %v1430
      %1432 = vmatmul.bf16.gmra.mxu0 %v1293
      %v1433 = vpop.f32.mrf.mxu0
      %v1434 = vadd.f32 0.0, %v1433
      %v1435 = vpop.f32.mrf.mxu0
      %v1436 = vadd.f32 0.0, %v1435
      %1437 = vmatmul.bf16.gmra.mxu0 %v1295
      %v1438 = vpop.f32.mrf.mxu0
      %v1439 = vadd.f32 0.0, %v1438
      %v1440 = vpop.f32.mrf.mxu0
      %v1441 = vadd.f32 0.0, %v1440
      %1442 = vmatmul.bf16.gmra.mxu0 %v1297
      %v1443 = vpop.f32.mrf.mxu0
      %v1444 = vadd.f32 0.0, %v1443
      %v1445 = vpop.f32.mrf.mxu0
      %v1446 = vadd.f32 0.0, %v1445
      %1447 = vmatmul.bf16.gmra.mxu0 %v1299
      %v1448 = vpop.f32.mrf.mxu0
      %v1449 = vadd.f32 0.0, %v1448
      %v1450 = vpop.f32.mrf.mxu0
      %v1451 = vadd.f32 0.0, %v1450
      %1452 = vmatmul.bf16.gmra.mxu0 %v1301
      %v1453 = vpop.f32.mrf.mxu0
      %v1454 = vadd.f32 0.0, %v1453
      %v1455 = vpop.f32.mrf.mxu0
      %v1456 = vadd.f32 0.0, %v1455
      %1457 = vmatmul.bf16.gmra.mxu0 %v1303
      %v1458 = vpop.f32.mrf.mxu0
      %v1459 = vadd.f32 0.0, %v1458
      %v1460 = vpop.f32.mrf.mxu0
      %v1461 = vadd.f32 0.0, %v1460
      %1462 = vmatmul.bf16.gmra.mxu0 %v1305
      %v1463 = vpop.f32.mrf.mxu0
      %v1464 = vadd.f32 0.0, %v1463
      %v1465 = vpop.f32.mrf.mxu0
      %v1466 = vadd.f32 0.0, %v1465
      %1467 = vmatmul.bf16.gmra.mxu0 %v1307
      %v1468 = vpop.f32.mrf.mxu0
      %v1469 = vadd.f32 0.0, %v1468
      %v1470 = vpop.f32.mrf.mxu0
      %v1471 = vadd.f32 0.0, %v1470
      %1472 = vdwg.mxu0
      %v1473 = vadd.f32 %v1088, %v1384
      %v1474 = vadd.f32 %v1089, %v1386
      %v1475 = vadd.f32 %v1090, %v1389
      %v1476 = vadd.f32 %v1091, %v1391
      %v1477 = vadd.f32 %v1092, %v1394
      %v1478 = vadd.f32 %v1093, %v1396
      %v1479 = vadd.f32 %v1094, %v1399
      %v1480 = vadd.f32 %v1095, %v1401
      %v1481 = vadd.f32 %v1096, %v1404
      %v1482 = vadd.f32 %v1097, %v1406
      %v1483 = vadd.f32 %v1098, %v1409
      %v1484 = vadd.f32 %v1099, %v1411
      %v1485 = vadd.f32 %v1100, %v1414
      %v1486 = vadd.f32 %v1101, %v1416
      %v1487 = vadd.f32 %v1102, %v1419
      %v1488 = vadd.f32 %v1103, %v1421
      %v1489 = vadd.f32 %v1104, %v1424
      %v1490 = vadd.f32 %v1105, %v1426
      %v1491 = vadd.f32 %v1106, %v1429
      %v1492 = vadd.f32 %v1107, %v1431
      %v1493 = vadd.f32 %v1108, %v1434
      %v1494 = vadd.f32 %v1109, %v1436
      %v1495 = vadd.f32 %v1110, %v1439
      %v1496 = vadd.f32 %v1111, %v1441
      %v1497 = vadd.f32 %v1112, %v1444
      %v1498 = vadd.f32 %v1113, %v1446
      %v1499 = vadd.f32 %v1114, %v1449
      %v1500 = vadd.f32 %v1115, %v1451
      %v1501 = vadd.f32 %v1116, %v1454
      %v1502 = vadd.f32 %v1117, %v1456
      %v1503 = vadd.f32 %v1118, %v1459
      %v1504 = vadd.f32 %v1119, %v1461
      %v1505 = vadd.f32 %v1120, %v1464
      %v1506 = vadd.f32 %v1121, %v1466
      %v1507 = vadd.f32 %v1122, %v1469
      %v1508 = vadd.f32 %v1123, %v1471
      %v1509 = vld [vmem:[%s206 + $0x98] sm:$0x3]
      %s1510 = scalar_lea.vmem %s210, 256
      %v1511 = vld [vmem:[%s1510] sm:$0xf]
      %v1512 = vld [vmem:[%s1510 + $0x4] sm:$0xf]
      %v1513 = vld [vmem:[%s1510 + $0x8] sm:$0xf]
      %v1514 = vld [vmem:[%s1510 + $0xc] sm:$0xf]
      %v1515 = vld [vmem:[%s1510 + $0x10] sm:$0xf]
      %v1516 = vld [vmem:[%s1510 + $0x14] sm:$0xf]
      %v1517 = vld [vmem:[%s1510 + $0x18] sm:$0xf]
      %v1518 = vld [vmem:[%s1510 + $0x1c] sm:$0xf]
      %v1519 = vld [vmem:[%s1510 + $0x20] sm:$0xf]
      %v1520 = vld [vmem:[%s1510 + $0x24] sm:$0xf]
      %v1521 = vld [vmem:[%s1510 + $0x28] sm:$0xf]
      %v1522 = vld [vmem:[%s1510 + $0x2c] sm:$0xf]
      %v1523 = vld [vmem:[%s1510 + $0x30] sm:$0xf]
      %v1524 = vld [vmem:[%s1510 + $0x34] sm:$0xf]
      %v1525 = vld [vmem:[%s1510 + $0x38] sm:$0xf]
      %v1526 = vld [vmem:[%s1510 + $0x3c] sm:$0xf]
      %v1528 = vunpack.c.l.b16 %v1509
      %v1529 = vpack.c.b16 %v1528, %v1528
      %vm1530 = vsmask.f32 6400
      %v1532 = vshrl.u32 %v1252, 16
      %v1534 = vrot.slane %v1532, 1
      %v1535 = vshll.u32 %v1252, 16
      %v1537 = vrot.slane %v1535, 2
      %v1538 = vor.u32 %v1534, %v1537
      %v1540 = vshrl.u32 %v1253, 16
      %v1542 = vrot.slane %v1540, 1
      %v1543 = vshll.u32 %v1253, 16
      %v1545 = vrot.slane %v1543, 2
      %v1546 = vor.u32 %v1542, %v1545
      %v1547 = vsel %vm1530, %v1538, %v1546
      %v1549 = vshrl.u32 %v1254, 16
      %v1551 = vrot.slane %v1549, 1
      %v1552 = vshll.u32 %v1254, 16
      %v1554 = vrot.slane %v1552, 2
      %v1555 = vor.u32 %v1551, %v1554
      %v1556 = vsel %vm1530, %v1546, %v1555
      %v1558 = vshrl.u32 %v1255, 16
      %v1560 = vrot.slane %v1558, 1
      %v1561 = vshll.u32 %v1255, 16
      %v1563 = vrot.slane %v1561, 2
      %v1564 = vor.u32 %v1560, %v1563
      %v1565 = vsel %vm1530, %v1555, %v1564
      %v1567 = vshrl.u32 %v1256, 16
      %v1569 = vrot.slane %v1567, 1
      %v1570 = vshll.u32 %v1256, 16
      %v1572 = vrot.slane %v1570, 2
      %v1573 = vor.u32 %v1569, %v1572
      %v1574 = vsel %vm1530, %v1564, %v1573
      %v1576 = vshrl.u32 %v1257, 16
      %v1578 = vrot.slane %v1576, 1
      %v1579 = vshll.u32 %v1257, 16
      %v1581 = vrot.slane %v1579, 2
      %v1582 = vor.u32 %v1578, %v1581
      %v1583 = vsel %vm1530, %v1573, %v1582
      %v1585 = vshrl.u32 %v1258, 16
      %v1587 = vrot.slane %v1585, 1
      %v1588 = vshll.u32 %v1258, 16
      %v1590 = vrot.slane %v1588, 2
      %v1591 = vor.u32 %v1587, %v1590
      %v1592 = vsel %vm1530, %v1582, %v1591
      %v1594 = vshrl.u32 %v1259, 16
      %v1596 = vrot.slane %v1594, 1
      %v1597 = vshll.u32 %v1259, 16
      %v1599 = vrot.slane %v1597, 2
      %v1600 = vor.u32 %v1596, %v1599
      %v1601 = vsel %vm1530, %v1591, %v1600
      %v1603 = vshrl.u32 %v1260, 16
      %v1605 = vrot.slane %v1603, 1
      %v1606 = vshll.u32 %v1260, 16
      %v1608 = vrot.slane %v1606, 2
      %v1609 = vor.u32 %v1605, %v1608
      %v1610 = vsel %vm1530, %v1600, %v1609
      %v1612 = vshrl.u32 %v1261, 16
      %v1614 = vrot.slane %v1612, 1
      %v1615 = vshll.u32 %v1261, 16
      %v1617 = vrot.slane %v1615, 2
      %v1618 = vor.u32 %v1614, %v1617
      %v1619 = vsel %vm1530, %v1609, %v1618
      %v1621 = vshrl.u32 %v1262, 16
      %v1623 = vrot.slane %v1621, 1
      %v1624 = vshll.u32 %v1262, 16
      %v1626 = vrot.slane %v1624, 2
      %v1627 = vor.u32 %v1623, %v1626
      %v1628 = vsel %vm1530, %v1618, %v1627
      %v1630 = vshrl.u32 %v1263, 16
      %v1632 = vrot.slane %v1630, 1
      %v1633 = vshll.u32 %v1263, 16
      %v1635 = vrot.slane %v1633, 2
      %v1636 = vor.u32 %v1632, %v1635
      %v1637 = vsel %vm1530, %v1627, %v1636
      %v1639 = vshrl.u32 %v1264, 16
      %v1641 = vrot.slane %v1639, 1
      %v1642 = vshll.u32 %v1264, 16
      %v1644 = vrot.slane %v1642, 2
      %v1645 = vor.u32 %v1641, %v1644
      %v1646 = vsel %vm1530, %v1636, %v1645
      %v1648 = vshrl.u32 %v1265, 16
      %v1650 = vrot.slane %v1648, 1
      %v1651 = vshll.u32 %v1265, 16
      %v1653 = vrot.slane %v1651, 2
      %v1654 = vor.u32 %v1650, %v1653
      %v1655 = vsel %vm1530, %v1645, %v1654
      %v1657 = vshrl.u32 %v1266, 16
      %v1659 = vrot.slane %v1657, 1
      %v1660 = vshll.u32 %v1266, 16
      %v1662 = vrot.slane %v1660, 2
      %v1663 = vor.u32 %v1659, %v1662
      %v1664 = vsel %vm1530, %v1654, %v1663
      %v1666 = vshrl.u32 %v1267, 16
      %v1668 = vrot.slane %v1666, 1
      %v1669 = vshll.u32 %v1267, 16
      %v1671 = vrot.slane %v1669, 2
      %v1672 = vor.u32 %v1668, %v1671
      %v1673 = vsel %vm1530, %v1663, %v1672
      %v1675 = vshrl.u32 %v1268, 16
      %v1677 = vrot.slane %v1675, 1
      %v1678 = vshll.u32 %v1268, 16
      %v1680 = vrot.slane %v1678, 2
      %v1681 = vor.u32 %v1677, %v1680
      %v1682 = vsel %vm1530, %v1672, %v1681
      %v1684 = vshrl.u32 %v1269, 16
      %v1686 = vrot.slane %v1684, 1
      %v1687 = vshll.u32 %v1269, 16
      %v1689 = vrot.slane %v1687, 2
      %v1690 = vor.u32 %v1686, %v1689
      %v1691 = vsel %vm1530, %v1681, %v1690
      %v1693 = vshrl.u32 %v1529, 16
      %v1695 = vrot.slane %v1693, 1
      %v1696 = vshll.u32 %v1529, 16
      %v1698 = vrot.slane %v1696, 2
      %v1699 = vor.u32 %v1695, %v1698
      %v1700 = vsel %vm1530, %v1690, %v1699
      %v1735 = vunpack.c.l.b16 %v1511
      %v1736 = vunpack.c.l.b16 %v1512
      %v1737 = vunpack.c.l.b16 %v1513
      %v1738 = vunpack.c.l.b16 %v1514
      %v1739 = vunpack.c.l.b16 %v1515
      %v1740 = vunpack.c.l.b16 %v1516
      %v1741 = vunpack.c.l.b16 %v1517
      %v1742 = vunpack.c.l.b16 %v1518
      %v1743 = vunpack.c.l.b16 %v1519
      %v1744 = vunpack.c.l.b16 %v1520
      %v1745 = vunpack.c.l.b16 %v1521
      %v1746 = vunpack.c.l.b16 %v1522
      %v1747 = vunpack.c.l.b16 %v1523
      %v1748 = vunpack.c.l.b16 %v1524
      %v1749 = vunpack.c.l.b16 %v1525
      %v1750 = vunpack.c.l.b16 %v1526
      %v1751 = vpack.c.b16 %v1736, %v1735
      %v1752 = vpack.c.b16 %v1738, %v1737
      %v1753 = vpack.c.b16 %v1740, %v1739
      %v1754 = vpack.c.b16 %v1742, %v1741
      %v1755 = vpack.c.b16 %v1744, %v1743
      %v1756 = vpack.c.b16 %v1746, %v1745
      %v1757 = vpack.c.b16 %v1748, %v1747
      %v1758 = vpack.c.b16 %v1750, %v1749
      %1767 = vmatpush.bf16.msra.mxu0 %v1758
      %1768 = vmatpush.bf16.msra.mxu0 %v1757
      %1769 = vmatpush.bf16.msra.mxu0 %v1756
      %1770 = vmatpush.bf16.msra.mxu0 %v1755
      %1771 = vmatpush.bf16.msra.mxu0 %v1754
      %1772 = vmatpush.bf16.msra.mxu0 %v1753
      %1773 = vmatpush.bf16.msra.mxu0 %v1752
      %1774 = vmatpush.bf16.msra.mxu0 %v1751
      %1775 = vmatmul.bf16.gmra.mxu0 %v1547
      %v1776 = vpop.f32.mrf.mxu0
      %v1777 = vadd.f32 0.0, %v1776
      %v1778 = vpop.f32.mrf.mxu0
      %v1779 = vadd.f32 0.0, %v1778
      %1780 = vmatmul.bf16.gmra.mxu0 %v1556
      %v1781 = vpop.f32.mrf.mxu0
      %v1782 = vadd.f32 0.0, %v1781
      %v1783 = vpop.f32.mrf.mxu0
      %v1784 = vadd.f32 0.0, %v1783
      %1785 = vmatmul.bf16.gmra.mxu0 %v1565
      %v1786 = vpop.f32.mrf.mxu0
      %v1787 = vadd.f32 0.0, %v1786
      %v1788 = vpop.f32.mrf.mxu0
      %v1789 = vadd.f32 0.0, %v1788
      %1790 = vmatmul.bf16.gmra.mxu0 %v1574
      %v1791 = vpop.f32.mrf.mxu0
      %v1792 = vadd.f32 0.0, %v1791
      %v1793 = vpop.f32.mrf.mxu0
      %v1794 = vadd.f32 0.0, %v1793
      %1795 = vmatmul.bf16.gmra.mxu0 %v1583
      %v1796 = vpop.f32.mrf.mxu0
      %v1797 = vadd.f32 0.0, %v1796
      %v1798 = vpop.f32.mrf.mxu0
      %v1799 = vadd.f32 0.0, %v1798
      %1800 = vmatmul.bf16.gmra.mxu0 %v1592
      %v1801 = vpop.f32.mrf.mxu0
      %v1802 = vadd.f32 0.0, %v1801
      %v1803 = vpop.f32.mrf.mxu0
      %v1804 = vadd.f32 0.0, %v1803
      %1805 = vmatmul.bf16.gmra.mxu0 %v1601
      %v1806 = vpop.f32.mrf.mxu0
      %v1807 = vadd.f32 0.0, %v1806
      %v1808 = vpop.f32.mrf.mxu0
      %v1809 = vadd.f32 0.0, %v1808
      %1810 = vmatmul.bf16.gmra.mxu0 %v1610
      %v1811 = vpop.f32.mrf.mxu0
      %v1812 = vadd.f32 0.0, %v1811
      %v1813 = vpop.f32.mrf.mxu0
      %v1814 = vadd.f32 0.0, %v1813
      %1815 = vmatmul.bf16.gmra.mxu0 %v1619
      %v1816 = vpop.f32.mrf.mxu0
      %v1817 = vadd.f32 0.0, %v1816
      %v1818 = vpop.f32.mrf.mxu0
      %v1819 = vadd.f32 0.0, %v1818
      %1820 = vmatmul.bf16.gmra.mxu0 %v1628
      %v1821 = vpop.f32.mrf.mxu0
      %v1822 = vadd.f32 0.0, %v1821
      %v1823 = vpop.f32.mrf.mxu0
      %v1824 = vadd.f32 0.0, %v1823
      %1825 = vmatmul.bf16.gmra.mxu0 %v1637
      %v1826 = vpop.f32.mrf.mxu0
      %v1827 = vadd.f32 0.0, %v1826
      %v1828 = vpop.f32.mrf.mxu0
      %v1829 = vadd.f32 0.0, %v1828
      %1830 = vmatmul.bf16.gmra.mxu0 %v1646
      %v1831 = vpop.f32.mrf.mxu0
      %v1832 = vadd.f32 0.0, %v1831
      %v1833 = vpop.f32.mrf.mxu0
      %v1834 = vadd.f32 0.0, %v1833
      %1835 = vmatmul.bf16.gmra.mxu0 %v1655
      %v1836 = vpop.f32.mrf.mxu0
      %v1837 = vadd.f32 0.0, %v1836
      %v1838 = vpop.f32.mrf.mxu0
      %v1839 = vadd.f32 0.0, %v1838
      %1840 = vmatmul.bf16.gmra.mxu0 %v1664
      %v1841 = vpop.f32.mrf.mxu0
      %v1842 = vadd.f32 0.0, %v1841
      %v1843 = vpop.f32.mrf.mxu0
      %v1844 = vadd.f32 0.0, %v1843
      %1845 = vmatmul.bf16.gmra.mxu0 %v1673
      %v1846 = vpop.f32.mrf.mxu0
      %v1847 = vadd.f32 0.0, %v1846
      %v1848 = vpop.f32.mrf.mxu0
      %v1849 = vadd.f32 0.0, %v1848
      %1850 = vmatmul.bf16.gmra.mxu0 %v1682
      %v1851 = vpop.f32.mrf.mxu0
      %v1852 = vadd.f32 0.0, %v1851
      %v1853 = vpop.f32.mrf.mxu0
      %v1854 = vadd.f32 0.0, %v1853
      %1855 = vmatmul.bf16.gmra.mxu0 %v1691
      %v1856 = vpop.f32.mrf.mxu0
      %v1857 = vadd.f32 0.0, %v1856
      %v1858 = vpop.f32.mrf.mxu0
      %v1859 = vadd.f32 0.0, %v1858
      %1860 = vmatmul.bf16.gmra.mxu0 %v1700
      %v1861 = vpop.f32.mrf.mxu0
      %v1862 = vadd.f32 0.0, %v1861
      %v1863 = vpop.f32.mrf.mxu0
      %v1864 = vadd.f32 0.0, %v1863
      %1865 = vdwg.mxu0
      %v1866 = vadd.f32 %v1473, %v1777
      %v1867 = vadd.f32 %v1474, %v1779
      %v1868 = vadd.f32 %v1475, %v1782
      %v1869 = vadd.f32 %v1476, %v1784
      %v1870 = vadd.f32 %v1477, %v1787
      %v1871 = vadd.f32 %v1478, %v1789
      %v1872 = vadd.f32 %v1479, %v1792
      %v1873 = vadd.f32 %v1480, %v1794
      %v1874 = vadd.f32 %v1481, %v1797
      %v1875 = vadd.f32 %v1482, %v1799
      %v1876 = vadd.f32 %v1483, %v1802
      %v1877 = vadd.f32 %v1484, %v1804
      %v1878 = vadd.f32 %v1485, %v1807
      %v1879 = vadd.f32 %v1486, %v1809
      %v1880 = vadd.f32 %v1487, %v1812
      %v1881 = vadd.f32 %v1488, %v1814
      %v1882 = vadd.f32 %v1489, %v1817
      %v1883 = vadd.f32 %v1490, %v1819
      %v1884 = vadd.f32 %v1491, %v1822
      %v1885 = vadd.f32 %v1492, %v1824
      %v1886 = vadd.f32 %v1493, %v1827
      %v1887 = vadd.f32 %v1494, %v1829
      %v1888 = vadd.f32 %v1495, %v1832
      %v1889 = vadd.f32 %v1496, %v1834
      %v1890 = vadd.f32 %v1497, %v1837
      %v1891 = vadd.f32 %v1498, %v1839
      %v1892 = vadd.f32 %v1499, %v1842
      %v1893 = vadd.f32 %v1500, %v1844
      %v1894 = vadd.f32 %v1501, %v1847
      %v1895 = vadd.f32 %v1502, %v1849
      %v1896 = vadd.f32 %v1503, %v1852
      %v1897 = vadd.f32 %v1504, %v1854
      %v1898 = vadd.f32 %v1505, %v1857
      %v1899 = vadd.f32 %v1506, %v1859
      %v1900 = vadd.f32 %v1507, %v1862
      %v1901 = vadd.f32 %v1508, %v1864
      %v1902 = vld [vmem:[%s206 + $0x8] sm:$0xc]
      %s1903 = scalar_lea.vmem %s210, 320
      %v1904 = vld [vmem:[%s1903] sm:$0xf]
      %v1905 = vld [vmem:[%s1903 + $0x4] sm:$0xf]
      %v1906 = vld [vmem:[%s1903 + $0x8] sm:$0xf]
      %v1907 = vld [vmem:[%s1903 + $0xc] sm:$0xf]
      %v1908 = vld [vmem:[%s1903 + $0x10] sm:$0xf]
      %v1909 = vld [vmem:[%s1903 + $0x14] sm:$0xf]
      %v1910 = vld [vmem:[%s1903 + $0x18] sm:$0xf]
      %v1911 = vld [vmem:[%s1903 + $0x1c] sm:$0xf]
      %v1912 = vld [vmem:[%s1903 + $0x20] sm:$0xf]
      %v1913 = vld [vmem:[%s1903 + $0x24] sm:$0xf]
      %v1914 = vld [vmem:[%s1903 + $0x28] sm:$0xf]
      %v1915 = vld [vmem:[%s1903 + $0x2c] sm:$0xf]
      %v1916 = vld [vmem:[%s1903 + $0x30] sm:$0xf]
      %v1917 = vld [vmem:[%s1903 + $0x34] sm:$0xf]
      %v1918 = vld [vmem:[%s1903 + $0x38] sm:$0xf]
      %v1919 = vld [vmem:[%s1903 + $0x3c] sm:$0xf]
      %v1921 = vunpack.c.l.b16 %v1902
      %v1922 = vpack.c.b16 %v1216, %v1921
      %vm1923 = vcmask 1045504
      %v1924 = vrot.slane %v1922, 2
      %v1925 = vrot.slane %v1253, 2
      %v1926 = vsel %vm1923, %v1924, %v1925
      %v1927 = vrot.slane %v1254, 2
      %v1928 = vsel %vm1923, %v1925, %v1927
      %v1929 = vrot.slane %v1255, 2
      %v1930 = vsel %vm1923, %v1927, %v1929
      %v1931 = vrot.slane %v1256, 2
      %v1932 = vsel %vm1923, %v1929, %v1931
      %v1933 = vrot.slane %v1257, 2
      %v1934 = vsel %vm1923, %v1931, %v1933
      %v1935 = vrot.slane %v1258, 2
      %v1936 = vsel %vm1923, %v1933, %v1935
      %v1937 = vrot.slane %v1259, 2
      %v1938 = vsel %vm1923, %v1935, %v1937
      %v1939 = vrot.slane %v1260, 2
      %v1940 = vsel %vm1923, %v1937, %v1939
      %v1941 = vrot.slane %v1261, 2
      %v1942 = vsel %vm1923, %v1939, %v1941
      %v1943 = vrot.slane %v1262, 2
      %v1944 = vsel %vm1923, %v1941, %v1943
      %v1945 = vrot.slane %v1263, 2
      %v1946 = vsel %vm1923, %v1943, %v1945
      %v1947 = vrot.slane %v1264, 2
      %v1948 = vsel %vm1923, %v1945, %v1947
      %v1949 = vrot.slane %v1265, 2
      %v1950 = vsel %vm1923, %v1947, %v1949
      %v1951 = vrot.slane %v1266, 2
      %v1952 = vsel %vm1923, %v1949, %v1951
      %v1953 = vrot.slane %v1267, 2
      %v1954 = vsel %vm1923, %v1951, %v1953
      %v1955 = vrot.slane %v1268, 2
      %v1956 = vsel %vm1923, %v1953, %v1955
      %v1957 = vrot.slane %v1269, 2
      %v1958 = vsel %vm1923, %v1955, %v1957
      %v1959 = vrot.slane %v1529, 2
      %v1960 = vsel %vm1923, %v1957, %v1959
      %v1995 = vunpack.c.l.b16 %v1904
      %v1996 = vunpack.c.l.b16 %v1905
      %v1997 = vunpack.c.l.b16 %v1906
      %v1998 = vunpack.c.l.b16 %v1907
      %v1999 = vunpack.c.l.b16 %v1908
      %v2000 = vunpack.c.l.b16 %v1909
      %v2001 = vunpack.c.l.b16 %v1910
      %v2002 = vunpack.c.l.b16 %v1911
      %v2003 = vunpack.c.l.b16 %v1912
      %v2004 = vunpack.c.l.b16 %v1913
      %v2005 = vunpack.c.l.b16 %v1914
      %v2006 = vunpack.c.l.b16 %v1915
      %v2007 = vunpack.c.l.b16 %v1916
      %v2008 = vunpack.c.l.b16 %v1917
      %v2009 = vunpack.c.l.b16 %v1918
      %v2010 = vunpack.c.l.b16 %v1919
      %v2011 = vpack.c.b16 %v1996, %v1995
      %v2012 = vpack.c.b16 %v1998, %v1997
      %v2013 = vpack.c.b16 %v2000, %v1999
      %v2014 = vpack.c.b16 %v2002, %v2001
      %v2015 = vpack.c.b16 %v2004, %v2003
      %v2016 = vpack.c.b16 %v2006, %v2005
      %v2017 = vpack.c.b16 %v2008, %v2007
      %v2018 = vpack.c.b16 %v2010, %v2009
      %2027 = vmatpush.bf16.msra.mxu0 %v2018
      %2028 = vmatpush.bf16.msra.mxu0 %v2017
      %2029 = vmatpush.bf16.msra.mxu0 %v2016
      %2030 = vmatpush.bf16.msra.mxu0 %v2015
      %2031 = vmatpush.bf16.msra.mxu0 %v2014
      %2032 = vmatpush.bf16.msra.mxu0 %v2013
      %2033 = vmatpush.bf16.msra.mxu0 %v2012
      %2034 = vmatpush.bf16.msra.mxu0 %v2011
      %2035 = vmatmul.bf16.gmra.mxu0 %v1926
      %v2036 = vpop.f32.mrf.mxu0
      %v2037 = vadd.f32 0.0, %v2036
      %v2038 = vpop.f32.mrf.mxu0
      %v2039 = vadd.f32 0.0, %v2038
      %2040 = vmatmul.bf16.gmra.mxu0 %v1928
      %v2041 = vpop.f32.mrf.mxu0
      %v2042 = vadd.f32 0.0, %v2041
      %v2043 = vpop.f32.mrf.mxu0
      %v2044 = vadd.f32 0.0, %v2043
      %2045 = vmatmul.bf16.gmra.mxu0 %v1930
      %v2046 = vpop.f32.mrf.mxu0
      %v2047 = vadd.f32 0.0, %v2046
      %v2048 = vpop.f32.mrf.mxu0
      %v2049 = vadd.f32 0.0, %v2048
      %2050 = vmatmul.bf16.gmra.mxu0 %v1932
      %v2051 = vpop.f32.mrf.mxu0
      %v2052 = vadd.f32 0.0, %v2051
      %v2053 = vpop.f32.mrf.mxu0
      %v2054 = vadd.f32 0.0, %v2053
      %2055 = vmatmul.bf16.gmra.mxu0 %v1934
      %v2056 = vpop.f32.mrf.mxu0
      %v2057 = vadd.f32 0.0, %v2056
      %v2058 = vpop.f32.mrf.mxu0
      %v2059 = vadd.f32 0.0, %v2058
      %2060 = vmatmul.bf16.gmra.mxu0 %v1936
      %v2061 = vpop.f32.mrf.mxu0
      %v2062 = vadd.f32 0.0, %v2061
      %v2063 = vpop.f32.mrf.mxu0
      %v2064 = vadd.f32 0.0, %v2063
      %2065 = vmatmul.bf16.gmra.mxu0 %v1938
      %v2066 = vpop.f32.mrf.mxu0
      %v2067 = vadd.f32 0.0, %v2066
      %v2068 = vpop.f32.mrf.mxu0
      %v2069 = vadd.f32 0.0, %v2068
      %2070 = vmatmul.bf16.gmra.mxu0 %v1940
      %v2071 = vpop.f32.mrf.mxu0
      %v2072 = vadd.f32 0.0, %v2071
      %v2073 = vpop.f32.mrf.mxu0
      %v2074 = vadd.f32 0.0, %v2073
      %2075 = vmatmul.bf16.gmra.mxu0 %v1942
      %v2076 = vpop.f32.mrf.mxu0
      %v2077 = vadd.f32 0.0, %v2076
      %v2078 = vpop.f32.mrf.mxu0
      %v2079 = vadd.f32 0.0, %v2078
      %2080 = vmatmul.bf16.gmra.mxu0 %v1944
      %v2081 = vpop.f32.mrf.mxu0
      %v2082 = vadd.f32 0.0, %v2081
      %v2083 = vpop.f32.mrf.mxu0
      %v2084 = vadd.f32 0.0, %v2083
      %2085 = vmatmul.bf16.gmra.mxu0 %v1946
      %v2086 = vpop.f32.mrf.mxu0
      %v2087 = vadd.f32 0.0, %v2086
      %v2088 = vpop.f32.mrf.mxu0
      %v2089 = vadd.f32 0.0, %v2088
      %2090 = vmatmul.bf16.gmra.mxu0 %v1948
      %v2091 = vpop.f32.mrf.mxu0
      %v2092 = vadd.f32 0.0, %v2091
      %v2093 = vpop.f32.mrf.mxu0
      %v2094 = vadd.f32 0.0, %v2093
      %2095 = vmatmul.bf16.gmra.mxu0 %v1950
      %v2096 = vpop.f32.mrf.mxu0
      %v2097 = vadd.f32 0.0, %v2096
      %v2098 = vpop.f32.mrf.mxu0
      %v2099 = vadd.f32 0.0, %v2098
      %2100 = vmatmul.bf16.gmra.mxu0 %v1952
      %v2101 = vpop.f32.mrf.mxu0
      %v2102 = vadd.f32 0.0, %v2101
      %v2103 = vpop.f32.mrf.mxu0
      %v2104 = vadd.f32 0.0, %v2103
      %2105 = vmatmul.bf16.gmra.mxu0 %v1954
      %v2106 = vpop.f32.mrf.mxu0
      %v2107 = vadd.f32 0.0, %v2106
      %v2108 = vpop.f32.mrf.mxu0
      %v2109 = vadd.f32 0.0, %v2108
      %2110 = vmatmul.bf16.gmra.mxu0 %v1956
      %v2111 = vpop.f32.mrf.mxu0
      %v2112 = vadd.f32 0.0, %v2111
      %v2113 = vpop.f32.mrf.mxu0
      %v2114 = vadd.f32 0.0, %v2113
      %2115 = vmatmul.bf16.gmra.mxu0 %v1958
      %v2116 = vpop.f32.mrf.mxu0
      %v2117 = vadd.f32 0.0, %v2116
      %v2118 = vpop.f32.mrf.mxu0
      %v2119 = vadd.f32 0.0, %v2118
      %2120 = vmatmul.bf16.gmra.mxu0 %v1960
      %v2121 = vpop.f32.mrf.mxu0
      %v2122 = vadd.f32 0.0, %v2121
      %v2123 = vpop.f32.mrf.mxu0
      %v2124 = vadd.f32 0.0, %v2123
      %2125 = vdwg.mxu0
      %v2126 = vadd.f32 %v1866, %v2037
      %v2127 = vadd.f32 %v1867, %v2039
      %v2128 = vadd.f32 %v1868, %v2042
      %v2129 = vadd.f32 %v1869, %v2044
      %v2130 = vadd.f32 %v1870, %v2047
      %v2131 = vadd.f32 %v1871, %v2049
      %v2132 = vadd.f32 %v1872, %v2052
      %v2133 = vadd.f32 %v1873, %v2054
      %v2134 = vadd.f32 %v1874, %v2057
      %v2135 = vadd.f32 %v1875, %v2059
      %v2136 = vadd.f32 %v1876, %v2062
      %v2137 = vadd.f32 %v1877, %v2064
      %v2138 = vadd.f32 %v1878, %v2067
      %v2139 = vadd.f32 %v1879, %v2069
      %v2140 = vadd.f32 %v1880, %v2072
      %v2141 = vadd.f32 %v1881, %v2074
      %v2142 = vadd.f32 %v1882, %v2077
      %v2143 = vadd.f32 %v1883, %v2079
      %v2144 = vadd.f32 %v1884, %v2082
      %v2145 = vadd.f32 %v1885, %v2084
      %v2146 = vadd.f32 %v1886, %v2087
      %v2147 = vadd.f32 %v1887, %v2089
      %v2148 = vadd.f32 %v1888, %v2092
      %v2149 = vadd.f32 %v1889, %v2094
      %v2150 = vadd.f32 %v1890, %v2097
      %v2151 = vadd.f32 %v1891, %v2099
      %v2152 = vadd.f32 %v1892, %v2102
      %v2153 = vadd.f32 %v1893, %v2104
      %v2154 = vadd.f32 %v1894, %v2107
      %v2155 = vadd.f32 %v1895, %v2109
      %v2156 = vadd.f32 %v1896, %v2112
      %v2157 = vadd.f32 %v1897, %v2114
      %v2158 = vadd.f32 %v1898, %v2117
      %v2159 = vadd.f32 %v1899, %v2119
      %v2160 = vadd.f32 %v1900, %v2122
      %v2161 = vadd.f32 %v1901, %v2124
      %v2162 = vld [vmem:[%s206 + $0x10] sm:$0xc]
      %v2163 = vld [vmem:[%s206 + $0x14] sm:$0xf]
      %v2164 = vld [vmem:[%s206 + $0x18] sm:$0xf]
      %v2165 = vld [vmem:[%s206 + $0x1c] sm:$0xf]
      %v2166 = vld [vmem:[%s206 + $0x20] sm:$0xf]
      %v2167 = vld [vmem:[%s206 + $0x24] sm:$0xf]
      %v2168 = vld [vmem:[%s206 + $0x28] sm:$0xf]
      %v2169 = vld [vmem:[%s206 + $0x2c] sm:$0xf]
      %v2170 = vld [vmem:[%s206 + $0x30] sm:$0xf]
      %v2171 = vld [vmem:[%s206 + $0x34] sm:$0xf]
      %v2172 = vld [vmem:[%s206 + $0x38] sm:$0xf]
      %v2173 = vld [vmem:[%s206 + $0x3c] sm:$0xf]
      %v2174 = vld [vmem:[%s206 + $0x40] sm:$0xf]
      %v2175 = vld [vmem:[%s206 + $0x44] sm:$0xf]
      %v2176 = vld [vmem:[%s206 + $0x48] sm:$0xf]
      %v2177 = vld [vmem:[%s206 + $0x4c] sm:$0xf]
      %v2178 = vld [vmem:[%s206 + $0x50] sm:$0xf]
      %v2179 = vld [vmem:[%s206 + $0x54] sm:$0xf]
      %v2180 = vld [vmem:[%s206 + $0x58] sm:$0xf]
      %v2181 = vld [vmem:[%s206 + $0x5c] sm:$0xf]
      %v2182 = vld [vmem:[%s206 + $0x60] sm:$0xf]
      %v2183 = vld [vmem:[%s206 + $0x64] sm:$0xf]
      %v2184 = vld [vmem:[%s206 + $0x68] sm:$0xf]
      %v2185 = vld [vmem:[%s206 + $0x6c] sm:$0xf]
      %v2186 = vld [vmem:[%s206 + $0x70] sm:$0xf]
      %v2187 = vld [vmem:[%s206 + $0x74] sm:$0xf]
      %v2188 = vld [vmem:[%s206 + $0x78] sm:$0xf]
      %v2189 = vld [vmem:[%s206 + $0x7c] sm:$0xf]
      %v2190 = vld [vmem:[%s206 + $0x80] sm:$0xf]
      %v2191 = vld [vmem:[%s206 + $0x84] sm:$0xf]
      %v2192 = vld [vmem:[%s206 + $0x88] sm:$0xf]
      %v2193 = vld [vmem:[%s206 + $0x8c] sm:$0xf]
      %v2194 = vld [vmem:[%s206 + $0x90] sm:$0xf]
      %v2195 = vld [vmem:[%s206 + $0x94] sm:$0xf]
      %v2196 = vld [vmem:[%s206 + $0x98] sm:$0xf]
      %v2197 = vld [vmem:[%s206 + $0x9c] sm:$0xf]
      %v2198 = vld [vmem:[%s206 + $0xa0] sm:$0x3]
      %s2199 = scalar_lea.vmem %s210, 384
      %v2200 = vld [vmem:[%s2199] sm:$0xf]
      %v2201 = vld [vmem:[%s2199 + $0x4] sm:$0xf]
      %v2202 = vld [vmem:[%s2199 + $0x8] sm:$0xf]
      %v2203 = vld [vmem:[%s2199 + $0xc] sm:$0xf]
      %v2204 = vld [vmem:[%s2199 + $0x10] sm:$0xf]
      %v2205 = vld [vmem:[%s2199 + $0x14] sm:$0xf]
      %v2206 = vld [vmem:[%s2199 + $0x18] sm:$0xf]
      %v2207 = vld [vmem:[%s2199 + $0x1c] sm:$0xf]
      %v2208 = vld [vmem:[%s2199 + $0x20] sm:$0xf]
      %v2209 = vld [vmem:[%s2199 + $0x24] sm:$0xf]
      %v2210 = vld [vmem:[%s2199 + $0x28] sm:$0xf]
      %v2211 = vld [vmem:[%s2199 + $0x2c] sm:$0xf]
      %v2212 = vld [vmem:[%s2199 + $0x30] sm:$0xf]
      %v2213 = vld [vmem:[%s2199 + $0x34] sm:$0xf]
      %v2214 = vld [vmem:[%s2199 + $0x38] sm:$0xf]
      %v2215 = vld [vmem:[%s2199 + $0x3c] sm:$0xf]
      %v2253 = vunpack.c.l.b16 %v2162
      %v2254 = vunpack.c.l.b16 %v2163
      %v2255 = vunpack.c.l.b16 %v2164
      %v2256 = vunpack.c.l.b16 %v2165
      %v2257 = vunpack.c.l.b16 %v2166
      %v2258 = vunpack.c.l.b16 %v2167
      %v2259 = vunpack.c.l.b16 %v2168
      %v2260 = vunpack.c.l.b16 %v2169
      %v2261 = vunpack.c.l.b16 %v2170
      %v2262 = vunpack.c.l.b16 %v2171
      %v2263 = vunpack.c.l.b16 %v2172
      %v2264 = vunpack.c.l.b16 %v2173
      %v2265 = vunpack.c.l.b16 %v2174
      %v2266 = vunpack.c.l.b16 %v2175
      %v2267 = vunpack.c.l.b16 %v2176
      %v2268 = vunpack.c.l.b16 %v2177
      %v2269 = vunpack.c.l.b16 %v2178
      %v2270 = vunpack.c.l.b16 %v2179
      %v2271 = vunpack.c.l.b16 %v2180
      %v2272 = vunpack.c.l.b16 %v2181
      %v2273 = vunpack.c.l.b16 %v2182
      %v2274 = vunpack.c.l.b16 %v2183
      %v2275 = vunpack.c.l.b16 %v2184
      %v2276 = vunpack.c.l.b16 %v2185
      %v2277 = vunpack.c.l.b16 %v2186
      %v2278 = vunpack.c.l.b16 %v2187
      %v2279 = vunpack.c.l.b16 %v2188
      %v2280 = vunpack.c.l.b16 %v2189
      %v2281 = vunpack.c.l.b16 %v2190
      %v2282 = vunpack.c.l.b16 %v2191
      %v2283 = vunpack.c.l.b16 %v2192
      %v2284 = vunpack.c.l.b16 %v2193
      %v2285 = vunpack.c.l.b16 %v2194
      %v2286 = vunpack.c.l.b16 %v2195
      %v2287 = vunpack.c.l.b16 %v2196
      %v2288 = vunpack.c.l.b16 %v2197
      %v2289 = vunpack.c.l.b16 %v2198
      %v2290 = vpack.c.b16 %v2254, %v2253
      %v2291 = vpack.c.b16 %v2256, %v2255
      %v2292 = vpack.c.b16 %v2258, %v2257
      %v2293 = vpack.c.b16 %v2260, %v2259
      %v2294 = vpack.c.b16 %v2262, %v2261
      %v2295 = vpack.c.b16 %v2264, %v2263
      %v2296 = vpack.c.b16 %v2266, %v2265
      %v2297 = vpack.c.b16 %v2268, %v2267
      %v2298 = vpack.c.b16 %v2270, %v2269
      %v2299 = vpack.c.b16 %v2272, %v2271
      %v2300 = vpack.c.b16 %v2274, %v2273
      %v2301 = vpack.c.b16 %v2276, %v2275
      %v2302 = vpack.c.b16 %v2278, %v2277
      %v2303 = vpack.c.b16 %v2280, %v2279
      %v2304 = vpack.c.b16 %v2282, %v2281
      %v2305 = vpack.c.b16 %v2284, %v2283
      %v2306 = vpack.c.b16 %v2286, %v2285
      %v2307 = vpack.c.b16 %v2288, %v2287
      %v2308 = vpack.c.b16 %v2289, %v2289
      %v2309 = vrot.slane %v2290, 2
      %v2310 = vrot.slane %v2291, 2
      %v2311 = vsel %vm1923, %v2309, %v2310
      %v2312 = vrot.slane %v2292, 2
      %v2313 = vsel %vm1923, %v2310, %v2312
      %v2314 = vrot.slane %v2293, 2
      %v2315 = vsel %vm1923, %v2312, %v2314
      %v2316 = vrot.slane %v2294, 2
      %v2317 = vsel %vm1923, %v2314, %v2316
      %v2318 = vrot.slane %v2295, 2
      %v2319 = vsel %vm1923, %v2316, %v2318
      %v2320 = vrot.slane %v2296, 2
      %v2321 = vsel %vm1923, %v2318, %v2320
      %v2322 = vrot.slane %v2297, 2
      %v2323 = vsel %vm1923, %v2320, %v2322
      %v2324 = vrot.slane %v2298, 2
      %v2325 = vsel %vm1923, %v2322, %v2324
      %v2326 = vrot.slane %v2299, 2
      %v2327 = vsel %vm1923, %v2324, %v2326
      %v2328 = vrot.slane %v2300, 2
      %v2329 = vsel %vm1923, %v2326, %v2328
      %v2330 = vrot.slane %v2301, 2
      %v2331 = vsel %vm1923, %v2328, %v2330
      %v2332 = vrot.slane %v2302, 2
      %v2333 = vsel %vm1923, %v2330, %v2332
      %v2334 = vrot.slane %v2303, 2
      %v2335 = vsel %vm1923, %v2332, %v2334
      %v2336 = vrot.slane %v2304, 2
      %v2337 = vsel %vm1923, %v2334, %v2336
      %v2338 = vrot.slane %v2305, 2
      %v2339 = vsel %vm1923, %v2336, %v2338
      %v2340 = vrot.slane %v2306, 2
      %v2341 = vsel %vm1923, %v2338, %v2340
      %v2342 = vrot.slane %v2307, 2
      %v2343 = vsel %vm1923, %v2340, %v2342
      %v2344 = vrot.slane %v2308, 2
      %v2345 = vsel %vm1923, %v2342, %v2344
      %v2380 = vunpack.c.l.b16 %v2200
      %v2381 = vunpack.c.l.b16 %v2201
      %v2382 = vunpack.c.l.b16 %v2202
      %v2383 = vunpack.c.l.b16 %v2203
      %v2384 = vunpack.c.l.b16 %v2204
      %v2385 = vunpack.c.l.b16 %v2205
      %v2386 = vunpack.c.l.b16 %v2206
      %v2387 = vunpack.c.l.b16 %v2207
      %v2388 = vunpack.c.l.b16 %v2208
      %v2389 = vunpack.c.l.b16 %v2209
      %v2390 = vunpack.c.l.b16 %v2210
      %v2391 = vunpack.c.l.b16 %v2211
      %v2392 = vunpack.c.l.b16 %v2212
      %v2393 = vunpack.c.l.b16 %v2213
      %v2394 = vunpack.c.l.b16 %v2214
      %v2395 = vunpack.c.l.b16 %v2215
      %v2396 = vpack.c.b16 %v2381, %v2380
      %v2397 = vpack.c.b16 %v2383, %v2382
      %v2398 = vpack.c.b16 %v2385, %v2384
      %v2399 = vpack.c.b16 %v2387, %v2386
      %v2400 = vpack.c.b16 %v2389, %v2388
      %v2401 = vpack.c.b16 %v2391, %v2390
      %v2402 = vpack.c.b16 %v2393, %v2392
      %v2403 = vpack.c.b16 %v2395, %v2394
      %2412 = vmatpush.bf16.msra.mxu0 %v2403
      %2413 = vmatpush.bf16.msra.mxu0 %v2402
      %2414 = vmatpush.bf16.msra.mxu0 %v2401
      %2415 = vmatpush.bf16.msra.mxu0 %v2400
      %2416 = vmatpush.bf16.msra.mxu0 %v2399
      %2417 = vmatpush.bf16.msra.mxu0 %v2398
      %2418 = vmatpush.bf16.msra.mxu0 %v2397
      %2419 = vmatpush.bf16.msra.mxu0 %v2396
      %2420 = vmatmul.bf16.gmra.mxu0 %v2311
      %v2421 = vpop.f32.mrf.mxu0
      %v2422 = vadd.f32 0.0, %v2421
      %v2423 = vpop.f32.mrf.mxu0
      %v2424 = vadd.f32 0.0, %v2423
      %2425 = vmatmul.bf16.gmra.mxu0 %v2313
      %v2426 = vpop.f32.mrf.mxu0
      %v2427 = vadd.f32 0.0, %v2426
      %v2428 = vpop.f32.mrf.mxu0
      %v2429 = vadd.f32 0.0, %v2428
      %2430 = vmatmul.bf16.gmra.mxu0 %v2315
      %v2431 = vpop.f32.mrf.mxu0
      %v2432 = vadd.f32 0.0, %v2431
      %v2433 = vpop.f32.mrf.mxu0
      %v2434 = vadd.f32 0.0, %v2433
      %2435 = vmatmul.bf16.gmra.mxu0 %v2317
      %v2436 = vpop.f32.mrf.mxu0
      %v2437 = vadd.f32 0.0, %v2436
      %v2438 = vpop.f32.mrf.mxu0
      %v2439 = vadd.f32 0.0, %v2438
      %2440 = vmatmul.bf16.gmra.mxu0 %v2319
      %v2441 = vpop.f32.mrf.mxu0
      %v2442 = vadd.f32 0.0, %v2441
      %v2443 = vpop.f32.mrf.mxu0
      %v2444 = vadd.f32 0.0, %v2443
      %2445 = vmatmul.bf16.gmra.mxu0 %v2321
      %v2446 = vpop.f32.mrf.mxu0
      %v2447 = vadd.f32 0.0, %v2446
      %v2448 = vpop.f32.mrf.mxu0
      %v2449 = vadd.f32 0.0, %v2448
      %2450 = vmatmul.bf16.gmra.mxu0 %v2323
      %v2451 = vpop.f32.mrf.mxu0
      %v2452 = vadd.f32 0.0, %v2451
      %v2453 = vpop.f32.mrf.mxu0
      %v2454 = vadd.f32 0.0, %v2453
      %2455 = vmatmul.bf16.gmra.mxu0 %v2325
      %v2456 = vpop.f32.mrf.mxu0
      %v2457 = vadd.f32 0.0, %v2456
      %v2458 = vpop.f32.mrf.mxu0
      %v2459 = vadd.f32 0.0, %v2458
      %2460 = vmatmul.bf16.gmra.mxu0 %v2327
      %v2461 = vpop.f32.mrf.mxu0
      %v2462 = vadd.f32 0.0, %v2461
      %v2463 = vpop.f32.mrf.mxu0
      %v2464 = vadd.f32 0.0, %v2463
      %2465 = vmatmul.bf16.gmra.mxu0 %v2329
      %v2466 = vpop.f32.mrf.mxu0
      %v2467 = vadd.f32 0.0, %v2466
      %v2468 = vpop.f32.mrf.mxu0
      %v2469 = vadd.f32 0.0, %v2468
      %2470 = vmatmul.bf16.gmra.mxu0 %v2331
      %v2471 = vpop.f32.mrf.mxu0
      %v2472 = vadd.f32 0.0, %v2471
      %v2473 = vpop.f32.mrf.mxu0
      %v2474 = vadd.f32 0.0, %v2473
      %2475 = vmatmul.bf16.gmra.mxu0 %v2333
      %v2476 = vpop.f32.mrf.mxu0
      %v2477 = vadd.f32 0.0, %v2476
      %v2478 = vpop.f32.mrf.mxu0
      %v2479 = vadd.f32 0.0, %v2478
      %2480 = vmatmul.bf16.gmra.mxu0 %v2335
      %v2481 = vpop.f32.mrf.mxu0
      %v2482 = vadd.f32 0.0, %v2481
      %v2483 = vpop.f32.mrf.mxu0
      %v2484 = vadd.f32 0.0, %v2483
      %2485 = vmatmul.bf16.gmra.mxu0 %v2337
      %v2486 = vpop.f32.mrf.mxu0
      %v2487 = vadd.f32 0.0, %v2486
      %v2488 = vpop.f32.mrf.mxu0
      %v2489 = vadd.f32 0.0, %v2488
      %2490 = vmatmul.bf16.gmra.mxu0 %v2339
      %v2491 = vpop.f32.mrf.mxu0
      %v2492 = vadd.f32 0.0, %v2491
      %v2493 = vpop.f32.mrf.mxu0
      %v2494 = vadd.f32 0.0, %v2493
      %2495 = vmatmul.bf16.gmra.mxu0 %v2341
      %v2496 = vpop.f32.mrf.mxu0
      %v2497 = vadd.f32 0.0, %v2496
      %v2498 = vpop.f32.mrf.mxu0
      %v2499 = vadd.f32 0.0, %v2498
      %2500 = vmatmul.bf16.gmra.mxu0 %v2343
      %v2501 = vpop.f32.mrf.mxu0
      %v2502 = vadd.f32 0.0, %v2501
      %v2503 = vpop.f32.mrf.mxu0
      %v2504 = vadd.f32 0.0, %v2503
      %2505 = vmatmul.bf16.gmra.mxu0 %v2345
      %v2506 = vpop.f32.mrf.mxu0
      %v2507 = vadd.f32 0.0, %v2506
      %v2508 = vpop.f32.mrf.mxu0
      %v2509 = vadd.f32 0.0, %v2508
      %2510 = vdwg.mxu0
      %v2511 = vadd.f32 %v2126, %v2422
      %v2512 = vadd.f32 %v2127, %v2424
      %v2513 = vadd.f32 %v2128, %v2427
      %v2514 = vadd.f32 %v2129, %v2429
      %v2515 = vadd.f32 %v2130, %v2432
      %v2516 = vadd.f32 %v2131, %v2434
      %v2517 = vadd.f32 %v2132, %v2437
      %v2518 = vadd.f32 %v2133, %v2439
      %v2519 = vadd.f32 %v2134, %v2442
      %v2520 = vadd.f32 %v2135, %v2444
      %v2521 = vadd.f32 %v2136, %v2447
      %v2522 = vadd.f32 %v2137, %v2449
      %v2523 = vadd.f32 %v2138, %v2452
      %v2524 = vadd.f32 %v2139, %v2454
      %v2525 = vadd.f32 %v2140, %v2457
      %v2526 = vadd.f32 %v2141, %v2459
      %v2527 = vadd.f32 %v2142, %v2462
      %v2528 = vadd.f32 %v2143, %v2464
      %v2529 = vadd.f32 %v2144, %v2467
      %v2530 = vadd.f32 %v2145, %v2469
      %v2531 = vadd.f32 %v2146, %v2472
      %v2532 = vadd.f32 %v2147, %v2474
      %v2533 = vadd.f32 %v2148, %v2477
      %v2534 = vadd.f32 %v2149, %v2479
      %v2535 = vadd.f32 %v2150, %v2482
      %v2536 = vadd.f32 %v2151, %v2484
      %v2537 = vadd.f32 %v2152, %v2487
      %v2538 = vadd.f32 %v2153, %v2489
      %v2539 = vadd.f32 %v2154, %v2492
      %v2540 = vadd.f32 %v2155, %v2494
      %v2541 = vadd.f32 %v2156, %v2497
      %v2542 = vadd.f32 %v2157, %v2499
      %v2543 = vadd.f32 %v2158, %v2502
      %v2544 = vadd.f32 %v2159, %v2504
      %v2545 = vadd.f32 %v2160, %v2507
      %v2546 = vadd.f32 %v2161, %v2509
      %v2547 = vld [vmem:[%s206 + $0xa0] sm:$0x7]
      %s2548 = scalar_lea.vmem %s210, 448
      %v2549 = vld [vmem:[%s2548] sm:$0xf]
      %v2550 = vld [vmem:[%s2548 + $0x4] sm:$0xf]
      %v2551 = vld [vmem:[%s2548 + $0x8] sm:$0xf]
      %v2552 = vld [vmem:[%s2548 + $0xc] sm:$0xf]
      %v2553 = vld [vmem:[%s2548 + $0x10] sm:$0xf]
      %v2554 = vld [vmem:[%s2548 + $0x14] sm:$0xf]
      %v2555 = vld [vmem:[%s2548 + $0x18] sm:$0xf]
      %v2556 = vld [vmem:[%s2548 + $0x1c] sm:$0xf]
      %v2557 = vld [vmem:[%s2548 + $0x20] sm:$0xf]
      %v2558 = vld [vmem:[%s2548 + $0x24] sm:$0xf]
      %v2559 = vld [vmem:[%s2548 + $0x28] sm:$0xf]
      %v2560 = vld [vmem:[%s2548 + $0x2c] sm:$0xf]
      %v2561 = vld [vmem:[%s2548 + $0x30] sm:$0xf]
      %v2562 = vld [vmem:[%s2548 + $0x34] sm:$0xf]
      %v2563 = vld [vmem:[%s2548 + $0x38] sm:$0xf]
      %v2564 = vld [vmem:[%s2548 + $0x3c] sm:$0xf]
      %v2566 = vunpack.c.l.b16 %v2547
      %v2567 = vpack.c.b16 %v2566, %v2566
      %vm2568 = vsmask.f32 5376
      %v2570 = vshrl.u32 %v2290, 16
      %v2572 = vrot.slane %v2570, 2
      %v2573 = vshll.u32 %v2290, 16
      %v2575 = vrot.slane %v2573, 3
      %v2576 = vor.u32 %v2572, %v2575
      %v2578 = vshrl.u32 %v2291, 16
      %v2580 = vrot.slane %v2578, 2
      %v2581 = vshll.u32 %v2291, 16
      %v2583 = vrot.slane %v2581, 3
      %v2584 = vor.u32 %v2580, %v2583
      %v2585 = vsel %vm2568, %v2576, %v2584
      %v2587 = vshrl.u32 %v2292, 16
      %v2589 = vrot.slane %v2587, 2
      %v2590 = vshll.u32 %v2292, 16
      %v2592 = vrot.slane %v2590, 3
      %v2593 = vor.u32 %v2589, %v2592
      %v2594 = vsel %vm2568, %v2584, %v2593
      %v2596 = vshrl.u32 %v2293, 16
      %v2598 = vrot.slane %v2596, 2
      %v2599 = vshll.u32 %v2293, 16
      %v2601 = vrot.slane %v2599, 3
      %v2602 = vor.u32 %v2598, %v2601
      %v2603 = vsel %vm2568, %v2593, %v2602
      %v2605 = vshrl.u32 %v2294, 16
      %v2607 = vrot.slane %v2605, 2
      %v2608 = vshll.u32 %v2294, 16
      %v2610 = vrot.slane %v2608, 3
      %v2611 = vor.u32 %v2607, %v2610
      %v2612 = vsel %vm2568, %v2602, %v2611
      %v2614 = vshrl.u32 %v2295, 16
      %v2616 = vrot.slane %v2614, 2
      %v2617 = vshll.u32 %v2295, 16
      %v2619 = vrot.slane %v2617, 3
      %v2620 = vor.u32 %v2616, %v2619
      %v2621 = vsel %vm2568, %v2611, %v2620
      %v2623 = vshrl.u32 %v2296, 16
      %v2625 = vrot.slane %v2623, 2
      %v2626 = vshll.u32 %v2296, 16
      %v2628 = vrot.slane %v2626, 3
      %v2629 = vor.u32 %v2625, %v2628
      %v2630 = vsel %vm2568, %v2620, %v2629
      %v2632 = vshrl.u32 %v2297, 16
      %v2634 = vrot.slane %v2632, 2
      %v2635 = vshll.u32 %v2297, 16
      %v2637 = vrot.slane %v2635, 3
      %v2638 = vor.u32 %v2634, %v2637
      %v2639 = vsel %vm2568, %v2629, %v2638
      %v2641 = vshrl.u32 %v2298, 16
      %v2643 = vrot.slane %v2641, 2
      %v2644 = vshll.u32 %v2298, 16
      %v2646 = vrot.slane %v2644, 3
      %v2647 = vor.u32 %v2643, %v2646
      %v2648 = vsel %vm2568, %v2638, %v2647
      %v2650 = vshrl.u32 %v2299, 16
      %v2652 = vrot.slane %v2650, 2
      %v2653 = vshll.u32 %v2299, 16
      %v2655 = vrot.slane %v2653, 3
      %v2656 = vor.u32 %v2652, %v2655
      %v2657 = vsel %vm2568, %v2647, %v2656
      %v2659 = vshrl.u32 %v2300, 16
      %v2661 = vrot.slane %v2659, 2
      %v2662 = vshll.u32 %v2300, 16
      %v2664 = vrot.slane %v2662, 3
      %v2665 = vor.u32 %v2661, %v2664
      %v2666 = vsel %vm2568, %v2656, %v2665
      %v2668 = vshrl.u32 %v2301, 16
      %v2670 = vrot.slane %v2668, 2
      %v2671 = vshll.u32 %v2301, 16
      %v2673 = vrot.slane %v2671, 3
      %v2674 = vor.u32 %v2670, %v2673
      %v2675 = vsel %vm2568, %v2665, %v2674
      %v2677 = vshrl.u32 %v2302, 16
      %v2679 = vrot.slane %v2677, 2
      %v2680 = vshll.u32 %v2302, 16
      %v2682 = vrot.slane %v2680, 3
      %v2683 = vor.u32 %v2679, %v2682
      %v2684 = vsel %vm2568, %v2674, %v2683
      %v2686 = vshrl.u32 %v2303, 16
      %v2688 = vrot.slane %v2686, 2
      %v2689 = vshll.u32 %v2303, 16
      %v2691 = vrot.slane %v2689, 3
      %v2692 = vor.u32 %v2688, %v2691
      %v2693 = vsel %vm2568, %v2683, %v2692
      %v2695 = vshrl.u32 %v2304, 16
      %v2697 = vrot.slane %v2695, 2
      %v2698 = vshll.u32 %v2304, 16
      %v2700 = vrot.slane %v2698, 3
      %v2701 = vor.u32 %v2697, %v2700
      %v2702 = vsel %vm2568, %v2692, %v2701
      %v2704 = vshrl.u32 %v2305, 16
      %v2706 = vrot.slane %v2704, 2
      %v2707 = vshll.u32 %v2305, 16
      %v2709 = vrot.slane %v2707, 3
      %v2710 = vor.u32 %v2706, %v2709
      %v2711 = vsel %vm2568, %v2701, %v2710
      %v2713 = vshrl.u32 %v2306, 16
      %v2715 = vrot.slane %v2713, 2
      %v2716 = vshll.u32 %v2306, 16
      %v2718 = vrot.slane %v2716, 3
      %v2719 = vor.u32 %v2715, %v2718
      %v2720 = vsel %vm2568, %v2710, %v2719
      %v2722 = vshrl.u32 %v2307, 16
      %v2724 = vrot.slane %v2722, 2
      %v2725 = vshll.u32 %v2307, 16
      %v2727 = vrot.slane %v2725, 3
      %v2728 = vor.u32 %v2724, %v2727
      %v2729 = vsel %vm2568, %v2719, %v2728
      %v2731 = vshrl.u32 %v2567, 16
      %v2733 = vrot.slane %v2731, 2
      %v2734 = vshll.u32 %v2567, 16
      %v2736 = vrot.slane %v2734, 3
      %v2737 = vor.u32 %v2733, %v2736
      %v2738 = vsel %vm2568, %v2728, %v2737
      %v2773 = vunpack.c.l.b16 %v2549
      %v2774 = vunpack.c.l.b16 %v2550
      %v2775 = vunpack.c.l.b16 %v2551
      %v2776 = vunpack.c.l.b16 %v2552
      %v2777 = vunpack.c.l.b16 %v2553
      %v2778 = vunpack.c.l.b16 %v2554
      %v2779 = vunpack.c.l.b16 %v2555
      %v2780 = vunpack.c.l.b16 %v2556
      %v2781 = vunpack.c.l.b16 %v2557
      %v2782 = vunpack.c.l.b16 %v2558
      %v2783 = vunpack.c.l.b16 %v2559
      %v2784 = vunpack.c.l.b16 %v2560
      %v2785 = vunpack.c.l.b16 %v2561
      %v2786 = vunpack.c.l.b16 %v2562
      %v2787 = vunpack.c.l.b16 %v2563
      %v2788 = vunpack.c.l.b16 %v2564
      %v2789 = vpack.c.b16 %v2774, %v2773
      %v2790 = vpack.c.b16 %v2776, %v2775
      %v2791 = vpack.c.b16 %v2778, %v2777
      %v2792 = vpack.c.b16 %v2780, %v2779
      %v2793 = vpack.c.b16 %v2782, %v2781
      %v2794 = vpack.c.b16 %v2784, %v2783
      %v2795 = vpack.c.b16 %v2786, %v2785
      %v2796 = vpack.c.b16 %v2788, %v2787
      %2805 = vmatpush.bf16.msra.mxu0 %v2796
      %2806 = vmatpush.bf16.msra.mxu0 %v2795
      %2807 = vmatpush.bf16.msra.mxu0 %v2794
      %2808 = vmatpush.bf16.msra.mxu0 %v2793
      %2809 = vmatpush.bf16.msra.mxu0 %v2792
      %2810 = vmatpush.bf16.msra.mxu0 %v2791
      %2811 = vmatpush.bf16.msra.mxu0 %v2790
      %2812 = vmatpush.bf16.msra.mxu0 %v2789
      %2813 = vmatmul.bf16.gmra.mxu0 %v2585
      %v2814 = vpop.f32.mrf.mxu0
      %v2815 = vadd.f32 0.0, %v2814
      %v2816 = vpop.f32.mrf.mxu0
      %v2817 = vadd.f32 0.0, %v2816
      %2818 = vmatmul.bf16.gmra.mxu0 %v2594
      %v2819 = vpop.f32.mrf.mxu0
      %v2820 = vadd.f32 0.0, %v2819
      %v2821 = vpop.f32.mrf.mxu0
      %v2822 = vadd.f32 0.0, %v2821
      %2823 = vmatmul.bf16.gmra.mxu0 %v2603
      %v2824 = vpop.f32.mrf.mxu0
      %v2825 = vadd.f32 0.0, %v2824
      %v2826 = vpop.f32.mrf.mxu0
      %v2827 = vadd.f32 0.0, %v2826
      %2828 = vmatmul.bf16.gmra.mxu0 %v2612
      %v2829 = vpop.f32.mrf.mxu0
      %v2830 = vadd.f32 0.0, %v2829
      %v2831 = vpop.f32.mrf.mxu0
      %v2832 = vadd.f32 0.0, %v2831
      %2833 = vmatmul.bf16.gmra.mxu0 %v2621
      %v2834 = vpop.f32.mrf.mxu0
      %v2835 = vadd.f32 0.0, %v2834
      %v2836 = vpop.f32.mrf.mxu0
      %v2837 = vadd.f32 0.0, %v2836
      %2838 = vmatmul.bf16.gmra.mxu0 %v2630
      %v2839 = vpop.f32.mrf.mxu0
      %v2840 = vadd.f32 0.0, %v2839
      %v2841 = vpop.f32.mrf.mxu0
      %v2842 = vadd.f32 0.0, %v2841
      %2843 = vmatmul.bf16.gmra.mxu0 %v2639
      %v2844 = vpop.f32.mrf.mxu0
      %v2845 = vadd.f32 0.0, %v2844
      %v2846 = vpop.f32.mrf.mxu0
      %v2847 = vadd.f32 0.0, %v2846
      %2848 = vmatmul.bf16.gmra.mxu0 %v2648
      %v2849 = vpop.f32.mrf.mxu0
      %v2850 = vadd.f32 0.0, %v2849
      %v2851 = vpop.f32.mrf.mxu0
      %v2852 = vadd.f32 0.0, %v2851
      %2853 = vmatmul.bf16.gmra.mxu0 %v2657
      %v2854 = vpop.f32.mrf.mxu0
      %v2855 = vadd.f32 0.0, %v2854
      %v2856 = vpop.f32.mrf.mxu0
      %v2857 = vadd.f32 0.0, %v2856
      %2858 = vmatmul.bf16.gmra.mxu0 %v2666
      %v2859 = vpop.f32.mrf.mxu0
      %v2860 = vadd.f32 0.0, %v2859
      %v2861 = vpop.f32.mrf.mxu0
      %v2862 = vadd.f32 0.0, %v2861
      %2863 = vmatmul.bf16.gmra.mxu0 %v2675
      %v2864 = vpop.f32.mrf.mxu0
      %v2865 = vadd.f32 0.0, %v2864
      %v2866 = vpop.f32.mrf.mxu0
      %v2867 = vadd.f32 0.0, %v2866
      %2868 = vmatmul.bf16.gmra.mxu0 %v2684
      %v2869 = vpop.f32.mrf.mxu0
      %v2870 = vadd.f32 0.0, %v2869
      %v2871 = vpop.f32.mrf.mxu0
      %v2872 = vadd.f32 0.0, %v2871
      %2873 = vmatmul.bf16.gmra.mxu0 %v2693
      %v2874 = vpop.f32.mrf.mxu0
      %v2875 = vadd.f32 0.0, %v2874
      %v2876 = vpop.f32.mrf.mxu0
      %v2877 = vadd.f32 0.0, %v2876
      %2878 = vmatmul.bf16.gmra.mxu0 %v2702
      %v2879 = vpop.f32.mrf.mxu0
      %v2880 = vadd.f32 0.0, %v2879
      %v2881 = vpop.f32.mrf.mxu0
      %v2882 = vadd.f32 0.0, %v2881
      %2883 = vmatmul.bf16.gmra.mxu0 %v2711
      %v2884 = vpop.f32.mrf.mxu0
      %v2885 = vadd.f32 0.0, %v2884
      %v2886 = vpop.f32.mrf.mxu0
      %v2887 = vadd.f32 0.0, %v2886
      %2888 = vmatmul.bf16.gmra.mxu0 %v2720
      %v2889 = vpop.f32.mrf.mxu0
      %v2890 = vadd.f32 0.0, %v2889
      %v2891 = vpop.f32.mrf.mxu0
      %v2892 = vadd.f32 0.0, %v2891
      %2893 = vmatmul.bf16.gmra.mxu0 %v2729
      %v2894 = vpop.f32.mrf.mxu0
      %v2895 = vadd.f32 0.0, %v2894
      %v2896 = vpop.f32.mrf.mxu0
      %v2897 = vadd.f32 0.0, %v2896
      %2898 = vmatmul.bf16.gmra.mxu0 %v2738
      %v2899 = vpop.f32.mrf.mxu0
      %v2900 = vadd.f32 0.0, %v2899
      %v2901 = vpop.f32.mrf.mxu0
      %v2902 = vadd.f32 0.0, %v2901
      %2903 = vdwg.mxu0
      %v2904 = vadd.f32 %v2511, %v2815
      %v2905 = vadd.f32 %v2512, %v2817
      %v2906 = vadd.f32 %v2513, %v2820
      %v2907 = vadd.f32 %v2514, %v2822
      %v2908 = vadd.f32 %v2515, %v2825
      %v2909 = vadd.f32 %v2516, %v2827
      %v2910 = vadd.f32 %v2517, %v2830
      %v2911 = vadd.f32 %v2518, %v2832
      %v2912 = vadd.f32 %v2519, %v2835
      %v2913 = vadd.f32 %v2520, %v2837
      %v2914 = vadd.f32 %v2521, %v2840
      %v2915 = vadd.f32 %v2522, %v2842
      %v2916 = vadd.f32 %v2523, %v2845
      %v2917 = vadd.f32 %v2524, %v2847
      %v2918 = vadd.f32 %v2525, %v2850
      %v2919 = vadd.f32 %v2526, %v2852
      %v2920 = vadd.f32 %v2527, %v2855
      %v2921 = vadd.f32 %v2528, %v2857
      %v2922 = vadd.f32 %v2529, %v2860
      %v2923 = vadd.f32 %v2530, %v2862
      %v2924 = vadd.f32 %v2531, %v2865
      %v2925 = vadd.f32 %v2532, %v2867
      %v2926 = vadd.f32 %v2533, %v2870
      %v2927 = vadd.f32 %v2534, %v2872
      %v2928 = vadd.f32 %v2535, %v2875
      %v2929 = vadd.f32 %v2536, %v2877
      %v2930 = vadd.f32 %v2537, %v2880
      %v2931 = vadd.f32 %v2538, %v2882
      %v2932 = vadd.f32 %v2539, %v2885
      %v2933 = vadd.f32 %v2540, %v2887
      %v2934 = vadd.f32 %v2541, %v2890
      %v2935 = vadd.f32 %v2542, %v2892
      %v2936 = vadd.f32 %v2543, %v2895
      %v2937 = vadd.f32 %v2544, %v2897
      %v2938 = vadd.f32 %v2545, %v2900
      %v2939 = vadd.f32 %v2546, %v2902
      %v2940 = vld [vmem:[%s206 + $0x10] sm:$0x8]
      %s2941 = scalar_lea.vmem %s210, 512
      %v2942 = vld [vmem:[%s2941] sm:$0xf]
      %v2943 = vld [vmem:[%s2941 + $0x4] sm:$0xf]
      %v2944 = vld [vmem:[%s2941 + $0x8] sm:$0xf]
      %v2945 = vld [vmem:[%s2941 + $0xc] sm:$0xf]
      %v2946 = vld [vmem:[%s2941 + $0x10] sm:$0xf]
      %v2947 = vld [vmem:[%s2941 + $0x14] sm:$0xf]
      %v2948 = vld [vmem:[%s2941 + $0x18] sm:$0xf]
      %v2949 = vld [vmem:[%s2941 + $0x1c] sm:$0xf]
      %v2950 = vld [vmem:[%s2941 + $0x20] sm:$0xf]
      %v2951 = vld [vmem:[%s2941 + $0x24] sm:$0xf]
      %v2952 = vld [vmem:[%s2941 + $0x28] sm:$0xf]
      %v2953 = vld [vmem:[%s2941 + $0x2c] sm:$0xf]
      %v2954 = vld [vmem:[%s2941 + $0x30] sm:$0xf]
      %v2955 = vld [vmem:[%s2941 + $0x34] sm:$0xf]
      %v2956 = vld [vmem:[%s2941 + $0x38] sm:$0xf]
      %v2957 = vld [vmem:[%s2941 + $0x3c] sm:$0xf]
      %v2959 = vunpack.c.l.b16 %v2940
      %v2960 = vpack.c.b16 %v2254, %v2959
      %vm2961 = vcmask 1044480
      %v2962 = vrot.slane %v2960, 3
      %v2963 = vrot.slane %v2291, 3
      %v2964 = vsel %vm2961, %v2962, %v2963
      %v2965 = vrot.slane %v2292, 3
      %v2966 = vsel %vm2961, %v2963, %v2965
      %v2967 = vrot.slane %v2293, 3
      %v2968 = vsel %vm2961, %v2965, %v2967
      %v2969 = vrot.slane %v2294, 3
      %v2970 = vsel %vm2961, %v2967, %v2969
      %v2971 = vrot.slane %v2295, 3
      %v2972 = vsel %vm2961, %v2969, %v2971
      %v2973 = vrot.slane %v2296, 3
      %v2974 = vsel %vm2961, %v2971, %v2973
      %v2975 = vrot.slane %v2297, 3
      %v2976 = vsel %vm2961, %v2973, %v2975
      %v2977 = vrot.slane %v2298, 3
      %v2978 = vsel %vm2961, %v2975, %v2977
      %v2979 = vrot.slane %v2299, 3
      %v2980 = vsel %vm2961, %v2977, %v2979
      %v2981 = vrot.slane %v2300, 3
      %v2982 = vsel %vm2961, %v2979, %v2981
      %v2983 = vrot.slane %v2301, 3
      %v2984 = vsel %vm2961, %v2981, %v2983
      %v2985 = vrot.slane %v2302, 3
      %v2986 = vsel %vm2961, %v2983, %v2985
      %v2987 = vrot.slane %v2303, 3
      %v2988 = vsel %vm2961, %v2985, %v2987
      %v2989 = vrot.slane %v2304, 3
      %v2990 = vsel %vm2961, %v2987, %v2989
      %v2991 = vrot.slane %v2305, 3
      %v2992 = vsel %vm2961, %v2989, %v2991
      %v2993 = vrot.slane %v2306, 3
      %v2994 = vsel %vm2961, %v2991, %v2993
      %v2995 = vrot.slane %v2307, 3
      %v2996 = vsel %vm2961, %v2993, %v2995
      %v2997 = vrot.slane %v2567, 3
      %v2998 = vsel %vm2961, %v2995, %v2997
      %v3033 = vunpack.c.l.b16 %v2942
      %v3034 = vunpack.c.l.b16 %v2943
      %v3035 = vunpack.c.l.b16 %v2944
      %v3036 = vunpack.c.l.b16 %v2945
      %v3037 = vunpack.c.l.b16 %v2946
      %v3038 = vunpack.c.l.b16 %v2947
      %v3039 = vunpack.c.l.b16 %v2948
      %v3040 = vunpack.c.l.b16 %v2949
      %v3041 = vunpack.c.l.b16 %v2950
      %v3042 = vunpack.c.l.b16 %v2951
      %v3043 = vunpack.c.l.b16 %v2952
      %v3044 = vunpack.c.l.b16 %v2953
      %v3045 = vunpack.c.l.b16 %v2954
      %v3046 = vunpack.c.l.b16 %v2955
      %v3047 = vunpack.c.l.b16 %v2956
      %v3048 = vunpack.c.l.b16 %v2957
      %v3049 = vpack.c.b16 %v3034, %v3033
      %v3050 = vpack.c.b16 %v3036, %v3035
      %v3051 = vpack.c.b16 %v3038, %v3037
      %v3052 = vpack.c.b16 %v3040, %v3039
      %v3053 = vpack.c.b16 %v3042, %v3041
      %v3054 = vpack.c.b16 %v3044, %v3043
      %v3055 = vpack.c.b16 %v3046, %v3045
      %v3056 = vpack.c.b16 %v3048, %v3047
      %3065 = vmatpush.bf16.msra.mxu0 %v3056
      %3066 = vmatpush.bf16.msra.mxu0 %v3055
      %3067 = vmatpush.bf16.msra.mxu0 %v3054
      %3068 = vmatpush.bf16.msra.mxu0 %v3053
      %3069 = vmatpush.bf16.msra.mxu0 %v3052
      %3070 = vmatpush.bf16.msra.mxu0 %v3051
      %3071 = vmatpush.bf16.msra.mxu0 %v3050
      %3072 = vmatpush.bf16.msra.mxu0 %v3049
      %3073 = vmatmul.bf16.gmra.mxu0 %v2964
      %v3074 = vpop.f32.mrf.mxu0
      %v3075 = vadd.f32 0.0, %v3074
      %v3076 = vpop.f32.mrf.mxu0
      %v3077 = vadd.f32 0.0, %v3076
      %3078 = vmatmul.bf16.gmra.mxu0 %v2966
      %v3079 = vpop.f32.mrf.mxu0
      %v3080 = vadd.f32 0.0, %v3079
      %v3081 = vpop.f32.mrf.mxu0
      %v3082 = vadd.f32 0.0, %v3081
      %3083 = vmatmul.bf16.gmra.mxu0 %v2968
      %v3084 = vpop.f32.mrf.mxu0
      %v3085 = vadd.f32 0.0, %v3084
      %v3086 = vpop.f32.mrf.mxu0
      %v3087 = vadd.f32 0.0, %v3086
      %3088 = vmatmul.bf16.gmra.mxu0 %v2970
      %v3089 = vpop.f32.mrf.mxu0
      %v3090 = vadd.f32 0.0, %v3089
      %v3091 = vpop.f32.mrf.mxu0
      %v3092 = vadd.f32 0.0, %v3091
      %3093 = vmatmul.bf16.gmra.mxu0 %v2972
      %v3094 = vpop.f32.mrf.mxu0
      %v3095 = vadd.f32 0.0, %v3094
      %v3096 = vpop.f32.mrf.mxu0
      %v3097 = vadd.f32 0.0, %v3096
      %3098 = vmatmul.bf16.gmra.mxu0 %v2974
      %v3099 = vpop.f32.mrf.mxu0
      %v3100 = vadd.f32 0.0, %v3099
      %v3101 = vpop.f32.mrf.mxu0
      %v3102 = vadd.f32 0.0, %v3101
      %3103 = vmatmul.bf16.gmra.mxu0 %v2976
      %v3104 = vpop.f32.mrf.mxu0
      %v3105 = vadd.f32 0.0, %v3104
      %v3106 = vpop.f32.mrf.mxu0
      %v3107 = vadd.f32 0.0, %v3106
      %3108 = vmatmul.bf16.gmra.mxu0 %v2978
      %v3109 = vpop.f32.mrf.mxu0
      %v3110 = vadd.f32 0.0, %v3109
      %v3111 = vpop.f32.mrf.mxu0
      %v3112 = vadd.f32 0.0, %v3111
      %3113 = vmatmul.bf16.gmra.mxu0 %v2980
      %v3114 = vpop.f32.mrf.mxu0
      %v3115 = vadd.f32 0.0, %v3114
      %v3116 = vpop.f32.mrf.mxu0
      %v3117 = vadd.f32 0.0, %v3116
      %3118 = vmatmul.bf16.gmra.mxu0 %v2982
      %v3119 = vpop.f32.mrf.mxu0
      %v3120 = vadd.f32 0.0, %v3119
      %v3121 = vpop.f32.mrf.mxu0
      %v3122 = vadd.f32 0.0, %v3121
      %3123 = vmatmul.bf16.gmra.mxu0 %v2984
      %v3124 = vpop.f32.mrf.mxu0
      %v3125 = vadd.f32 0.0, %v3124
      %v3126 = vpop.f32.mrf.mxu0
      %v3127 = vadd.f32 0.0, %v3126
      %3128 = vmatmul.bf16.gmra.mxu0 %v2986
      %v3129 = vpop.f32.mrf.mxu0
      %v3130 = vadd.f32 0.0, %v3129
      %v3131 = vpop.f32.mrf.mxu0
      %v3132 = vadd.f32 0.0, %v3131
      %3133 = vmatmul.bf16.gmra.mxu0 %v2988
      %v3134 = vpop.f32.mrf.mxu0
      %v3135 = vadd.f32 0.0, %v3134
      %v3136 = vpop.f32.mrf.mxu0
      %v3137 = vadd.f32 0.0, %v3136
      %3138 = vmatmul.bf16.gmra.mxu0 %v2990
      %v3139 = vpop.f32.mrf.mxu0
      %v3140 = vadd.f32 0.0, %v3139
      %v3141 = vpop.f32.mrf.mxu0
      %v3142 = vadd.f32 0.0, %v3141
      %3143 = vmatmul.bf16.gmra.mxu0 %v2992
      %v3144 = vpop.f32.mrf.mxu0
      %v3145 = vadd.f32 0.0, %v3144
      %v3146 = vpop.f32.mrf.mxu0
      %v3147 = vadd.f32 0.0, %v3146
      %3148 = vmatmul.bf16.gmra.mxu0 %v2994
      %v3149 = vpop.f32.mrf.mxu0
      %v3150 = vadd.f32 0.0, %v3149
      %v3151 = vpop.f32.mrf.mxu0
      %v3152 = vadd.f32 0.0, %v3151
      %3153 = vmatmul.bf16.gmra.mxu0 %v2996
      %v3154 = vpop.f32.mrf.mxu0
      %v3155 = vadd.f32 0.0, %v3154
      %v3156 = vpop.f32.mrf.mxu0
      %v3157 = vadd.f32 0.0, %v3156
      %3158 = vmatmul.bf16.gmra.mxu0 %v2998
      %v3159 = vpop.f32.mrf.mxu0
      %v3160 = vadd.f32 0.0, %v3159
      %v3161 = vpop.f32.mrf.mxu0
      %v3162 = vadd.f32 0.0, %v3161
      %3163 = vdwg.mxu0
      %v3164 = vadd.f32 %v2904, %v3075
      %v3165 = vadd.f32 %v2905, %v3077
      %v3166 = vadd.f32 %v2906, %v3080
      %v3167 = vadd.f32 %v2907, %v3082
      %v3168 = vadd.f32 %v2908, %v3085
      %v3169 = vadd.f32 %v2909, %v3087
      %v3170 = vadd.f32 %v2910, %v3090
      %v3171 = vadd.f32 %v2911, %v3092
      %v3172 = vadd.f32 %v2912, %v3095
      %v3173 = vadd.f32 %v2913, %v3097
      %v3174 = vadd.f32 %v2914, %v3100
      %v3175 = vadd.f32 %v2915, %v3102
      %v3176 = vadd.f32 %v2916, %v3105
      %v3177 = vadd.f32 %v2917, %v3107
      %v3178 = vadd.f32 %v2918, %v3110
      %v3179 = vadd.f32 %v2919, %v3112
      %v3180 = vadd.f32 %v2920, %v3115
      %v3181 = vadd.f32 %v2921, %v3117
      %v3182 = vadd.f32 %v2922, %v3120
      %v3183 = vadd.f32 %v2923, %v3122
      %v3184 = vadd.f32 %v2924, %v3125
      %v3185 = vadd.f32 %v2925, %v3127
      %v3186 = vadd.f32 %v2926, %v3130
      %v3187 = vadd.f32 %v2927, %v3132
      %v3188 = vadd.f32 %v2928, %v3135
      %v3189 = vadd.f32 %v2929, %v3137
      %v3190 = vadd.f32 %v2930, %v3140
      %v3191 = vadd.f32 %v2931, %v3142
      %v3192 = vadd.f32 %v2932, %v3145
      %v3193 = vadd.f32 %v2933, %v3147
      %v3194 = vadd.f32 %v2934, %v3150
      %v3195 = vadd.f32 %v2935, %v3152
      %v3196 = vadd.f32 %v2936, %v3155
      %v3197 = vadd.f32 %v2937, %v3157
      %v3198 = vadd.f32 %v2938, %v3160
      %v3199 = vadd.f32 %v2939, %v3162
      %v3200 = vld [vmem:[%s213] sm:$0x1]
      %v3202 = vperm.slane %v3200, 0
      %v3204 = vadd.f32 %v3164, %v3202
      %v3205 = vadd.f32 %v3165, %v3202
      %v3206 = vadd.f32 %v3166, %v3202
      %v3207 = vadd.f32 %v3167, %v3202
      %v3208 = vadd.f32 %v3168, %v3202
      %v3209 = vadd.f32 %v3169, %v3202
      %v3210 = vadd.f32 %v3170, %v3202
      %v3211 = vadd.f32 %v3171, %v3202
      %v3212 = vadd.f32 %v3172, %v3202
      %v3213 = vadd.f32 %v3173, %v3202
      %v3214 = vadd.f32 %v3174, %v3202
      %v3215 = vadd.f32 %v3175, %v3202
      %v3216 = vadd.f32 %v3176, %v3202
      %v3217 = vadd.f32 %v3177, %v3202
      %v3218 = vadd.f32 %v3178, %v3202
      %v3219 = vadd.f32 %v3179, %v3202
      %v3220 = vadd.f32 %v3180, %v3202
      %v3221 = vadd.f32 %v3181, %v3202
      %v3222 = vadd.f32 %v3182, %v3202
      %v3223 = vadd.f32 %v3183, %v3202
      %v3224 = vadd.f32 %v3184, %v3202
      %v3225 = vadd.f32 %v3185, %v3202
      %v3226 = vadd.f32 %v3186, %v3202
      %v3227 = vadd.f32 %v3187, %v3202
      %v3228 = vadd.f32 %v3188, %v3202
      %v3229 = vadd.f32 %v3189, %v3202
      %v3230 = vadd.f32 %v3190, %v3202
      %v3231 = vadd.f32 %v3191, %v3202
      %v3232 = vadd.f32 %v3192, %v3202
      %v3233 = vadd.f32 %v3193, %v3202
      %v3234 = vadd.f32 %v3194, %v3202
      %v3235 = vadd.f32 %v3195, %v3202
      %v3236 = vadd.f32 %v3196, %v3202
      %v3237 = vadd.f32 %v3197, %v3202
      %v3238 = vadd.f32 %v3198, %v3202
      %v3239 = vadd.f32 %v3199, %v3202
      %v3240 = vmax.f32 %v3204, 0.0
      %v3241 = vmax.f32 %v3205, 0.0
      %v3242 = vmax.f32 %v3206, 0.0
      %v3243 = vmax.f32 %v3207, 0.0
      %v3244 = vmax.f32 %v3208, 0.0
      %v3245 = vmax.f32 %v3209, 0.0
      %v3246 = vmax.f32 %v3210, 0.0
      %v3247 = vmax.f32 %v3211, 0.0
      %v3248 = vmax.f32 %v3212, 0.0
      %v3249 = vmax.f32 %v3213, 0.0
      %v3250 = vmax.f32 %v3214, 0.0
      %v3251 = vmax.f32 %v3215, 0.0
      %v3252 = vmax.f32 %v3216, 0.0
      %v3253 = vmax.f32 %v3217, 0.0
      %v3254 = vmax.f32 %v3218, 0.0
      %v3255 = vmax.f32 %v3219, 0.0
      %v3256 = vmax.f32 %v3220, 0.0
      %v3257 = vmax.f32 %v3221, 0.0
      %v3258 = vmax.f32 %v3222, 0.0
      %v3259 = vmax.f32 %v3223, 0.0
      %v3260 = vmax.f32 %v3224, 0.0
      %v3261 = vmax.f32 %v3225, 0.0
      %v3262 = vmax.f32 %v3226, 0.0
      %v3263 = vmax.f32 %v3227, 0.0
      %v3264 = vmax.f32 %v3228, 0.0
      %v3265 = vmax.f32 %v3229, 0.0
      %v3266 = vmax.f32 %v3230, 0.0
      %v3267 = vmax.f32 %v3231, 0.0
      %v3268 = vmax.f32 %v3232, 0.0
      %v3269 = vmax.f32 %v3233, 0.0
      %v3270 = vmax.f32 %v3234, 0.0
      %v3271 = vmax.f32 %v3235, 0.0
      %v3272 = vmax.f32 %v3236, 0.0
      %v3273 = vmax.f32 %v3237, 0.0
      %v3274 = vmax.f32 %v3238, 0.0
      %v3275 = vmax.f32 %v3239, 0.0
      %v3276 = vpack.c.bf16 %v3240, %v3240
      %v3277 = vpack.c.bf16 %v3241, %v3241
      %v3278 = vpack.c.bf16 %v3242, %v3242
      %v3279 = vpack.c.bf16 %v3243, %v3243
      %v3280 = vpack.c.bf16 %v3244, %v3244
      %v3281 = vpack.c.bf16 %v3245, %v3245
      %v3282 = vpack.c.bf16 %v3246, %v3246
      %v3283 = vpack.c.bf16 %v3247, %v3247
      %v3284 = vpack.c.bf16 %v3248, %v3248
      %v3285 = vpack.c.bf16 %v3249, %v3249
      %v3286 = vpack.c.bf16 %v3250, %v3250
      %v3287 = vpack.c.bf16 %v3251, %v3251
      %v3288 = vpack.c.bf16 %v3252, %v3252
      %v3289 = vpack.c.bf16 %v3253, %v3253
      %v3290 = vpack.c.bf16 %v3254, %v3254
      %v3291 = vpack.c.bf16 %v3255, %v3255
      %v3292 = vpack.c.bf16 %v3256, %v3256
      %v3293 = vpack.c.bf16 %v3257, %v3257
      %v3294 = vpack.c.bf16 %v3258, %v3258
      %v3295 = vpack.c.bf16 %v3259, %v3259
      %v3296 = vpack.c.bf16 %v3260, %v3260
      %v3297 = vpack.c.bf16 %v3261, %v3261
      %v3298 = vpack.c.bf16 %v3262, %v3262
      %v3299 = vpack.c.bf16 %v3263, %v3263
      %v3300 = vpack.c.bf16 %v3264, %v3264
      %v3301 = vpack.c.bf16 %v3265, %v3265
      %v3302 = vpack.c.bf16 %v3266, %v3266
      %v3303 = vpack.c.bf16 %v3267, %v3267
      %v3304 = vpack.c.bf16 %v3268, %v3268
      %v3305 = vpack.c.bf16 %v3269, %v3269
      %v3306 = vpack.c.bf16 %v3270, %v3270
      %v3307 = vpack.c.bf16 %v3271, %v3271
      %v3308 = vpack.c.bf16 %v3272, %v3272
      %v3309 = vpack.c.bf16 %v3273, %v3273
      %v3310 = vpack.c.bf16 %v3274, %v3274
      %v3311 = vpack.c.bf16 %v3275, %v3275
      %3312 = vst [vmem:[%s221] sm:$0xf] %v3276
      %3313 = vst [vmem:[%s221 + $0x4] sm:$0xf] %v3277
      %3314 = vst [vmem:[%s221 + $0x8] sm:$0xf] %v3278
      %3315 = vst [vmem:[%s221 + $0xc] sm:$0xf] %v3279
      %3316 = vst [vmem:[%s221 + $0x10] sm:$0xf] %v3280
      %3317 = vst [vmem:[%s221 + $0x14] sm:$0xf] %v3281
      %3318 = vst [vmem:[%s221 + $0x18] sm:$0xf] %v3282
      %3319 = vst [vmem:[%s221 + $0x1c] sm:$0xf] %v3283
      %3320 = vst [vmem:[%s221 + $0x20] sm:$0xf] %v3284
      %3321 = vst [vmem:[%s221 + $0x24] sm:$0xf] %v3285
      %3322 = vst [vmem:[%s221 + $0x28] sm:$0xf] %v3286
      %3323 = vst [vmem:[%s221 + $0x2c] sm:$0xf] %v3287
      %3324 = vst [vmem:[%s221 + $0x30] sm:$0xf] %v3288
      %3325 = vst [vmem:[%s221 + $0x34] sm:$0xf] %v3289
      %3326 = vst [vmem:[%s221 + $0x38] sm:$0xf] %v3290
      %3327 = vst [vmem:[%s221 + $0x3c] sm:$0xf] %v3291
      %3328 = vst [vmem:[%s221 + $0x40] sm:$0xf] %v3292
      %3329 = vst [vmem:[%s221 + $0x44] sm:$0xf] %v3293
      %3330 = vst [vmem:[%s221 + $0x48] sm:$0xf] %v3294
      %3331 = vst [vmem:[%s221 + $0x4c] sm:$0xf] %v3295
      %3332 = vst [vmem:[%s221 + $0x50] sm:$0xf] %v3296
      %3333 = vst [vmem:[%s221 + $0x54] sm:$0xf] %v3297
      %3334 = vst [vmem:[%s221 + $0x58] sm:$0xf] %v3298
      %3335 = vst [vmem:[%s221 + $0x5c] sm:$0xf] %v3299
      %3336 = vst [vmem:[%s221 + $0x60] sm:$0xf] %v3300
      %3337 = vst [vmem:[%s221 + $0x64] sm:$0xf] %v3301
      %3338 = vst [vmem:[%s221 + $0x68] sm:$0xf] %v3302
      %3339 = vst [vmem:[%s221 + $0x6c] sm:$0xf] %v3303
      %3340 = vst [vmem:[%s221 + $0x70] sm:$0xf] %v3304
      %3341 = vst [vmem:[%s221 + $0x74] sm:$0xf] %v3305
      %3342 = vst [vmem:[%s221 + $0x78] sm:$0xf] %v3306
      %3343 = vst [vmem:[%s221 + $0x7c] sm:$0xf] %v3307
      %3344 = vst [vmem:[%s221 + $0x80] sm:$0xf] %v3308
      %3345 = vst [vmem:[%s221 + $0x84] sm:$0xf] %v3309
      %3346 = vst [vmem:[%s221 + $0x88] sm:$0xf] %v3310
      %3347 = vst [vmem:[%s221 + $0x8c] sm:$0xf] %v3311
      %p3348 = scmp.lt.s32.totalorder %s18, 1
      %s3349 = scalar_select %p3348, %s18, 1
      %p3350 = scmp.lt.s32.totalorder %s19, 0
      %s3351 = scalar_select %p3350, %s19, 0
      %s3352 = smul.addr %s3349, 36
      %s3353 = sadd.s32 %s3351, %s3352
      %s3354 = smul.addr %s3353, 4
      %s3355 = scalar_lea.vmem %s3, %s3354
      // Predicated region
      $region33: #{encoder_cnn_forward.3} parent=31 // pred_check
        %p3356 = pneg %p124
      $region34: #{encoder_cnn_forward.3} parent=31 // pred_check_branch
        %3358 = sbr.rel (%p3356) target = $region36
      $region35: #{encoder_cnn_forward.3} parent=31 // pred_region
        _
      $region36: #{encoder_cnn_forward.3} parent=31 // pred_fallthru
        _
    $region32: #{encoder_cnn_forward.3} parent=5 // pred_fallthru
      _
    %p3359 = scmp.le.s32.totalorder 2, %s9
    // Predicated region
    $region37: #{encoder_cnn_forward.3} parent=5 // pred_check
      %p3360 = pneg %p3359
    $region38: #{encoder_cnn_forward.3} parent=5 // pred_check_branch
      %3362 = sbr.rel (%p3360) target = $region40
    $region39: #{encoder_cnn_forward.3} parent=5 // pred_region
      %s3363 = ssub.s32 %s9, 2
      // Predicated region
      $region41: #{encoder_cnn_forward.3} parent=39 // pred_check
        %p3364 = pneg %p130
      $region42: #{encoder_cnn_forward.3} parent=39 // pred_check_branch
        %3366 = sbr.rel (%p3364) target = $region44
      $region43: #{encoder_cnn_forward.3} parent=39 // pred_region
        %p3367 = scmp.lt.s32.totalorder %s20, 1
        %s3368 = scalar_select %p3367, %s20, 1
        %p3369 = scmp.lt.s32.totalorder %s21, 0
        %s3370 = scalar_select %p3369, %s21, 0
        %s3371 = smul.addr %s3368, 36
        %s3372 = sadd.s32 %s3370, %s3371
        %s3373 = smul.addr %s3372, 4
        %s3374 = scalar_lea.vmem %s3, %s3373
      $region44: #{encoder_cnn_forward.3} parent=39 // pred_fallthru
        _
    $region40: #{encoder_cnn_forward.3} parent=5 // pred_fallthru
      _
  $region6: #{encoder_cnn_forward.3} parent=0 // loop_footer
    %s13 = sadd.s32 1, %s9
  $region7: #{encoder_cnn_forward.3} parent=0 // loop_footer_branch
    %8 = sbr.rel target = $region3
  $region8: #{encoder_cnn_forward.3} parent=0 // loop_exit
    _

// kernel: encoder_cnn_forward.4
$region0: #{encoder_cnn_forward.4}
  #allocation0 [shape = 'u32[]', space=smem, size = 0x4, offset = 0x4, fixed_abs, tag = 'smem constant byte address 0x4 - core index']
  #allocation1 [shape = 'u32[72,128]{1,0:T(1,128)}', space=vmem, size = 0x9000, scoped, tag = 'internal scratch']
  %s0 = inlined_call_operand.vmem [shape: bf16[2,342,128], index: 0, kind: input, shape index: {}]
  %s1 = inlined_call_operand.vmem [shape: bf16[3,3,128,128], index: 1, kind: input, shape index: {}]
  %s2 = inlined_call_operand.vmem [shape: f32[1,128], index: 2, kind: input, shape index: {}]
  %s3 = inlined_call_operand.vmem [shape: f32[288,1], index: 3, kind: input, shape index: {}]
  %s4 = inlined_call_operand.vmem [shape: f32[2,1,128], index: 4, kind: output, shape index: {}]
  %s5 = sld [smem:[#allocation0]]
  $region49: #{encoder_cnn_forward.4} parent=0
    _
  %s7 = ssub.s32 1, %s5
  %s8 = scalar_select 0, %s7, %s5
  loop: start=0, step=1, limit=4
  $region2: #{encoder_cnn_forward.4} parent=0 // loop_pre_header
    _
  $region3: #{encoder_cnn_forward.4} parent=0 // loop_header
    %s10 = sphi 0, %s14
    %p11 = scmp.ge.s32.totalorder %s10, 4
    %s17 = sphi 0, %s29
    %s18 = sphi 0, %s25
    %s19 = sphi 0, %s17
    %s20 = sphi 0, %s18
    %s21 = sphi 0, %s19
    %s22 = sphi 0, %s20
    %s32 = sphi 0, %s34
    %s35 = sphi 0, %s32
    %s36 = sphi 0, %s35
    %s52 = sphi 0, %s36
    %s58 = sphi 0, %s60
    %s61 = sphi 0, %s58
    %s62 = sphi 0, %s61
    %s78 = sphi 0, %s62
    %s84 = sphi 0, %s86
    %s87 = sphi 0, %s84
    %s88 = sphi 0, %s87
    %s104 = sphi 0, %s88
    %s108 = sphi 0, %s108
    %s110 = sphi 0, %s108
    %s111 = sphi 0, %s110
    %s125 = sphi 0, %s111
    %s133 = sphi 0, %s135
    %s136 = sphi 0, %s133
    %s137 = sphi 0, %s136
    %s153 = sphi 0, %s137
  $region4: #{encoder_cnn_forward.4} parent=0 // loop_header_branch
    %13 = sbr.rel (%p11) target = $region8
  $region5: #{encoder_cnn_forward.4} parent=0 // loop_body
    %s15 = ssub.s32 %s10, 1
    %s16 = ssub.s32 %s10, 2
    %s23 = sadd.s32 1, %s18
    %p24 = scmp.ge.s32.totalorder %s23, 1
    %s25 = scalar_select %p24, 0, %s23
    %s26 = sadd.s32 1, %s17
    %s27 = scalar_select %p24, %s26, %s17
    %p28 = scmp.ge.s32.totalorder %s27, 2
    %s29 = scalar_select %p28, 0, %s27
    %s30 = ssub.s32 %s17, %s29
    %p31 = scmp.eq.s32.totalorder %s30, 0
    %s33 = sadd.s32 %s32, 1
    %s34 = scalar_select %p31, %s32, %s33
    %p37 = pneg %p31
    %p38 = scmp.eq.s32.totalorder %s10, 1
    %p39 = por %p37, %p38
    %p40 = scmp.ne.s32.totalorder %s32, %s35
    %p41 = scmp.eq.s32.totalorder %s10, 0
    %p42 = por %p40, %p41
    %p43 = scmp.ne.s32.totalorder %s32, %s35
    %p44 = scmp.eq.s32.totalorder %s15, 1
    %p45 = por %p43, %p44
    %p46 = scmp.ne.s32.totalorder %s35, %s36
    %p47 = scmp.eq.s32.totalorder %s15, 0
    %p48 = por %p46, %p47
    %p49 = scmp.ne.s32.totalorder %s35, %s36
    %p50 = scmp.eq.s32.totalorder %s16, 1
    %p51 = por %p49, %p50
    %p53 = scmp.ne.s32.totalorder %s36, %s52
    %p54 = scmp.eq.s32.totalorder %s16, 0
    %p55 = por %p53, %p54
    %s56 = ssub.s32 %s18, %s25
    %p57 = scmp.eq.s32.totalorder %s56, 0
    %s59 = sadd.s32 %s58, 1
    %s60 = scalar_select %p57, %s58, %s59
    %p63 = pneg %p57
    %p64 = scmp.eq.s32.totalorder %s10, 1
    %p65 = por %p63, %p64
    %p66 = scmp.ne.s32.totalorder %s58, %s61
    %p67 = scmp.eq.s32.totalorder %s10, 0
    %p68 = por %p66, %p67
    %p69 = scmp.ne.s32.totalorder %s58, %s61
    %p70 = scmp.eq.s32.totalorder %s15, 1
    %p71 = por %p69, %p70
    %p72 = scmp.ne.s32.totalorder %s61, %s62
    %p73 = scmp.eq.s32.totalorder %s15, 0
    %p74 = por %p72, %p73
    %p75 = scmp.ne.s32.totalorder %s61, %s62
    %p76 = scmp.eq.s32.totalorder %s16, 1
    %p77 = por %p75, %p76
    %p79 = scmp.ne.s32.totalorder %s62, %s78
    %p80 = scmp.eq.s32.totalorder %s16, 0
    %p81 = por %p79, %p80
    %s82 = ssub.s32 %s18, %s25
    %p83 = scmp.eq.s32.totalorder %s82, 0
    %s85 = sadd.s32 %s84, 1
    %s86 = scalar_select %p83, %s84, %s85
    %p89 = pneg %p83
    %p90 = scmp.eq.s32.totalorder %s10, 1
    %p91 = por %p89, %p90
    %p92 = scmp.ne.s32.totalorder %s84, %s87
    %p93 = scmp.eq.s32.totalorder %s10, 0
    %p94 = por %p92, %p93
    %p95 = scmp.ne.s32.totalorder %s84, %s87
    %p96 = scmp.eq.s32.totalorder %s15, 1
    %p97 = por %p95, %p96
    %p98 = scmp.ne.s32.totalorder %s87, %s88
    %p99 = scmp.eq.s32.totalorder %s15, 0
    %p100 = por %p98, %p99
    %p101 = scmp.ne.s32.totalorder %s87, %s88
    %p102 = scmp.eq.s32.totalorder %s16, 1
    %p103 = por %p101, %p102
    %p105 = scmp.ne.s32.totalorder %s88, %s104
    %p106 = scmp.eq.s32.totalorder %s16, 0
    %p107 = por %p105, %p106
    %s109 = sadd.s32 %s108, 1
    %p112 = scmp.eq.s32.totalorder %s10, 1
    %p113 = scmp.ne.s32.totalorder %s108, %s110
    %p114 = scmp.eq.s32.totalorder %s10, 0
    %p115 = por %p113, %p114
    %p116 = scmp.ne.s32.totalorder %s108, %s110
    %p117 = scmp.eq.s32.totalorder %s15, 1
    %p118 = por %p116, %p117
    %p119 = scmp.ne.s32.totalorder %s110, %s111
    %p120 = scmp.eq.s32.totalorder %s15, 0
    %p121 = por %p119, %p120
    %p122 = scmp.ne.s32.totalorder %s110, %s111
    %p123 = scmp.eq.s32.totalorder %s16, 1
    %p124 = por %p122, %p123
    %p126 = scmp.ne.s32.totalorder %s111, %s125
    %p127 = scmp.eq.s32.totalorder %s16, 0
    %p128 = por %p126, %p127
    %s129 = ssub.s32 %s17, %s29
    %s130 = ssub.s32 %s18, %s25
    %s131 = sor.u32 %s129, %s130
    %p132 = scmp.eq.s32.totalorder %s131, 0
    %s134 = sadd.s32 %s133, 1
    %s135 = scalar_select %p132, %s133, %s134
    %p138 = pneg %p132
    %p139 = scmp.eq.s32.totalorder %s10, 1
    %p140 = por %p138, %p139
    %p141 = scmp.ne.s32.totalorder %s133, %s136
    %p142 = scmp.eq.s32.totalorder %s10, 0
    %p143 = por %p141, %p142
    %p144 = scmp.ne.s32.totalorder %s133, %s136
    %p145 = scmp.eq.s32.totalorder %s15, 1
    %p146 = por %p144, %p145
    %p147 = scmp.ne.s32.totalorder %s136, %s137
    %p148 = scmp.eq.s32.totalorder %s15, 0
    %p149 = por %p147, %p148
    %p150 = scmp.ne.s32.totalorder %s136, %s137
    %p151 = scmp.eq.s32.totalorder %s16, 1
    %p152 = por %p150, %p151
    %p154 = scmp.ne.s32.totalorder %s137, %s153
    %p155 = scmp.eq.s32.totalorder %s16, 0
    %p156 = por %p154, %p155
    %p157 = scmp.le.s32.totalorder 1, %s10
    %p158 = scmp.lt.s32.totalorder %s10, 3
    %p159 = pnand %p157, %p158
    %p160 = pneg %p159
    // Predicated region
    $region9: #{encoder_cnn_forward.4} parent=5 // pred_check
      _
    $region10: #{encoder_cnn_forward.4} parent=5 // pred_check_branch
      %162 = sbr.rel (%p159) target = $region12
    $region11: #{encoder_cnn_forward.4} parent=5 // pred_region
      %s163 = ssub.s32 %s10, 1
      // Predicated region
      $region13: #{encoder_cnn_forward.4} parent=11 // pred_check
        %p164 = pneg %p74
      $region14: #{encoder_cnn_forward.4} parent=11 // pred_check_branch
        %166 = sbr.rel (%p164) target = $region16
      $region15: #{encoder_cnn_forward.4} parent=11 // pred_region
        %p167 = scmp.lt.s32.totalorder %s20, 0
        %s168 = scalar_select %p167, %s20, 0
        %s169 = smul.addr %s168, 4
        %s170 = scalar_lea.vmem %s1, %s169
      $region16: #{encoder_cnn_forward.4} parent=11 // pred_fallthru
        _
      // Predicated region
      $region17: #{encoder_cnn_forward.4} parent=11 // pred_check
        %p171 = pneg %p100
      $region18: #{encoder_cnn_forward.4} parent=11 // pred_check_branch
        %173 = sbr.rel (%p171) target = $region20
      $region19: #{encoder_cnn_forward.4} parent=11 // pred_region
        %p174 = scmp.lt.s32.totalorder %s20, 0
        %s175 = scalar_select %p174, %s20, 0
        %s176 = scalar_lea.vmem %s2, %s175
      $region20: #{encoder_cnn_forward.4} parent=11 // pred_fallthru
        _
      // Predicated region
      $region21: #{encoder_cnn_forward.4} parent=11 // pred_check
        %p177 = pneg %p121
      $region22: #{encoder_cnn_forward.4} parent=11 // pred_check_branch
        %179 = sbr.rel (%p177) target = $region24
      $region23: #{encoder_cnn_forward.4} parent=11 // pred_region
        _
      $region24: #{encoder_cnn_forward.4} parent=11 // pred_fallthru
        _
    $region12: #{encoder_cnn_forward.4} parent=5 // pred_fallthru
      _
    %p180 = scmp.lt.s32.totalorder %s10, 2
    // Predicated region
    $region25: #{encoder_cnn_forward.4} parent=5 // pred_check
      %p181 = pneg %p180
    $region26: #{encoder_cnn_forward.4} parent=5 // pred_check_branch
      %183 = sbr.rel (%p181) target = $region28
    $region27: #{encoder_cnn_forward.4} parent=5 // pred_region
      // Predicated region
      $region29: #{encoder_cnn_forward.4} parent=27 // pred_check
        %p184 = pneg %p42
      $region30: #{encoder_cnn_forward.4} parent=27 // pred_check_branch
        %186 = sbr.rel (%p184) target = $region32
      $region31: #{encoder_cnn_forward.4} parent=27 // pred_region
        %p187 = scmp.lt.s32.totalorder %s17, 1
        %s188 = scalar_select %p187, %s17, 1
        %s189 = smul.addr %s188, 43
        %s190 = smul.addr %s189, 4
        %s191 = scalar_lea.vmem %s0, %s190
      $region32: #{encoder_cnn_forward.4} parent=27 // pred_fallthru
        _
    $region28: #{encoder_cnn_forward.4} parent=5 // pred_fallthru
      _
    %p192 = scmp.le.s32.totalorder 1, %s10
    %p193 = scmp.lt.s32.totalorder %s10, 3
    %p194 = pnand %p192, %p193
    %p195 = pneg %p194
    // Predicated region
    $region33: #{encoder_cnn_forward.4} parent=5 // pred_check
      _
    $region34: #{encoder_cnn_forward.4} parent=5 // pred_check_branch
      %197 = sbr.rel (%p194) target = $region36
    $region35: #{encoder_cnn_forward.4} parent=5 // pred_region
      %s198 = ssub.s32 %s10, 1
      %p199 = scmp.lt.s32.totalorder %s19, 1
      %s200 = scalar_select %p199, %s19, 1
      %s201 = smul.addr %s200, 43
      %s202 = smul.addr %s201, 4
      %s203 = scalar_lea.vmem %s0, %s202
      %p204 = pneg %p48
      %p205 = pneg %p45
      %p206 = scmp.lt.s32.totalorder %s20, 0
      %s207 = scalar_select %p206, %s20, 0
      %s208 = smul.addr %s207, 4
      %s209 = scalar_lea.vmem %s1, %s208
      %p210 = pneg %p74
      %p211 = pneg %p71
      %p212 = scmp.lt.s32.totalorder %s20, 0
      %s213 = scalar_select %p212, %s20, 0
      %s214 = scalar_lea.vmem %s2, %s213
      %p215 = pneg %p100
      %p216 = pneg %p97
      %p217 = pneg %p121
      %p218 = pneg %p118
      %p219 = pneg %p149
      %p220 = pneg %p146
      %p221 = scmp.lt.s32.totalorder %s19, 1
      %s222 = scalar_select %p221, %s19, 1
      %p223 = scmp.lt.s32.totalorder %s20, 0
      %s224 = scalar_select %p223, %s20, 0
      %s225 = sadd.s32 %s224, %s222
      %s226 = scalar_lea.vmem %s4, %s225
      %p227 = scmp.lt.s32.totalorder %s19, 1
      %s228 = scalar_select %p227, %s19, 1
      %s229 = smul.addr %s228, 43
      %s230 = smul.addr %s229, 4
      %s231 = scalar_lea.vmem %s0, %s230
      %p232 = scmp.lt.s32.totalorder %s20, 0
      %s233 = scalar_select %p232, %s20, 0
      %s234 = smul.addr %s233, 4
      %s235 = scalar_lea.vmem %s1, %s234
      %p236 = scmp.lt.s32.totalorder %s20, 0
      %s237 = scalar_select %p236, %s20, 0
      %s238 = scalar_lea.vmem %s2, %s237
      %p239 = scmp.lt.s32.totalorder %s19, 1
      %s240 = scalar_select %p239, %s19, 1
      %p241 = scmp.lt.s32.totalorder %s20, 0
      %s242 = scalar_select %p241, %s20, 0
      %s243 = sadd.s32 %s242, %s240
      %s244 = scalar_lea.vmem %s4, %s243
      %v245 = vld [vmem:[%s231] sm:$0xf]
      %v246 = vld [vmem:[%s231 + $0x4] sm:$0xf]
      %v247 = vld [vmem:[%s231 + $0x8] sm:$0xf]
      %v248 = vld [vmem:[%s231 + $0xc] sm:$0xf]
      %v249 = vld [vmem:[%s231 + $0x10] sm:$0xf]
      %v250 = vld [vmem:[%s231 + $0x14] sm:$0xf]
      %v251 = vld [vmem:[%s231 + $0x18] sm:$0xf]
      %v252 = vld [vmem:[%s231 + $0x1c] sm:$0xf]
      %v253 = vld [vmem:[%s231 + $0x20] sm:$0xf]
      %v254 = vld [vmem:[%s231 + $0x24] sm:$0xf]
      %v255 = vld [vmem:[%s231 + $0x28] sm:$0xf]
      %v256 = vld [vmem:[%s231 + $0x2c] sm:$0xf]
      %v257 = vld [vmem:[%s231 + $0x30] sm:$0xf]
      %v258 = vld [vmem:[%s231 + $0x34] sm:$0xf]
      %v259 = vld [vmem:[%s231 + $0x38] sm:$0xf]
      %v260 = vld [vmem:[%s231 + $0x3c] sm:$0xf]
      %v261 = vld [vmem:[%s231 + $0x40] sm:$0xf]
      %v262 = vld [vmem:[%s231 + $0x44] sm:$0xf]
      %v263 = vld [vmem:[%s231 + $0x48] sm:$0xf]
      %v264 = vld [vmem:[%s231 + $0x4c] sm:$0xf]
      %v265 = vld [vmem:[%s231 + $0x50] sm:$0xf]
      %v266 = vld [vmem:[%s231 + $0x54] sm:$0xf]
      %v267 = vld [vmem:[%s231 + $0x58] sm:$0xf]
      %v268 = vld [vmem:[%s231 + $0x5c] sm:$0xf]
      %v269 = vld [vmem:[%s231 + $0x60] sm:$0xf]
      %v270 = vld [vmem:[%s231 + $0x64] sm:$0xf]
      %v271 = vld [vmem:[%s231 + $0x68] sm:$0xf]
      %v272 = vld [vmem:[%s231 + $0x6c] sm:$0xf]
      %v273 = vld [vmem:[%s231 + $0x70] sm:$0xf]
      %v274 = vld [vmem:[%s231 + $0x74] sm:$0xf]
      %v275 = vld [vmem:[%s231 + $0x78] sm:$0xf]
      %v276 = vld [vmem:[%s231 + $0x7c] sm:$0xf]
      %v277 = vld [vmem:[%s231 + $0x80] sm:$0xf]
      %v278 = vld [vmem:[%s231 + $0x84] sm:$0xf]
      %v279 = vld [vmem:[%s231 + $0x88] sm:$0xf]
      %v280 = vld [vmem:[%s231 + $0x8c] sm:$0xf]
      %v281 = vld [vmem:[%s235] sm:$0xf]
      %v282 = vld [vmem:[%s235 + $0x4] sm:$0xf]
      %v283 = vld [vmem:[%s235 + $0x8] sm:$0xf]
      %v284 = vld [vmem:[%s235 + $0xc] sm:$0xf]
      %v285 = vld [vmem:[%s235 + $0x10] sm:$0xf]
      %v286 = vld [vmem:[%s235 + $0x14] sm:$0xf]
      %v287 = vld [vmem:[%s235 + $0x18] sm:$0xf]
      %v288 = vld [vmem:[%s235 + $0x1c] sm:$0xf]
      %v289 = vld [vmem:[%s235 + $0x20] sm:$0xf]
      %v290 = vld [vmem:[%s235 + $0x24] sm:$0xf]
      %v291 = vld [vmem:[%s235 + $0x28] sm:$0xf]
      %v292 = vld [vmem:[%s235 + $0x2c] sm:$0xf]
      %v293 = vld [vmem:[%s235 + $0x30] sm:$0xf]
      %v294 = vld [vmem:[%s235 + $0x34] sm:$0xf]
      %v295 = vld [vmem:[%s235 + $0x38] sm:$0xf]
      %v296 = vld [vmem:[%s235 + $0x3c] sm:$0xf]
      %v297 = vld [vmem:[%s231 + $0x90] sm:$0x1]
      %s298 = scalar_lea.vmem %s235, 64
      %v299 = vld [vmem:[%s298] sm:$0xf]
      %v300 = vld [vmem:[%s298 + $0x4] sm:$0xf]
      %v301 = vld [vmem:[%s298 + $0x8] sm:$0xf]
      %v302 = vld [vmem:[%s298 + $0xc] sm:$0xf]
      %v303 = vld [vmem:[%s298 + $0x10] sm:$0xf]
      %v304 = vld [vmem:[%s298 + $0x14] sm:$0xf]
      %v305 = vld [vmem:[%s298 + $0x18] sm:$0xf]
      %v306 = vld [vmem:[%s298 + $0x1c] sm:$0xf]
      %v307 = vld [vmem:[%s298 + $0x20] sm:$0xf]
      %v308 = vld [vmem:[%s298 + $0x24] sm:$0xf]
      %v309 = vld [vmem:[%s298 + $0x28] sm:$0xf]
      %v310 = vld [vmem:[%s298 + $0x2c] sm:$0xf]
      %v311 = vld [vmem:[%s298 + $0x30] sm:$0xf]
      %v312 = vld [vmem:[%s298 + $0x34] sm:$0xf]
      %v313 = vld [vmem:[%s298 + $0x38] sm:$0xf]
      %v314 = vld [vmem:[%s298 + $0x3c] sm:$0xf]
      %v352 = vunpack.c.l.b16 %v245
      %v353 = vunpack.c.l.b16 %v246
      %v354 = vunpack.c.l.b16 %v247
      %v355 = vunpack.c.l.b16 %v248
      %v356 = vunpack.c.l.b16 %v249
      %v357 = vunpack.c.l.b16 %v250
      %v358 = vunpack.c.l.b16 %v251
      %v359 = vunpack.c.l.b16 %v252
      %v360 = vunpack.c.l.b16 %v253
      %v361 = vunpack.c.l.b16 %v254
      %v362 = vunpack.c.l.b16 %v255
      %v363 = vunpack.c.l.b16 %v256
      %v364 = vunpack.c.l.b16 %v257
      %v365 = vunpack.c.l.b16 %v258
      %v366 = vunpack.c.l.b16 %v259
      %v367 = vunpack.c.l.b16 %v260
      %v368 = vunpack.c.l.b16 %v261
      %v369 = vunpack.c.l.b16 %v262
      %v370 = vunpack.c.l.b16 %v263
      %v371 = vunpack.c.l.b16 %v264
      %v372 = vunpack.c.l.b16 %v265
      %v373 = vunpack.c.l.b16 %v266
      %v374 = vunpack.c.l.b16 %v267
      %v375 = vunpack.c.l.b16 %v268
      %v376 = vunpack.c.l.b16 %v269
      %v377 = vunpack.c.l.b16 %v270
      %v378 = vunpack.c.l.b16 %v271
      %v379 = vunpack.c.l.b16 %v272
      %v380 = vunpack.c.l.b16 %v273
      %v381 = vunpack.c.l.b16 %v274
      %v382 = vunpack.c.l.b16 %v275
      %v383 = vunpack.c.l.b16 %v276
      %v384 = vunpack.c.l.b16 %v277
      %v385 = vunpack.c.l.b16 %v278
      %v386 = vunpack.c.l.b16 %v279
      %v387 = vunpack.c.l.b16 %v280
      %v388 = vunpack.c.l.b16 %v297
      %v389 = vpack.c.b16 %v353, %v352
      %v390 = vpack.c.b16 %v355, %v354
      %v391 = vpack.c.b16 %v357, %v356
      %v392 = vpack.c.b16 %v359, %v358
      %v393 = vpack.c.b16 %v361, %v360
      %v394 = vpack.c.b16 %v363, %v362
      %v395 = vpack.c.b16 %v365, %v364
      %v396 = vpack.c.b16 %v367, %v366
      %v397 = vpack.c.b16 %v369, %v368
      %v398 = vpack.c.b16 %v371, %v370
      %v399 = vpack.c.b16 %v373, %v372
      %v400 = vpack.c.b16 %v375, %v374
      %v401 = vpack.c.b16 %v377, %v376
      %v402 = vpack.c.b16 %v379, %v378
      %v403 = vpack.c.b16 %v381, %v380
      %v404 = vpack.c.b16 %v383, %v382
      %v405 = vpack.c.b16 %v385, %v384
      %v406 = vpack.c.b16 %v387, %v386
      %v407 = vpack.c.b16 %v388, %v388
      %vm408 = vsmask.f32 7424
      %v410 = vshrl.u32 %v389, 16
      %v412 = vshll.u32 %v389, 16
      %v414 = vrot.slane %v412, 1
      %v415 = vor.u32 %v410, %v414
      %v417 = vshll.u32 %v390, 16
      %v419 = vrot.slane %v417, 1
      %v420 = vsel %vm408, %v415, %v419
      %v421 = vshrl.u32 %v390, 16
      %v423 = vor.u32 %v421, %v419
      %v425 = vshll.u32 %v391, 16
      %v427 = vrot.slane %v425, 1
      %v428 = vsel %vm408, %v423, %v427
      %v429 = vshrl.u32 %v391, 16
      %v431 = vor.u32 %v429, %v427
      %v433 = vshll.u32 %v392, 16
      %v435 = vrot.slane %v433, 1
      %v436 = vsel %vm408, %v431, %v435
      %v437 = vshrl.u32 %v392, 16
      %v439 = vor.u32 %v437, %v435
      %v441 = vshll.u32 %v393, 16
      %v443 = vrot.slane %v441, 1
      %v444 = vsel %vm408, %v439, %v443
      %v445 = vshrl.u32 %v393, 16
      %v447 = vor.u32 %v445, %v443
      %v449 = vshll.u32 %v394, 16
      %v451 = vrot.slane %v449, 1
      %v452 = vsel %vm408, %v447, %v451
      %v453 = vshrl.u32 %v394, 16
      %v455 = vor.u32 %v453, %v451
      %v457 = vshll.u32 %v395, 16
      %v459 = vrot.slane %v457, 1
      %v460 = vsel %vm408, %v455, %v459
      %v461 = vshrl.u32 %v395, 16
      %v463 = vor.u32 %v461, %v459
      %v465 = vshll.u32 %v396, 16
      %v467 = vrot.slane %v465, 1
      %v468 = vsel %vm408, %v463, %v467
      %v469 = vshrl.u32 %v396, 16
      %v471 = vor.u32 %v469, %v467
      %v473 = vshll.u32 %v397, 16
      %v475 = vrot.slane %v473, 1
      %v476 = vsel %vm408, %v471, %v475
      %v477 = vshrl.u32 %v397, 16
      %v479 = vor.u32 %v477, %v475
      %v481 = vshll.u32 %v398, 16
      %v483 = vrot.slane %v481, 1
      %v484 = vsel %vm408, %v479, %v483
      %v485 = vshrl.u32 %v398, 16
      %v487 = vor.u32 %v485, %v483
      %v489 = vshll.u32 %v399, 16
      %v491 = vrot.slane %v489, 1
      %v492 = vsel %vm408, %v487, %v491
      %v493 = vshrl.u32 %v399, 16
      %v495 = vor.u32 %v493, %v491
      %v497 = vshll.u32 %v400, 16
      %v499 = vrot.slane %v497, 1
      %v500 = vsel %vm408, %v495, %v499
      %v501 = vshrl.u32 %v400, 16
      %v503 = vor.u32 %v501, %v499
      %v505 = vshll.u32 %v401, 16
      %v507 = vrot.slane %v505, 1
      %v508 = vsel %vm408, %v503, %v507
      %v509 = vshrl.u32 %v401, 16
      %v511 = vor.u32 %v509, %v507
      %v513 = vshll.u32 %v402, 16
      %v515 = vrot.slane %v513, 1
      %v516 = vsel %vm408, %v511, %v515
      %v517 = vshrl.u32 %v402, 16
      %v519 = vor.u32 %v517, %v515
      %v521 = vshll.u32 %v403, 16
      %v523 = vrot.slane %v521, 1
      %v524 = vsel %vm408, %v519, %v523
      %v525 = vshrl.u32 %v403, 16
      %v527 = vor.u32 %v525, %v523
      %v529 = vshll.u32 %v404, 16
      %v531 = vrot.slane %v529, 1
      %v532 = vsel %vm408, %v527, %v531
      %v533 = vshrl.u32 %v404, 16
      %v535 = vor.u32 %v533, %v531
      %v537 = vshll.u32 %v405, 16
      %v539 = vrot.slane %v537, 1
      %v540 = vsel %vm408, %v535, %v539
      %v541 = vshrl.u32 %v405, 16
      %v543 = vor.u32 %v541, %v539
      %v545 = vshll.u32 %v406, 16
      %v547 = vrot.slane %v545, 1
      %v548 = vsel %vm408, %v543, %v547
      %v549 = vshrl.u32 %v406, 16
      %v551 = vor.u32 %v549, %v547
      %v553 = vshll.u32 %v407, 16
      %v555 = vrot.slane %v553, 1
      %v556 = vsel %vm408, %v551, %v555
      %v591 = vunpack.c.l.b16 %v299
      %v592 = vunpack.c.l.b16 %v300
      %v593 = vunpack.c.l.b16 %v301
      %v594 = vunpack.c.l.b16 %v302
      %v595 = vunpack.c.l.b16 %v303
      %v596 = vunpack.c.l.b16 %v304
      %v597 = vunpack.c.l.b16 %v305
      %v598 = vunpack.c.l.b16 %v306
      %v599 = vunpack.c.l.b16 %v307
      %v600 = vunpack.c.l.b16 %v308
      %v601 = vunpack.c.l.b16 %v309
      %v602 = vunpack.c.l.b16 %v310
      %v603 = vunpack.c.l.b16 %v311
      %v604 = vunpack.c.l.b16 %v312
      %v605 = vunpack.c.l.b16 %v313
      %v606 = vunpack.c.l.b16 %v314
      %v607 = vpack.c.b16 %v592, %v591
      %v608 = vpack.c.b16 %v594, %v593
      %v609 = vpack.c.b16 %v596, %v595
      %v610 = vpack.c.b16 %v598, %v597
      %v611 = vpack.c.b16 %v600, %v599
      %v612 = vpack.c.b16 %v602, %v601
      %v613 = vpack.c.b16 %v604, %v603
      %v614 = vpack.c.b16 %v606, %v605
      %623 = vmatpush.bf16.msra.mxu0 %v614
      %624 = vmatpush.bf16.msra.mxu0 %v613
      %625 = vmatpush.bf16.msra.mxu0 %v612
      %626 = vmatpush.bf16.msra.mxu0 %v611
      %627 = vmatpush.bf16.msra.mxu0 %v610
      %628 = vmatpush.bf16.msra.mxu0 %v609
      %629 = vmatpush.bf16.msra.mxu0 %v608
      %630 = vmatpush.bf16.msra.mxu0 %v607
      %631 = vmatmul.bf16.gmra.mxu0 %v420
      %v632 = vpop.f32.mrf.mxu0
      %v633 = vadd.f32 0.0, %v632
      %v634 = vpop.f32.mrf.mxu0
      %v635 = vadd.f32 0.0, %v634
      %636 = vmatmul.bf16.gmra.mxu0 %v428
      %v637 = vpop.f32.mrf.mxu0
      %v638 = vadd.f32 0.0, %v637
      %v639 = vpop.f32.mrf.mxu0
      %v640 = vadd.f32 0.0, %v639
      %641 = vmatmul.bf16.gmra.mxu0 %v436
      %v642 = vpop.f32.mrf.mxu0
      %v643 = vadd.f32 0.0, %v642
      %v644 = vpop.f32.mrf.mxu0
      %v645 = vadd.f32 0.0, %v644
      %646 = vmatmul.bf16.gmra.mxu0 %v444
      %v647 = vpop.f32.mrf.mxu0
      %v648 = vadd.f32 0.0, %v647
      %v649 = vpop.f32.mrf.mxu0
      %v650 = vadd.f32 0.0, %v649
      %651 = vmatmul.bf16.gmra.mxu0 %v452
      %v652 = vpop.f32.mrf.mxu0
      %v653 = vadd.f32 0.0, %v652
      %v654 = vpop.f32.mrf.mxu0
      %v655 = vadd.f32 0.0, %v654
      %656 = vmatmul.bf16.gmra.mxu0 %v460
      %v657 = vpop.f32.mrf.mxu0
      %v658 = vadd.f32 0.0, %v657
      %v659 = vpop.f32.mrf.mxu0
      %v660 = vadd.f32 0.0, %v659
      %661 = vmatmul.bf16.gmra.mxu0 %v468
      %v662 = vpop.f32.mrf.mxu0
      %v663 = vadd.f32 0.0, %v662
      %v664 = vpop.f32.mrf.mxu0
      %v665 = vadd.f32 0.0, %v664
      %666 = vmatmul.bf16.gmra.mxu0 %v476
      %v667 = vpop.f32.mrf.mxu0
      %v668 = vadd.f32 0.0, %v667
      %v669 = vpop.f32.mrf.mxu0
      %v670 = vadd.f32 0.0, %v669
      %671 = vmatmul.bf16.gmra.mxu0 %v484
      %v672 = vpop.f32.mrf.mxu0
      %v673 = vadd.f32 0.0, %v672
      %v674 = vpop.f32.mrf.mxu0
      %v675 = vadd.f32 0.0, %v674
      %676 = vmatmul.bf16.gmra.mxu0 %v492
      %v677 = vpop.f32.mrf.mxu0
      %v678 = vadd.f32 0.0, %v677
      %v679 = vpop.f32.mrf.mxu0
      %v680 = vadd.f32 0.0, %v679
      %681 = vmatmul.bf16.gmra.mxu0 %v500
      %v682 = vpop.f32.mrf.mxu0
      %v683 = vadd.f32 0.0, %v682
      %v684 = vpop.f32.mrf.mxu0
      %v685 = vadd.f32 0.0, %v684
      %686 = vmatmul.bf16.gmra.mxu0 %v508
      %v687 = vpop.f32.mrf.mxu0
      %v688 = vadd.f32 0.0, %v687
      %v689 = vpop.f32.mrf.mxu0
      %v690 = vadd.f32 0.0, %v689
      %691 = vmatmul.bf16.gmra.mxu0 %v516
      %v692 = vpop.f32.mrf.mxu0
      %v693 = vadd.f32 0.0, %v692
      %v694 = vpop.f32.mrf.mxu0
      %v695 = vadd.f32 0.0, %v694
      %696 = vmatmul.bf16.gmra.mxu0 %v524
      %v697 = vpop.f32.mrf.mxu0
      %v698 = vadd.f32 0.0, %v697
      %v699 = vpop.f32.mrf.mxu0
      %v700 = vadd.f32 0.0, %v699
      %701 = vmatmul.bf16.gmra.mxu0 %v532
      %v702 = vpop.f32.mrf.mxu0
      %v703 = vadd.f32 0.0, %v702
      %v704 = vpop.f32.mrf.mxu0
      %v705 = vadd.f32 0.0, %v704
      %706 = vmatmul.bf16.gmra.mxu0 %v540
      %v707 = vpop.f32.mrf.mxu0
      %v708 = vadd.f32 0.0, %v707
      %v709 = vpop.f32.mrf.mxu0
      %v710 = vadd.f32 0.0, %v709
      %711 = vmatmul.bf16.gmra.mxu0 %v548
      %v712 = vpop.f32.mrf.mxu0
      %v713 = vadd.f32 0.0, %v712
      %v714 = vpop.f32.mrf.mxu0
      %v715 = vadd.f32 0.0, %v714
      %716 = vmatmul.bf16.gmra.mxu0 %v556
      %v717 = vpop.f32.mrf.mxu0
      %v718 = vadd.f32 0.0, %v717
      %v719 = vpop.f32.mrf.mxu0
      %v720 = vadd.f32 0.0, %v719
      %721 = vdwg.mxu0
      %v756 = vunpack.c.l.b16 %v281
      %v757 = vunpack.c.l.b16 %v282
      %v758 = vunpack.c.l.b16 %v283
      %v759 = vunpack.c.l.b16 %v284
      %v760 = vunpack.c.l.b16 %v285
      %v761 = vunpack.c.l.b16 %v286
      %v762 = vunpack.c.l.b16 %v287
      %v763 = vunpack.c.l.b16 %v288
      %v764 = vunpack.c.l.b16 %v289
      %v765 = vunpack.c.l.b16 %v290
      %v766 = vunpack.c.l.b16 %v291
      %v767 = vunpack.c.l.b16 %v292
      %v768 = vunpack.c.l.b16 %v293
      %v769 = vunpack.c.l.b16 %v294
      %v770 = vunpack.c.l.b16 %v295
      %v771 = vunpack.c.l.b16 %v296
      %v772 = vpack.c.b16 %v757, %v756
      %v773 = vpack.c.b16 %v759, %v758
      %v774 = vpack.c.b16 %v761, %v760
      %v775 = vpack.c.b16 %v763, %v762
      %v776 = vpack.c.b16 %v765, %v764
      %v777 = vpack.c.b16 %v767, %v766
      %v778 = vpack.c.b16 %v769, %v768
      %v779 = vpack.c.b16 %v771, %v770
      %788 = vmatpush.bf16.msra.mxu0 %v779
      %789 = vmatpush.bf16.msra.mxu0 %v778
      %790 = vmatpush.bf16.msra.mxu0 %v777
      %791 = vmatpush.bf16.msra.mxu0 %v776
      %792 = vmatpush.bf16.msra.mxu0 %v775
      %793 = vmatpush.bf16.msra.mxu0 %v774
      %794 = vmatpush.bf16.msra.mxu0 %v773
      %795 = vmatpush.bf16.msra.mxu0 %v772
      %796 = vmatmul.bf16.gmra.mxu0 %v389
      %v797 = vpop.f32.mrf.mxu0
      %v798 = vadd.f32 %v633, %v797
      %v799 = vpop.f32.mrf.mxu0
      %v800 = vadd.f32 %v635, %v799
      %801 = vmatmul.bf16.gmra.mxu0 %v390
      %v802 = vpop.f32.mrf.mxu0
      %v803 = vadd.f32 %v638, %v802
      %v804 = vpop.f32.mrf.mxu0
      %v805 = vadd.f32 %v640, %v804
      %806 = vmatmul.bf16.gmra.mxu0 %v391
      %v807 = vpop.f32.mrf.mxu0
      %v808 = vadd.f32 %v643, %v807
      %v809 = vpop.f32.mrf.mxu0
      %v810 = vadd.f32 %v645, %v809
      %811 = vmatmul.bf16.gmra.mxu0 %v392
      %v812 = vpop.f32.mrf.mxu0
      %v813 = vadd.f32 %v648, %v812
      %v814 = vpop.f32.mrf.mxu0
      %v815 = vadd.f32 %v650, %v814
      %816 = vmatmul.bf16.gmra.mxu0 %v393
      %v817 = vpop.f32.mrf.mxu0
      %v818 = vadd.f32 %v653, %v817
      %v819 = vpop.f32.mrf.mxu0
      %v820 = vadd.f32 %v655, %v819
      %821 = vmatmul.bf16.gmra.mxu0 %v394
      %v822 = vpop.f32.mrf.mxu0
      %v823 = vadd.f32 %v658, %v822
      %v824 = vpop.f32.mrf.mxu0
      %v825 = vadd.f32 %v660, %v824
      %826 = vmatmul.bf16.gmra.mxu0 %v395
      %v827 = vpop.f32.mrf.mxu0
      %v828 = vadd.f32 %v663, %v827
      %v829 = vpop.f32.mrf.mxu0
      %v830 = vadd.f32 %v665, %v829
      %831 = vmatmul.bf16.gmra.mxu0 %v396
      %v832 = vpop.f32.mrf.mxu0
      %v833 = vadd.f32 %v668, %v832
      %v834 = vpop.f32.mrf.mxu0
      %v835 = vadd.f32 %v670, %v834
      %836 = vmatmul.bf16.gmra.mxu0 %v397
      %v837 = vpop.f32.mrf.mxu0
      %v838 = vadd.f32 %v673, %v837
      %v839 = vpop.f32.mrf.mxu0
      %v840 = vadd.f32 %v675, %v839
      %841 = vmatmul.bf16.gmra.mxu0 %v398
      %v842 = vpop.f32.mrf.mxu0
      %v843 = vadd.f32 %v678, %v842
      %v844 = vpop.f32.mrf.mxu0
      %v845 = vadd.f32 %v680, %v844
      %846 = vmatmul.bf16.gmra.mxu0 %v399
      %v847 = vpop.f32.mrf.mxu0
      %v848 = vadd.f32 %v683, %v847
      %v849 = vpop.f32.mrf.mxu0
      %v850 = vadd.f32 %v685, %v849
      %851 = vmatmul.bf16.gmra.mxu0 %v400
      %v852 = vpop.f32.mrf.mxu0
      %v853 = vadd.f32 %v688, %v852
      %v854 = vpop.f32.mrf.mxu0
      %v855 = vadd.f32 %v690, %v854
      %856 = vmatmul.bf16.gmra.mxu0 %v401
      %v857 = vpop.f32.mrf.mxu0
      %v858 = vadd.f32 %v693, %v857
      %v859 = vpop.f32.mrf.mxu0
      %v860 = vadd.f32 %v695, %v859
      %861 = vmatmul.bf16.gmra.mxu0 %v402
      %v862 = vpop.f32.mrf.mxu0
      %v863 = vadd.f32 %v698, %v862
      %v864 = vpop.f32.mrf.mxu0
      %v865 = vadd.f32 %v700, %v864
      %866 = vmatmul.bf16.gmra.mxu0 %v403
      %v867 = vpop.f32.mrf.mxu0
      %v868 = vadd.f32 %v703, %v867
      %v869 = vpop.f32.mrf.mxu0
      %v870 = vadd.f32 %v705, %v869
      %871 = vmatmul.bf16.gmra.mxu0 %v404
      %v872 = vpop.f32.mrf.mxu0
      %v873 = vadd.f32 %v708, %v872
      %v874 = vpop.f32.mrf.mxu0
      %v875 = vadd.f32 %v710, %v874
      %876 = vmatmul.bf16.gmra.mxu0 %v405
      %v877 = vpop.f32.mrf.mxu0
      %v878 = vadd.f32 %v713, %v877
      %v879 = vpop.f32.mrf.mxu0
      %v880 = vadd.f32 %v715, %v879
      %881 = vmatmul.bf16.gmra.mxu0 %v406
      %v882 = vpop.f32.mrf.mxu0
      %v883 = vadd.f32 %v718, %v882
      %v884 = vpop.f32.mrf.mxu0
      %v885 = vadd.f32 %v720, %v884
      %886 = vdwg.mxu0
      %v887 = vld [vmem:[%s231] sm:$0xe]
      %s888 = scalar_lea.vmem %s235, 128
      %v889 = vld [vmem:[%s888] sm:$0xf]
      %v890 = vld [vmem:[%s888 + $0x4] sm:$0xf]
      %v891 = vld [vmem:[%s888 + $0x8] sm:$0xf]
      %v892 = vld [vmem:[%s888 + $0xc] sm:$0xf]
      %v893 = vld [vmem:[%s888 + $0x10] sm:$0xf]
      %v894 = vld [vmem:[%s888 + $0x14] sm:$0xf]
      %v895 = vld [vmem:[%s888 + $0x18] sm:$0xf]
      %v896 = vld [vmem:[%s888 + $0x1c] sm:$0xf]
      %v897 = vld [vmem:[%s888 + $0x20] sm:$0xf]
      %v898 = vld [vmem:[%s888 + $0x24] sm:$0xf]
      %v899 = vld [vmem:[%s888 + $0x28] sm:$0xf]
      %v900 = vld [vmem:[%s888 + $0x2c] sm:$0xf]
      %v901 = vld [vmem:[%s888 + $0x30] sm:$0xf]
      %v902 = vld [vmem:[%s888 + $0x34] sm:$0xf]
      %v903 = vld [vmem:[%s888 + $0x38] sm:$0xf]
      %v904 = vld [vmem:[%s888 + $0x3c] sm:$0xf]
      %v906 = vunpack.c.l.b16 %v887
      %v907 = vpack.c.b16 %v353, %v906
      %vm908 = vcmask 1046528
      %v909 = vrot.slane %v907, 1
      %v910 = vrot.slane %v390, 1
      %v911 = vsel %vm908, %v909, %v910
      %v912 = vrot.slane %v391, 1
      %v913 = vsel %vm908, %v910, %v912
      %v914 = vrot.slane %v392, 1
      %v915 = vsel %vm908, %v912, %v914
      %v916 = vrot.slane %v393, 1
      %v917 = vsel %vm908, %v914, %v916
      %v918 = vrot.slane %v394, 1
      %v919 = vsel %vm908, %v916, %v918
      %v920 = vrot.slane %v395, 1
      %v921 = vsel %vm908, %v918, %v920
      %v922 = vrot.slane %v396, 1
      %v923 = vsel %vm908, %v920, %v922
      %v924 = vrot.slane %v397, 1
      %v925 = vsel %vm908, %v922, %v924
      %v926 = vrot.slane %v398, 1
      %v927 = vsel %vm908, %v924, %v926
      %v928 = vrot.slane %v399, 1
      %v929 = vsel %vm908, %v926, %v928
      %v930 = vrot.slane %v400, 1
      %v931 = vsel %vm908, %v928, %v930
      %v932 = vrot.slane %v401, 1
      %v933 = vsel %vm908, %v930, %v932
      %v934 = vrot.slane %v402, 1
      %v935 = vsel %vm908, %v932, %v934
      %v936 = vrot.slane %v403, 1
      %v937 = vsel %vm908, %v934, %v936
      %v938 = vrot.slane %v404, 1
      %v939 = vsel %vm908, %v936, %v938
      %v940 = vrot.slane %v405, 1
      %v941 = vsel %vm908, %v938, %v940
      %v942 = vrot.slane %v406, 1
      %v943 = vsel %vm908, %v940, %v942
      %v944 = vrot.slane %v407, 1
      %v945 = vsel %vm908, %v942, %v944
      %v980 = vunpack.c.l.b16 %v889
      %v981 = vunpack.c.l.b16 %v890
      %v982 = vunpack.c.l.b16 %v891
      %v983 = vunpack.c.l.b16 %v892
      %v984 = vunpack.c.l.b16 %v893
      %v985 = vunpack.c.l.b16 %v894
      %v986 = vunpack.c.l.b16 %v895
      %v987 = vunpack.c.l.b16 %v896
      %v988 = vunpack.c.l.b16 %v897
      %v989 = vunpack.c.l.b16 %v898
      %v990 = vunpack.c.l.b16 %v899
      %v991 = vunpack.c.l.b16 %v900
      %v992 = vunpack.c.l.b16 %v901
      %v993 = vunpack.c.l.b16 %v902
      %v994 = vunpack.c.l.b16 %v903
      %v995 = vunpack.c.l.b16 %v904
      %v996 = vpack.c.b16 %v981, %v980
      %v997 = vpack.c.b16 %v983, %v982
      %v998 = vpack.c.b16 %v985, %v984
      %v999 = vpack.c.b16 %v987, %v986
      %v1000 = vpack.c.b16 %v989, %v988
      %v1001 = vpack.c.b16 %v991, %v990
      %v1002 = vpack.c.b16 %v993, %v992
      %v1003 = vpack.c.b16 %v995, %v994
      %1012 = vmatpush.bf16.msra.mxu0 %v1003
      %1013 = vmatpush.bf16.msra.mxu0 %v1002
      %1014 = vmatpush.bf16.msra.mxu0 %v1001
      %1015 = vmatpush.bf16.msra.mxu0 %v1000
      %1016 = vmatpush.bf16.msra.mxu0 %v999
      %1017 = vmatpush.bf16.msra.mxu0 %v998
      %1018 = vmatpush.bf16.msra.mxu0 %v997
      %1019 = vmatpush.bf16.msra.mxu0 %v996
      %1020 = vmatmul.bf16.gmra.mxu0 %v911
      %v1021 = vpop.f32.mrf.mxu0
      %v1022 = vadd.f32 0.0, %v1021
      %v1023 = vpop.f32.mrf.mxu0
      %v1024 = vadd.f32 0.0, %v1023
      %1025 = vmatmul.bf16.gmra.mxu0 %v913
      %v1026 = vpop.f32.mrf.mxu0
      %v1027 = vadd.f32 0.0, %v1026
      %v1028 = vpop.f32.mrf.mxu0
      %v1029 = vadd.f32 0.0, %v1028
      %1030 = vmatmul.bf16.gmra.mxu0 %v915
      %v1031 = vpop.f32.mrf.mxu0
      %v1032 = vadd.f32 0.0, %v1031
      %v1033 = vpop.f32.mrf.mxu0
      %v1034 = vadd.f32 0.0, %v1033
      %1035 = vmatmul.bf16.gmra.mxu0 %v917
      %v1036 = vpop.f32.mrf.mxu0
      %v1037 = vadd.f32 0.0, %v1036
      %v1038 = vpop.f32.mrf.mxu0
      %v1039 = vadd.f32 0.0, %v1038
      %1040 = vmatmul.bf16.gmra.mxu0 %v919
      %v1041 = vpop.f32.mrf.mxu0
      %v1042 = vadd.f32 0.0, %v1041
      %v1043 = vpop.f32.mrf.mxu0
      %v1044 = vadd.f32 0.0, %v1043
      %1045 = vmatmul.bf16.gmra.mxu0 %v921
      %v1046 = vpop.f32.mrf.mxu0
      %v1047 = vadd.f32 0.0, %v1046
      %v1048 = vpop.f32.mrf.mxu0
      %v1049 = vadd.f32 0.0, %v1048
      %1050 = vmatmul.bf16.gmra.mxu0 %v923
      %v1051 = vpop.f32.mrf.mxu0
      %v1052 = vadd.f32 0.0, %v1051
      %v1053 = vpop.f32.mrf.mxu0
      %v1054 = vadd.f32 0.0, %v1053
      %1055 = vmatmul.bf16.gmra.mxu0 %v925
      %v1056 = vpop.f32.mrf.mxu0
      %v1057 = vadd.f32 0.0, %v1056
      %v1058 = vpop.f32.mrf.mxu0
      %v1059 = vadd.f32 0.0, %v1058
      %1060 = vmatmul.bf16.gmra.mxu0 %v927
      %v1061 = vpop.f32.mrf.mxu0
      %v1062 = vadd.f32 0.0, %v1061
      %v1063 = vpop.f32.mrf.mxu0
      %v1064 = vadd.f32 0.0, %v1063
      %1065 = vmatmul.bf16.gmra.mxu0 %v929
      %v1066 = vpop.f32.mrf.mxu0
      %v1067 = vadd.f32 0.0, %v1066
      %v1068 = vpop.f32.mrf.mxu0
      %v1069 = vadd.f32 0.0, %v1068
      %1070 = vmatmul.bf16.gmra.mxu0 %v931
      %v1071 = vpop.f32.mrf.mxu0
      %v1072 = vadd.f32 0.0, %v1071
      %v1073 = vpop.f32.mrf.mxu0
      %v1074 = vadd.f32 0.0, %v1073
      %1075 = vmatmul.bf16.gmra.mxu0 %v933
      %v1076 = vpop.f32.mrf.mxu0
      %v1077 = vadd.f32 0.0, %v1076
      %v1078 = vpop.f32.mrf.mxu0
      %v1079 = vadd.f32 0.0, %v1078
      %1080 = vmatmul.bf16.gmra.mxu0 %v935
      %v1081 = vpop.f32.mrf.mxu0
      %v1082 = vadd.f32 0.0, %v1081
      %v1083 = vpop.f32.mrf.mxu0
      %v1084 = vadd.f32 0.0, %v1083
      %1085 = vmatmul.bf16.gmra.mxu0 %v937
      %v1086 = vpop.f32.mrf.mxu0
      %v1087 = vadd.f32 0.0, %v1086
      %v1088 = vpop.f32.mrf.mxu0
      %v1089 = vadd.f32 0.0, %v1088
      %1090 = vmatmul.bf16.gmra.mxu0 %v939
      %v1091 = vpop.f32.mrf.mxu0
      %v1092 = vadd.f32 0.0, %v1091
      %v1093 = vpop.f32.mrf.mxu0
      %v1094 = vadd.f32 0.0, %v1093
      %1095 = vmatmul.bf16.gmra.mxu0 %v941
      %v1096 = vpop.f32.mrf.mxu0
      %v1097 = vadd.f32 0.0, %v1096
      %v1098 = vpop.f32.mrf.mxu0
      %v1099 = vadd.f32 0.0, %v1098
      %1100 = vmatmul.bf16.gmra.mxu0 %v943
      %v1101 = vpop.f32.mrf.mxu0
      %v1102 = vadd.f32 0.0, %v1101
      %v1103 = vpop.f32.mrf.mxu0
      %v1104 = vadd.f32 0.0, %v1103
      %1105 = vmatmul.bf16.gmra.mxu0 %v945
      %v1106 = vpop.f32.mrf.mxu0
      %v1107 = vadd.f32 0.0, %v1106
      %v1108 = vpop.f32.mrf.mxu0
      %v1109 = vadd.f32 0.0, %v1108
      %1110 = vdwg.mxu0
      %v1111 = vadd.f32 %v798, %v1022
      %v1112 = vadd.f32 %v800, %v1024
      %v1113 = vadd.f32 %v803, %v1027
      %v1114 = vadd.f32 %v805, %v1029
      %v1115 = vadd.f32 %v808, %v1032
      %v1116 = vadd.f32 %v810, %v1034
      %v1117 = vadd.f32 %v813, %v1037
      %v1118 = vadd.f32 %v815, %v1039
      %v1119 = vadd.f32 %v818, %v1042
      %v1120 = vadd.f32 %v820, %v1044
      %v1121 = vadd.f32 %v823, %v1047
      %v1122 = vadd.f32 %v825, %v1049
      %v1123 = vadd.f32 %v828, %v1052
      %v1124 = vadd.f32 %v830, %v1054
      %v1125 = vadd.f32 %v833, %v1057
      %v1126 = vadd.f32 %v835, %v1059
      %v1127 = vadd.f32 %v838, %v1062
      %v1128 = vadd.f32 %v840, %v1064
      %v1129 = vadd.f32 %v843, %v1067
      %v1130 = vadd.f32 %v845, %v1069
      %v1131 = vadd.f32 %v848, %v1072
      %v1132 = vadd.f32 %v850, %v1074
      %v1133 = vadd.f32 %v853, %v1077
      %v1134 = vadd.f32 %v855, %v1079
      %v1135 = vadd.f32 %v858, %v1082
      %v1136 = vadd.f32 %v860, %v1084
      %v1137 = vadd.f32 %v863, %v1087
      %v1138 = vadd.f32 %v865, %v1089
      %v1139 = vadd.f32 %v868, %v1092
      %v1140 = vadd.f32 %v870, %v1094
      %v1141 = vadd.f32 %v873, %v1097
      %v1142 = vadd.f32 %v875, %v1099
      %v1143 = vadd.f32 %v878, %v1102
      %v1144 = vadd.f32 %v880, %v1104
      %v1145 = vadd.f32 %v883, %v1107
      %v1146 = vadd.f32 %v885, %v1109
      %v1147 = vld [vmem:[%s231 + $0x8] sm:$0xe]
      %v1148 = vld [vmem:[%s231 + $0xc] sm:$0xf]
      %v1149 = vld [vmem:[%s231 + $0x10] sm:$0xf]
      %v1150 = vld [vmem:[%s231 + $0x14] sm:$0xf]
      %v1151 = vld [vmem:[%s231 + $0x18] sm:$0xf]
      %v1152 = vld [vmem:[%s231 + $0x1c] sm:$0xf]
      %v1153 = vld [vmem:[%s231 + $0x20] sm:$0xf]
      %v1154 = vld [vmem:[%s231 + $0x24] sm:$0xf]
      %v1155 = vld [vmem:[%s231 + $0x28] sm:$0xf]
      %v1156 = vld [vmem:[%s231 + $0x2c] sm:$0xf]
      %v1157 = vld [vmem:[%s231 + $0x30] sm:$0xf]
      %v1158 = vld [vmem:[%s231 + $0x34] sm:$0xf]
      %v1159 = vld [vmem:[%s231 + $0x38] sm:$0xf]
      %v1160 = vld [vmem:[%s231 + $0x3c] sm:$0xf]
      %v1161 = vld [vmem:[%s231 + $0x40] sm:$0xf]
      %v1162 = vld [vmem:[%s231 + $0x44] sm:$0xf]
      %v1163 = vld [vmem:[%s231 + $0x48] sm:$0xf]
      %v1164 = vld [vmem:[%s231 + $0x4c] sm:$0xf]
      %v1165 = vld [vmem:[%s231 + $0x50] sm:$0xf]
      %v1166 = vld [vmem:[%s231 + $0x54] sm:$0xf]
      %v1167 = vld [vmem:[%s231 + $0x58] sm:$0xf]
      %v1168 = vld [vmem:[%s231 + $0x5c] sm:$0xf]
      %v1169 = vld [vmem:[%s231 + $0x60] sm:$0xf]
      %v1170 = vld [vmem:[%s231 + $0x64] sm:$0xf]
      %v1171 = vld [vmem:[%s231 + $0x68] sm:$0xf]
      %v1172 = vld [vmem:[%s231 + $0x6c] sm:$0xf]
      %v1173 = vld [vmem:[%s231 + $0x70] sm:$0xf]
      %v1174 = vld [vmem:[%s231 + $0x74] sm:$0xf]
      %v1175 = vld [vmem:[%s231 + $0x78] sm:$0xf]
      %v1176 = vld [vmem:[%s231 + $0x7c] sm:$0xf]
      %v1177 = vld [vmem:[%s231 + $0x80] sm:$0xf]
      %v1178 = vld [vmem:[%s231 + $0x84] sm:$0xf]
      %v1179 = vld [vmem:[%s231 + $0x88] sm:$0xf]
      %v1180 = vld [vmem:[%s231 + $0x8c] sm:$0xf]
      %v1181 = vld [vmem:[%s231 + $0x90] sm:$0xf]
      %v1182 = vld [vmem:[%s231 + $0x94] sm:$0xf]
      %v1183 = vld [vmem:[%s231 + $0x98] sm:$0x1]
      %s1184 = scalar_lea.vmem %s235, 192
      %v1185 = vld [vmem:[%s1184] sm:$0xf]
      %v1186 = vld [vmem:[%s1184 + $0x4] sm:$0xf]
      %v1187 = vld [vmem:[%s1184 + $0x8] sm:$0xf]
      %v1188 = vld [vmem:[%s1184 + $0xc] sm:$0xf]
      %v1189 = vld [vmem:[%s1184 + $0x10] sm:$0xf]
      %v1190 = vld [vmem:[%s1184 + $0x14] sm:$0xf]
      %v1191 = vld [vmem:[%s1184 + $0x18] sm:$0xf]
      %v1192 = vld [vmem:[%s1184 + $0x1c] sm:$0xf]
      %v1193 = vld [vmem:[%s1184 + $0x20] sm:$0xf]
      %v1194 = vld [vmem:[%s1184 + $0x24] sm:$0xf]
      %v1195 = vld [vmem:[%s1184 + $0x28] sm:$0xf]
      %v1196 = vld [vmem:[%s1184 + $0x2c] sm:$0xf]
      %v1197 = vld [vmem:[%s1184 + $0x30] sm:$0xf]
      %v1198 = vld [vmem:[%s1184 + $0x34] sm:$0xf]
      %v1199 = vld [vmem:[%s1184 + $0x38] sm:$0xf]
      %v1200 = vld [vmem:[%s1184 + $0x3c] sm:$0xf]
      %v1238 = vunpack.c.l.b16 %v1147
      %v1239 = vunpack.c.l.b16 %v1148
      %v1240 = vunpack.c.l.b16 %v1149
      %v1241 = vunpack.c.l.b16 %v1150
      %v1242 = vunpack.c.l.b16 %v1151
      %v1243 = vunpack.c.l.b16 %v1152
      %v1244 = vunpack.c.l.b16 %v1153
      %v1245 = vunpack.c.l.b16 %v1154
      %v1246 = vunpack.c.l.b16 %v1155
      %v1247 = vunpack.c.l.b16 %v1156
      %v1248 = vunpack.c.l.b16 %v1157
      %v1249 = vunpack.c.l.b16 %v1158
      %v1250 = vunpack.c.l.b16 %v1159
      %v1251 = vunpack.c.l.b16 %v1160
      %v1252 = vunpack.c.l.b16 %v1161
      %v1253 = vunpack.c.l.b16 %v1162
      %v1254 = vunpack.c.l.b16 %v1163
      %v1255 = vunpack.c.l.b16 %v1164
      %v1256 = vunpack.c.l.b16 %v1165
      %v1257 = vunpack.c.l.b16 %v1166
      %v1258 = vunpack.c.l.b16 %v1167
      %v1259 = vunpack.c.l.b16 %v1168
      %v1260 = vunpack.c.l.b16 %v1169
      %v1261 = vunpack.c.l.b16 %v1170
      %v1262 = vunpack.c.l.b16 %v1171
      %v1263 = vunpack.c.l.b16 %v1172
      %v1264 = vunpack.c.l.b16 %v1173
      %v1265 = vunpack.c.l.b16 %v1174
      %v1266 = vunpack.c.l.b16 %v1175
      %v1267 = vunpack.c.l.b16 %v1176
      %v1268 = vunpack.c.l.b16 %v1177
      %v1269 = vunpack.c.l.b16 %v1178
      %v1270 = vunpack.c.l.b16 %v1179
      %v1271 = vunpack.c.l.b16 %v1180
      %v1272 = vunpack.c.l.b16 %v1181
      %v1273 = vunpack.c.l.b16 %v1182
      %v1274 = vunpack.c.l.b16 %v1183
      %v1275 = vpack.c.b16 %v1239, %v1238
      %v1276 = vpack.c.b16 %v1241, %v1240
      %v1277 = vpack.c.b16 %v1243, %v1242
      %v1278 = vpack.c.b16 %v1245, %v1244
      %v1279 = vpack.c.b16 %v1247, %v1246
      %v1280 = vpack.c.b16 %v1249, %v1248
      %v1281 = vpack.c.b16 %v1251, %v1250
      %v1282 = vpack.c.b16 %v1253, %v1252
      %v1283 = vpack.c.b16 %v1255, %v1254
      %v1284 = vpack.c.b16 %v1257, %v1256
      %v1285 = vpack.c.b16 %v1259, %v1258
      %v1286 = vpack.c.b16 %v1261, %v1260
      %v1287 = vpack.c.b16 %v1263, %v1262
      %v1288 = vpack.c.b16 %v1265, %v1264
      %v1289 = vpack.c.b16 %v1267, %v1266
      %v1290 = vpack.c.b16 %v1269, %v1268
      %v1291 = vpack.c.b16 %v1271, %v1270
      %v1292 = vpack.c.b16 %v1273, %v1272
      %v1293 = vpack.c.b16 %v1274, %v1274
      %v1294 = vrot.slane %v1275, 1
      %v1295 = vrot.slane %v1276, 1
      %v1296 = vsel %vm908, %v1294, %v1295
      %v1297 = vrot.slane %v1277, 1
      %v1298 = vsel %vm908, %v1295, %v1297
      %v1299 = vrot.slane %v1278, 1
      %v1300 = vsel %vm908, %v1297, %v1299
      %v1301 = vrot.slane %v1279, 1
      %v1302 = vsel %vm908, %v1299, %v1301
      %v1303 = vrot.slane %v1280, 1
      %v1304 = vsel %vm908, %v1301, %v1303
      %v1305 = vrot.slane %v1281, 1
      %v1306 = vsel %vm908, %v1303, %v1305
      %v1307 = vrot.slane %v1282, 1
      %v1308 = vsel %vm908, %v1305, %v1307
      %v1309 = vrot.slane %v1283, 1
      %v1310 = vsel %vm908, %v1307, %v1309
      %v1311 = vrot.slane %v1284, 1
      %v1312 = vsel %vm908, %v1309, %v1311
      %v1313 = vrot.slane %v1285, 1
      %v1314 = vsel %vm908, %v1311, %v1313
      %v1315 = vrot.slane %v1286, 1
      %v1316 = vsel %vm908, %v1313, %v1315
      %v1317 = vrot.slane %v1287, 1
      %v1318 = vsel %vm908, %v1315, %v1317
      %v1319 = vrot.slane %v1288, 1
      %v1320 = vsel %vm908, %v1317, %v1319
      %v1321 = vrot.slane %v1289, 1
      %v1322 = vsel %vm908, %v1319, %v1321
      %v1323 = vrot.slane %v1290, 1
      %v1324 = vsel %vm908, %v1321, %v1323
      %v1325 = vrot.slane %v1291, 1
      %v1326 = vsel %vm908, %v1323, %v1325
      %v1327 = vrot.slane %v1292, 1
      %v1328 = vsel %vm908, %v1325, %v1327
      %v1329 = vrot.slane %v1293, 1
      %v1330 = vsel %vm908, %v1327, %v1329
      %v1365 = vunpack.c.l.b16 %v1185
      %v1366 = vunpack.c.l.b16 %v1186
      %v1367 = vunpack.c.l.b16 %v1187
      %v1368 = vunpack.c.l.b16 %v1188
      %v1369 = vunpack.c.l.b16 %v1189
      %v1370 = vunpack.c.l.b16 %v1190
      %v1371 = vunpack.c.l.b16 %v1191
      %v1372 = vunpack.c.l.b16 %v1192
      %v1373 = vunpack.c.l.b16 %v1193
      %v1374 = vunpack.c.l.b16 %v1194
      %v1375 = vunpack.c.l.b16 %v1195
      %v1376 = vunpack.c.l.b16 %v1196
      %v1377 = vunpack.c.l.b16 %v1197
      %v1378 = vunpack.c.l.b16 %v1198
      %v1379 = vunpack.c.l.b16 %v1199
      %v1380 = vunpack.c.l.b16 %v1200
      %v1381 = vpack.c.b16 %v1366, %v1365
      %v1382 = vpack.c.b16 %v1368, %v1367
      %v1383 = vpack.c.b16 %v1370, %v1369
      %v1384 = vpack.c.b16 %v1372, %v1371
      %v1385 = vpack.c.b16 %v1374, %v1373
      %v1386 = vpack.c.b16 %v1376, %v1375
      %v1387 = vpack.c.b16 %v1378, %v1377
      %v1388 = vpack.c.b16 %v1380, %v1379
      %1397 = vmatpush.bf16.msra.mxu0 %v1388
      %1398 = vmatpush.bf16.msra.mxu0 %v1387
      %1399 = vmatpush.bf16.msra.mxu0 %v1386
      %1400 = vmatpush.bf16.msra.mxu0 %v1385
      %1401 = vmatpush.bf16.msra.mxu0 %v1384
      %1402 = vmatpush.bf16.msra.mxu0 %v1383
      %1403 = vmatpush.bf16.msra.mxu0 %v1382
      %1404 = vmatpush.bf16.msra.mxu0 %v1381
      %1405 = vmatmul.bf16.gmra.mxu0 %v1296
      %v1406 = vpop.f32.mrf.mxu0
      %v1407 = vadd.f32 0.0, %v1406
      %v1408 = vpop.f32.mrf.mxu0
      %v1409 = vadd.f32 0.0, %v1408
      %1410 = vmatmul.bf16.gmra.mxu0 %v1298
      %v1411 = vpop.f32.mrf.mxu0
      %v1412 = vadd.f32 0.0, %v1411
      %v1413 = vpop.f32.mrf.mxu0
      %v1414 = vadd.f32 0.0, %v1413
      %1415 = vmatmul.bf16.gmra.mxu0 %v1300
      %v1416 = vpop.f32.mrf.mxu0
      %v1417 = vadd.f32 0.0, %v1416
      %v1418 = vpop.f32.mrf.mxu0
      %v1419 = vadd.f32 0.0, %v1418
      %1420 = vmatmul.bf16.gmra.mxu0 %v1302
      %v1421 = vpop.f32.mrf.mxu0
      %v1422 = vadd.f32 0.0, %v1421
      %v1423 = vpop.f32.mrf.mxu0
      %v1424 = vadd.f32 0.0, %v1423
      %1425 = vmatmul.bf16.gmra.mxu0 %v1304
      %v1426 = vpop.f32.mrf.mxu0
      %v1427 = vadd.f32 0.0, %v1426
      %v1428 = vpop.f32.mrf.mxu0
      %v1429 = vadd.f32 0.0, %v1428
      %1430 = vmatmul.bf16.gmra.mxu0 %v1306
      %v1431 = vpop.f32.mrf.mxu0
      %v1432 = vadd.f32 0.0, %v1431
      %v1433 = vpop.f32.mrf.mxu0
      %v1434 = vadd.f32 0.0, %v1433
      %1435 = vmatmul.bf16.gmra.mxu0 %v1308
      %v1436 = vpop.f32.mrf.mxu0
      %v1437 = vadd.f32 0.0, %v1436
      %v1438 = vpop.f32.mrf.mxu0
      %v1439 = vadd.f32 0.0, %v1438
      %1440 = vmatmul.bf16.gmra.mxu0 %v1310
      %v1441 = vpop.f32.mrf.mxu0
      %v1442 = vadd.f32 0.0, %v1441
      %v1443 = vpop.f32.mrf.mxu0
      %v1444 = vadd.f32 0.0, %v1443
      %1445 = vmatmul.bf16.gmra.mxu0 %v1312
      %v1446 = vpop.f32.mrf.mxu0
      %v1447 = vadd.f32 0.0, %v1446
      %v1448 = vpop.f32.mrf.mxu0
      %v1449 = vadd.f32 0.0, %v1448
      %1450 = vmatmul.bf16.gmra.mxu0 %v1314
      %v1451 = vpop.f32.mrf.mxu0
      %v1452 = vadd.f32 0.0, %v1451
      %v1453 = vpop.f32.mrf.mxu0
      %v1454 = vadd.f32 0.0, %v1453
      %1455 = vmatmul.bf16.gmra.mxu0 %v1316
      %v1456 = vpop.f32.mrf.mxu0
      %v1457 = vadd.f32 0.0, %v1456
      %v1458 = vpop.f32.mrf.mxu0
      %v1459 = vadd.f32 0.0, %v1458
      %1460 = vmatmul.bf16.gmra.mxu0 %v1318
      %v1461 = vpop.f32.mrf.mxu0
      %v1462 = vadd.f32 0.0, %v1461
      %v1463 = vpop.f32.mrf.mxu0
      %v1464 = vadd.f32 0.0, %v1463
      %1465 = vmatmul.bf16.gmra.mxu0 %v1320
      %v1466 = vpop.f32.mrf.mxu0
      %v1467 = vadd.f32 0.0, %v1466
      %v1468 = vpop.f32.mrf.mxu0
      %v1469 = vadd.f32 0.0, %v1468
      %1470 = vmatmul.bf16.gmra.mxu0 %v1322
      %v1471 = vpop.f32.mrf.mxu0
      %v1472 = vadd.f32 0.0, %v1471
      %v1473 = vpop.f32.mrf.mxu0
      %v1474 = vadd.f32 0.0, %v1473
      %1475 = vmatmul.bf16.gmra.mxu0 %v1324
      %v1476 = vpop.f32.mrf.mxu0
      %v1477 = vadd.f32 0.0, %v1476
      %v1478 = vpop.f32.mrf.mxu0
      %v1479 = vadd.f32 0.0, %v1478
      %1480 = vmatmul.bf16.gmra.mxu0 %v1326
      %v1481 = vpop.f32.mrf.mxu0
      %v1482 = vadd.f32 0.0, %v1481
      %v1483 = vpop.f32.mrf.mxu0
      %v1484 = vadd.f32 0.0, %v1483
      %1485 = vmatmul.bf16.gmra.mxu0 %v1328
      %v1486 = vpop.f32.mrf.mxu0
      %v1487 = vadd.f32 0.0, %v1486
      %v1488 = vpop.f32.mrf.mxu0
      %v1489 = vadd.f32 0.0, %v1488
      %1490 = vmatmul.bf16.gmra.mxu0 %v1330
      %v1491 = vpop.f32.mrf.mxu0
      %v1492 = vadd.f32 0.0, %v1491
      %v1493 = vpop.f32.mrf.mxu0
      %v1494 = vadd.f32 0.0, %v1493
      %1495 = vdwg.mxu0
      %v1496 = vadd.f32 %v1111, %v1407
      %v1497 = vadd.f32 %v1112, %v1409
      %v1498 = vadd.f32 %v1113, %v1412
      %v1499 = vadd.f32 %v1114, %v1414
      %v1500 = vadd.f32 %v1115, %v1417
      %v1501 = vadd.f32 %v1116, %v1419
      %v1502 = vadd.f32 %v1117, %v1422
      %v1503 = vadd.f32 %v1118, %v1424
      %v1504 = vadd.f32 %v1119, %v1427
      %v1505 = vadd.f32 %v1120, %v1429
      %v1506 = vadd.f32 %v1121, %v1432
      %v1507 = vadd.f32 %v1122, %v1434
      %v1508 = vadd.f32 %v1123, %v1437
      %v1509 = vadd.f32 %v1124, %v1439
      %v1510 = vadd.f32 %v1125, %v1442
      %v1511 = vadd.f32 %v1126, %v1444
      %v1512 = vadd.f32 %v1127, %v1447
      %v1513 = vadd.f32 %v1128, %v1449
      %v1514 = vadd.f32 %v1129, %v1452
      %v1515 = vadd.f32 %v1130, %v1454
      %v1516 = vadd.f32 %v1131, %v1457
      %v1517 = vadd.f32 %v1132, %v1459
      %v1518 = vadd.f32 %v1133, %v1462
      %v1519 = vadd.f32 %v1134, %v1464
      %v1520 = vadd.f32 %v1135, %v1467
      %v1521 = vadd.f32 %v1136, %v1469
      %v1522 = vadd.f32 %v1137, %v1472
      %v1523 = vadd.f32 %v1138, %v1474
      %v1524 = vadd.f32 %v1139, %v1477
      %v1525 = vadd.f32 %v1140, %v1479
      %v1526 = vadd.f32 %v1141, %v1482
      %v1527 = vadd.f32 %v1142, %v1484
      %v1528 = vadd.f32 %v1143, %v1487
      %v1529 = vadd.f32 %v1144, %v1489
      %v1530 = vadd.f32 %v1145, %v1492
      %v1531 = vadd.f32 %v1146, %v1494
      %v1532 = vld [vmem:[%s231 + $0x98] sm:$0x3]
      %s1533 = scalar_lea.vmem %s235, 256
      %v1534 = vld [vmem:[%s1533] sm:$0xf]
      %v1535 = vld [vmem:[%s1533 + $0x4] sm:$0xf]
      %v1536 = vld [vmem:[%s1533 + $0x8] sm:$0xf]
      %v1537 = vld [vmem:[%s1533 + $0xc] sm:$0xf]
      %v1538 = vld [vmem:[%s1533 + $0x10] sm:$0xf]
      %v1539 = vld [vmem:[%s1533 + $0x14] sm:$0xf]
      %v1540 = vld [vmem:[%s1533 + $0x18] sm:$0xf]
      %v1541 = vld [vmem:[%s1533 + $0x1c] sm:$0xf]
      %v1542 = vld [vmem:[%s1533 + $0x20] sm:$0xf]
      %v1543 = vld [vmem:[%s1533 + $0x24] sm:$0xf]
      %v1544 = vld [vmem:[%s1533 + $0x28] sm:$0xf]
      %v1545 = vld [vmem:[%s1533 + $0x2c] sm:$0xf]
      %v1546 = vld [vmem:[%s1533 + $0x30] sm:$0xf]
      %v1547 = vld [vmem:[%s1533 + $0x34] sm:$0xf]
      %v1548 = vld [vmem:[%s1533 + $0x38] sm:$0xf]
      %v1549 = vld [vmem:[%s1533 + $0x3c] sm:$0xf]
      %v1551 = vunpack.c.l.b16 %v1532
      %v1552 = vpack.c.b16 %v1551, %v1551
      %vm1553 = vsmask.f32 6400
      %v1555 = vshrl.u32 %v1275, 16
      %v1557 = vrot.slane %v1555, 1
      %v1558 = vshll.u32 %v1275, 16
      %v1560 = vrot.slane %v1558, 2
      %v1561 = vor.u32 %v1557, %v1560
      %v1563 = vshrl.u32 %v1276, 16
      %v1565 = vrot.slane %v1563, 1
      %v1566 = vshll.u32 %v1276, 16
      %v1568 = vrot.slane %v1566, 2
      %v1569 = vor.u32 %v1565, %v1568
      %v1570 = vsel %vm1553, %v1561, %v1569
      %v1572 = vshrl.u32 %v1277, 16
      %v1574 = vrot.slane %v1572, 1
      %v1575 = vshll.u32 %v1277, 16
      %v1577 = vrot.slane %v1575, 2
      %v1578 = vor.u32 %v1574, %v1577
      %v1579 = vsel %vm1553, %v1569, %v1578
      %v1581 = vshrl.u32 %v1278, 16
      %v1583 = vrot.slane %v1581, 1
      %v1584 = vshll.u32 %v1278, 16
      %v1586 = vrot.slane %v1584, 2
      %v1587 = vor.u32 %v1583, %v1586
      %v1588 = vsel %vm1553, %v1578, %v1587
      %v1590 = vshrl.u32 %v1279, 16
      %v1592 = vrot.slane %v1590, 1
      %v1593 = vshll.u32 %v1279, 16
      %v1595 = vrot.slane %v1593, 2
      %v1596 = vor.u32 %v1592, %v1595
      %v1597 = vsel %vm1553, %v1587, %v1596
      %v1599 = vshrl.u32 %v1280, 16
      %v1601 = vrot.slane %v1599, 1
      %v1602 = vshll.u32 %v1280, 16
      %v1604 = vrot.slane %v1602, 2
      %v1605 = vor.u32 %v1601, %v1604
      %v1606 = vsel %vm1553, %v1596, %v1605
      %v1608 = vshrl.u32 %v1281, 16
      %v1610 = vrot.slane %v1608, 1
      %v1611 = vshll.u32 %v1281, 16
      %v1613 = vrot.slane %v1611, 2
      %v1614 = vor.u32 %v1610, %v1613
      %v1615 = vsel %vm1553, %v1605, %v1614
      %v1617 = vshrl.u32 %v1282, 16
      %v1619 = vrot.slane %v1617, 1
      %v1620 = vshll.u32 %v1282, 16
      %v1622 = vrot.slane %v1620, 2
      %v1623 = vor.u32 %v1619, %v1622
      %v1624 = vsel %vm1553, %v1614, %v1623
      %v1626 = vshrl.u32 %v1283, 16
      %v1628 = vrot.slane %v1626, 1
      %v1629 = vshll.u32 %v1283, 16
      %v1631 = vrot.slane %v1629, 2
      %v1632 = vor.u32 %v1628, %v1631
      %v1633 = vsel %vm1553, %v1623, %v1632
      %v1635 = vshrl.u32 %v1284, 16
      %v1637 = vrot.slane %v1635, 1
      %v1638 = vshll.u32 %v1284, 16
      %v1640 = vrot.slane %v1638, 2
      %v1641 = vor.u32 %v1637, %v1640
      %v1642 = vsel %vm1553, %v1632, %v1641
      %v1644 = vshrl.u32 %v1285, 16
      %v1646 = vrot.slane %v1644, 1
      %v1647 = vshll.u32 %v1285, 16
      %v1649 = vrot.slane %v1647, 2
      %v1650 = vor.u32 %v1646, %v1649
      %v1651 = vsel %vm1553, %v1641, %v1650
      %v1653 = vshrl.u32 %v1286, 16
      %v1655 = vrot.slane %v1653, 1
      %v1656 = vshll.u32 %v1286, 16
      %v1658 = vrot.slane %v1656, 2
      %v1659 = vor.u32 %v1655, %v1658
      %v1660 = vsel %vm1553, %v1650, %v1659
      %v1662 = vshrl.u32 %v1287, 16
      %v1664 = vrot.slane %v1662, 1
      %v1665 = vshll.u32 %v1287, 16
      %v1667 = vrot.slane %v1665, 2
      %v1668 = vor.u32 %v1664, %v1667
      %v1669 = vsel %vm1553, %v1659, %v1668
      %v1671 = vshrl.u32 %v1288, 16
      %v1673 = vrot.slane %v1671, 1
      %v1674 = vshll.u32 %v1288, 16
      %v1676 = vrot.slane %v1674, 2
      %v1677 = vor.u32 %v1673, %v1676
      %v1678 = vsel %vm1553, %v1668, %v1677
      %v1680 = vshrl.u32 %v1289, 16
      %v1682 = vrot.slane %v1680, 1
      %v1683 = vshll.u32 %v1289, 16
      %v1685 = vrot.slane %v1683, 2
      %v1686 = vor.u32 %v1682, %v1685
      %v1687 = vsel %vm1553, %v1677, %v1686
      %v1689 = vshrl.u32 %v1290, 16
      %v1691 = vrot.slane %v1689, 1
      %v1692 = vshll.u32 %v1290, 16
      %v1694 = vrot.slane %v1692, 2
      %v1695 = vor.u32 %v1691, %v1694
      %v1696 = vsel %vm1553, %v1686, %v1695
      %v1698 = vshrl.u32 %v1291, 16
      %v1700 = vrot.slane %v1698, 1
      %v1701 = vshll.u32 %v1291, 16
      %v1703 = vrot.slane %v1701, 2
      %v1704 = vor.u32 %v1700, %v1703
      %v1705 = vsel %vm1553, %v1695, %v1704
      %v1707 = vshrl.u32 %v1292, 16
      %v1709 = vrot.slane %v1707, 1
      %v1710 = vshll.u32 %v1292, 16
      %v1712 = vrot.slane %v1710, 2
      %v1713 = vor.u32 %v1709, %v1712
      %v1714 = vsel %vm1553, %v1704, %v1713
      %v1716 = vshrl.u32 %v1552, 16
      %v1718 = vrot.slane %v1716, 1
      %v1719 = vshll.u32 %v1552, 16
      %v1721 = vrot.slane %v1719, 2
      %v1722 = vor.u32 %v1718, %v1721
      %v1723 = vsel %vm1553, %v1713, %v1722
      %v1758 = vunpack.c.l.b16 %v1534
      %v1759 = vunpack.c.l.b16 %v1535
      %v1760 = vunpack.c.l.b16 %v1536
      %v1761 = vunpack.c.l.b16 %v1537
      %v1762 = vunpack.c.l.b16 %v1538
      %v1763 = vunpack.c.l.b16 %v1539
      %v1764 = vunpack.c.l.b16 %v1540
      %v1765 = vunpack.c.l.b16 %v1541
      %v1766 = vunpack.c.l.b16 %v1542
      %v1767 = vunpack.c.l.b16 %v1543
      %v1768 = vunpack.c.l.b16 %v1544
      %v1769 = vunpack.c.l.b16 %v1545
      %v1770 = vunpack.c.l.b16 %v1546
      %v1771 = vunpack.c.l.b16 %v1547
      %v1772 = vunpack.c.l.b16 %v1548
      %v1773 = vunpack.c.l.b16 %v1549
      %v1774 = vpack.c.b16 %v1759, %v1758
      %v1775 = vpack.c.b16 %v1761, %v1760
      %v1776 = vpack.c.b16 %v1763, %v1762
      %v1777 = vpack.c.b16 %v1765, %v1764
      %v1778 = vpack.c.b16 %v1767, %v1766
      %v1779 = vpack.c.b16 %v1769, %v1768
      %v1780 = vpack.c.b16 %v1771, %v1770
      %v1781 = vpack.c.b16 %v1773, %v1772
      %1790 = vmatpush.bf16.msra.mxu0 %v1781
      %1791 = vmatpush.bf16.msra.mxu0 %v1780
      %1792 = vmatpush.bf16.msra.mxu0 %v1779
      %1793 = vmatpush.bf16.msra.mxu0 %v1778
      %1794 = vmatpush.bf16.msra.mxu0 %v1777
      %1795 = vmatpush.bf16.msra.mxu0 %v1776
      %1796 = vmatpush.bf16.msra.mxu0 %v1775
      %1797 = vmatpush.bf16.msra.mxu0 %v1774
      %1798 = vmatmul.bf16.gmra.mxu0 %v1570
      %v1799 = vpop.f32.mrf.mxu0
      %v1800 = vadd.f32 0.0, %v1799
      %v1801 = vpop.f32.mrf.mxu0
      %v1802 = vadd.f32 0.0, %v1801
      %1803 = vmatmul.bf16.gmra.mxu0 %v1579
      %v1804 = vpop.f32.mrf.mxu0
      %v1805 = vadd.f32 0.0, %v1804
      %v1806 = vpop.f32.mrf.mxu0
      %v1807 = vadd.f32 0.0, %v1806
      %1808 = vmatmul.bf16.gmra.mxu0 %v1588
      %v1809 = vpop.f32.mrf.mxu0
      %v1810 = vadd.f32 0.0, %v1809
      %v1811 = vpop.f32.mrf.mxu0
      %v1812 = vadd.f32 0.0, %v1811
      %1813 = vmatmul.bf16.gmra.mxu0 %v1597
      %v1814 = vpop.f32.mrf.mxu0
      %v1815 = vadd.f32 0.0, %v1814
      %v1816 = vpop.f32.mrf.mxu0
      %v1817 = vadd.f32 0.0, %v1816
      %1818 = vmatmul.bf16.gmra.mxu0 %v1606
      %v1819 = vpop.f32.mrf.mxu0
      %v1820 = vadd.f32 0.0, %v1819
      %v1821 = vpop.f32.mrf.mxu0
      %v1822 = vadd.f32 0.0, %v1821
      %1823 = vmatmul.bf16.gmra.mxu0 %v1615
      %v1824 = vpop.f32.mrf.mxu0
      %v1825 = vadd.f32 0.0, %v1824
      %v1826 = vpop.f32.mrf.mxu0
      %v1827 = vadd.f32 0.0, %v1826
      %1828 = vmatmul.bf16.gmra.mxu0 %v1624
      %v1829 = vpop.f32.mrf.mxu0
      %v1830 = vadd.f32 0.0, %v1829
      %v1831 = vpop.f32.mrf.mxu0
      %v1832 = vadd.f32 0.0, %v1831
      %1833 = vmatmul.bf16.gmra.mxu0 %v1633
      %v1834 = vpop.f32.mrf.mxu0
      %v1835 = vadd.f32 0.0, %v1834
      %v1836 = vpop.f32.mrf.mxu0
      %v1837 = vadd.f32 0.0, %v1836
      %1838 = vmatmul.bf16.gmra.mxu0 %v1642
      %v1839 = vpop.f32.mrf.mxu0
      %v1840 = vadd.f32 0.0, %v1839
      %v1841 = vpop.f32.mrf.mxu0
      %v1842 = vadd.f32 0.0, %v1841
      %1843 = vmatmul.bf16.gmra.mxu0 %v1651
      %v1844 = vpop.f32.mrf.mxu0
      %v1845 = vadd.f32 0.0, %v1844
      %v1846 = vpop.f32.mrf.mxu0
      %v1847 = vadd.f32 0.0, %v1846
      %1848 = vmatmul.bf16.gmra.mxu0 %v1660
      %v1849 = vpop.f32.mrf.mxu0
      %v1850 = vadd.f32 0.0, %v1849
      %v1851 = vpop.f32.mrf.mxu0
      %v1852 = vadd.f32 0.0, %v1851
      %1853 = vmatmul.bf16.gmra.mxu0 %v1669
      %v1854 = vpop.f32.mrf.mxu0
      %v1855 = vadd.f32 0.0, %v1854
      %v1856 = vpop.f32.mrf.mxu0
      %v1857 = vadd.f32 0.0, %v1856
      %1858 = vmatmul.bf16.gmra.mxu0 %v1678
      %v1859 = vpop.f32.mrf.mxu0
      %v1860 = vadd.f32 0.0, %v1859
      %v1861 = vpop.f32.mrf.mxu0
      %v1862 = vadd.f32 0.0, %v1861
      %1863 = vmatmul.bf16.gmra.mxu0 %v1687
      %v1864 = vpop.f32.mrf.mxu0
      %v1865 = vadd.f32 0.0, %v1864
      %v1866 = vpop.f32.mrf.mxu0
      %v1867 = vadd.f32 0.0, %v1866
      %1868 = vmatmul.bf16.gmra.mxu0 %v1696
      %v1869 = vpop.f32.mrf.mxu0
      %v1870 = vadd.f32 0.0, %v1869
      %v1871 = vpop.f32.mrf.mxu0
      %v1872 = vadd.f32 0.0, %v1871
      %1873 = vmatmul.bf16.gmra.mxu0 %v1705
      %v1874 = vpop.f32.mrf.mxu0
      %v1875 = vadd.f32 0.0, %v1874
      %v1876 = vpop.f32.mrf.mxu0
      %v1877 = vadd.f32 0.0, %v1876
      %1878 = vmatmul.bf16.gmra.mxu0 %v1714
      %v1879 = vpop.f32.mrf.mxu0
      %v1880 = vadd.f32 0.0, %v1879
      %v1881 = vpop.f32.mrf.mxu0
      %v1882 = vadd.f32 0.0, %v1881
      %1883 = vmatmul.bf16.gmra.mxu0 %v1723
      %v1884 = vpop.f32.mrf.mxu0
      %v1885 = vadd.f32 0.0, %v1884
      %v1886 = vpop.f32.mrf.mxu0
      %v1887 = vadd.f32 0.0, %v1886
      %1888 = vdwg.mxu0
      %v1889 = vadd.f32 %v1496, %v1800
      %v1890 = vadd.f32 %v1497, %v1802
      %v1891 = vadd.f32 %v1498, %v1805
      %v1892 = vadd.f32 %v1499, %v1807
      %v1893 = vadd.f32 %v1500, %v1810
      %v1894 = vadd.f32 %v1501, %v1812
      %v1895 = vadd.f32 %v1502, %v1815
      %v1896 = vadd.f32 %v1503, %v1817
      %v1897 = vadd.f32 %v1504, %v1820
      %v1898 = vadd.f32 %v1505, %v1822
      %v1899 = vadd.f32 %v1506, %v1825
      %v1900 = vadd.f32 %v1507, %v1827
      %v1901 = vadd.f32 %v1508, %v1830
      %v1902 = vadd.f32 %v1509, %v1832
      %v1903 = vadd.f32 %v1510, %v1835
      %v1904 = vadd.f32 %v1511, %v1837
      %v1905 = vadd.f32 %v1512, %v1840
      %v1906 = vadd.f32 %v1513, %v1842
      %v1907 = vadd.f32 %v1514, %v1845
      %v1908 = vadd.f32 %v1515, %v1847
      %v1909 = vadd.f32 %v1516, %v1850
      %v1910 = vadd.f32 %v1517, %v1852
      %v1911 = vadd.f32 %v1518, %v1855
      %v1912 = vadd.f32 %v1519, %v1857
      %v1913 = vadd.f32 %v1520, %v1860
      %v1914 = vadd.f32 %v1521, %v1862
      %v1915 = vadd.f32 %v1522, %v1865
      %v1916 = vadd.f32 %v1523, %v1867
      %v1917 = vadd.f32 %v1524, %v1870
      %v1918 = vadd.f32 %v1525, %v1872
      %v1919 = vadd.f32 %v1526, %v1875
      %v1920 = vadd.f32 %v1527, %v1877
      %v1921 = vadd.f32 %v1528, %v1880
      %v1922 = vadd.f32 %v1529, %v1882
      %v1923 = vadd.f32 %v1530, %v1885
      %v1924 = vadd.f32 %v1531, %v1887
      %v1925 = vld [vmem:[%s231 + $0x8] sm:$0xc]
      %s1926 = scalar_lea.vmem %s235, 320
      %v1927 = vld [vmem:[%s1926] sm:$0xf]
      %v1928 = vld [vmem:[%s1926 + $0x4] sm:$0xf]
      %v1929 = vld [vmem:[%s1926 + $0x8] sm:$0xf]
      %v1930 = vld [vmem:[%s1926 + $0xc] sm:$0xf]
      %v1931 = vld [vmem:[%s1926 + $0x10] sm:$0xf]
      %v1932 = vld [vmem:[%s1926 + $0x14] sm:$0xf]
      %v1933 = vld [vmem:[%s1926 + $0x18] sm:$0xf]
      %v1934 = vld [vmem:[%s1926 + $0x1c] sm:$0xf]
      %v1935 = vld [vmem:[%s1926 + $0x20] sm:$0xf]
      %v1936 = vld [vmem:[%s1926 + $0x24] sm:$0xf]
      %v1937 = vld [vmem:[%s1926 + $0x28] sm:$0xf]
      %v1938 = vld [vmem:[%s1926 + $0x2c] sm:$0xf]
      %v1939 = vld [vmem:[%s1926 + $0x30] sm:$0xf]
      %v1940 = vld [vmem:[%s1926 + $0x34] sm:$0xf]
      %v1941 = vld [vmem:[%s1926 + $0x38] sm:$0xf]
      %v1942 = vld [vmem:[%s1926 + $0x3c] sm:$0xf]
      %v1944 = vunpack.c.l.b16 %v1925
      %v1945 = vpack.c.b16 %v1239, %v1944
      %vm1946 = vcmask 1045504
      %v1947 = vrot.slane %v1945, 2
      %v1948 = vrot.slane %v1276, 2
      %v1949 = vsel %vm1946, %v1947, %v1948
      %v1950 = vrot.slane %v1277, 2
      %v1951 = vsel %vm1946, %v1948, %v1950
      %v1952 = vrot.slane %v1278, 2
      %v1953 = vsel %vm1946, %v1950, %v1952
      %v1954 = vrot.slane %v1279, 2
      %v1955 = vsel %vm1946, %v1952, %v1954
      %v1956 = vrot.slane %v1280, 2
      %v1957 = vsel %vm1946, %v1954, %v1956
      %v1958 = vrot.slane %v1281, 2
      %v1959 = vsel %vm1946, %v1956, %v1958
      %v1960 = vrot.slane %v1282, 2
      %v1961 = vsel %vm1946, %v1958, %v1960
      %v1962 = vrot.slane %v1283, 2
      %v1963 = vsel %vm1946, %v1960, %v1962
      %v1964 = vrot.slane %v1284, 2
      %v1965 = vsel %vm1946, %v1962, %v1964
      %v1966 = vrot.slane %v1285, 2
      %v1967 = vsel %vm1946, %v1964, %v1966
      %v1968 = vrot.slane %v1286, 2
      %v1969 = vsel %vm1946, %v1966, %v1968
      %v1970 = vrot.slane %v1287, 2
      %v1971 = vsel %vm1946, %v1968, %v1970
      %v1972 = vrot.slane %v1288, 2
      %v1973 = vsel %vm1946, %v1970, %v1972
      %v1974 = vrot.slane %v1289, 2
      %v1975 = vsel %vm1946, %v1972, %v1974
      %v1976 = vrot.slane %v1290, 2
      %v1977 = vsel %vm1946, %v1974, %v1976
      %v1978 = vrot.slane %v1291, 2
      %v1979 = vsel %vm1946, %v1976, %v1978
      %v1980 = vrot.slane %v1292, 2
      %v1981 = vsel %vm1946, %v1978, %v1980
      %v1982 = vrot.slane %v1552, 2
      %v1983 = vsel %vm1946, %v1980, %v1982
      %v2018 = vunpack.c.l.b16 %v1927
      %v2019 = vunpack.c.l.b16 %v1928
      %v2020 = vunpack.c.l.b16 %v1929
      %v2021 = vunpack.c.l.b16 %v1930
      %v2022 = vunpack.c.l.b16 %v1931
      %v2023 = vunpack.c.l.b16 %v1932
      %v2024 = vunpack.c.l.b16 %v1933
      %v2025 = vunpack.c.l.b16 %v1934
      %v2026 = vunpack.c.l.b16 %v1935
      %v2027 = vunpack.c.l.b16 %v1936
      %v2028 = vunpack.c.l.b16 %v1937
      %v2029 = vunpack.c.l.b16 %v1938
      %v2030 = vunpack.c.l.b16 %v1939
      %v2031 = vunpack.c.l.b16 %v1940
      %v2032 = vunpack.c.l.b16 %v1941
      %v2033 = vunpack.c.l.b16 %v1942
      %v2034 = vpack.c.b16 %v2019, %v2018
      %v2035 = vpack.c.b16 %v2021, %v2020
      %v2036 = vpack.c.b16 %v2023, %v2022
      %v2037 = vpack.c.b16 %v2025, %v2024
      %v2038 = vpack.c.b16 %v2027, %v2026
      %v2039 = vpack.c.b16 %v2029, %v2028
      %v2040 = vpack.c.b16 %v2031, %v2030
      %v2041 = vpack.c.b16 %v2033, %v2032
      %2050 = vmatpush.bf16.msra.mxu0 %v2041
      %2051 = vmatpush.bf16.msra.mxu0 %v2040
      %2052 = vmatpush.bf16.msra.mxu0 %v2039
      %2053 = vmatpush.bf16.msra.mxu0 %v2038
      %2054 = vmatpush.bf16.msra.mxu0 %v2037
      %2055 = vmatpush.bf16.msra.mxu0 %v2036
      %2056 = vmatpush.bf16.msra.mxu0 %v2035
      %2057 = vmatpush.bf16.msra.mxu0 %v2034
      %2058 = vmatmul.bf16.gmra.mxu0 %v1949
      %v2059 = vpop.f32.mrf.mxu0
      %v2060 = vadd.f32 0.0, %v2059
      %v2061 = vpop.f32.mrf.mxu0
      %v2062 = vadd.f32 0.0, %v2061
      %2063 = vmatmul.bf16.gmra.mxu0 %v1951
      %v2064 = vpop.f32.mrf.mxu0
      %v2065 = vadd.f32 0.0, %v2064
      %v2066 = vpop.f32.mrf.mxu0
      %v2067 = vadd.f32 0.0, %v2066
      %2068 = vmatmul.bf16.gmra.mxu0 %v1953
      %v2069 = vpop.f32.mrf.mxu0
      %v2070 = vadd.f32 0.0, %v2069
      %v2071 = vpop.f32.mrf.mxu0
      %v2072 = vadd.f32 0.0, %v2071
      %2073 = vmatmul.bf16.gmra.mxu0 %v1955
      %v2074 = vpop.f32.mrf.mxu0
      %v2075 = vadd.f32 0.0, %v2074
      %v2076 = vpop.f32.mrf.mxu0
      %v2077 = vadd.f32 0.0, %v2076
      %2078 = vmatmul.bf16.gmra.mxu0 %v1957
      %v2079 = vpop.f32.mrf.mxu0
      %v2080 = vadd.f32 0.0, %v2079
      %v2081 = vpop.f32.mrf.mxu0
      %v2082 = vadd.f32 0.0, %v2081
      %2083 = vmatmul.bf16.gmra.mxu0 %v1959
      %v2084 = vpop.f32.mrf.mxu0
      %v2085 = vadd.f32 0.0, %v2084
      %v2086 = vpop.f32.mrf.mxu0
      %v2087 = vadd.f32 0.0, %v2086
      %2088 = vmatmul.bf16.gmra.mxu0 %v1961
      %v2089 = vpop.f32.mrf.mxu0
      %v2090 = vadd.f32 0.0, %v2089
      %v2091 = vpop.f32.mrf.mxu0
      %v2092 = vadd.f32 0.0, %v2091
      %2093 = vmatmul.bf16.gmra.mxu0 %v1963
      %v2094 = vpop.f32.mrf.mxu0
      %v2095 = vadd.f32 0.0, %v2094
      %v2096 = vpop.f32.mrf.mxu0
      %v2097 = vadd.f32 0.0, %v2096
      %2098 = vmatmul.bf16.gmra.mxu0 %v1965
      %v2099 = vpop.f32.mrf.mxu0
      %v2100 = vadd.f32 0.0, %v2099
      %v2101 = vpop.f32.mrf.mxu0
      %v2102 = vadd.f32 0.0, %v2101
      %2103 = vmatmul.bf16.gmra.mxu0 %v1967
      %v2104 = vpop.f32.mrf.mxu0
      %v2105 = vadd.f32 0.0, %v2104
      %v2106 = vpop.f32.mrf.mxu0
      %v2107 = vadd.f32 0.0, %v2106
      %2108 = vmatmul.bf16.gmra.mxu0 %v1969
      %v2109 = vpop.f32.mrf.mxu0
      %v2110 = vadd.f32 0.0, %v2109
      %v2111 = vpop.f32.mrf.mxu0
      %v2112 = vadd.f32 0.0, %v2111
      %2113 = vmatmul.bf16.gmra.mxu0 %v1971
      %v2114 = vpop.f32.mrf.mxu0
      %v2115 = vadd.f32 0.0, %v2114
      %v2116 = vpop.f32.mrf.mxu0
      %v2117 = vadd.f32 0.0, %v2116
      %2118 = vmatmul.bf16.gmra.mxu0 %v1973
      %v2119 = vpop.f32.mrf.mxu0
      %v2120 = vadd.f32 0.0, %v2119
      %v2121 = vpop.f32.mrf.mxu0
      %v2122 = vadd.f32 0.0, %v2121
      %2123 = vmatmul.bf16.gmra.mxu0 %v1975
      %v2124 = vpop.f32.mrf.mxu0
      %v2125 = vadd.f32 0.0, %v2124
      %v2126 = vpop.f32.mrf.mxu0
      %v2127 = vadd.f32 0.0, %v2126
      %2128 = vmatmul.bf16.gmra.mxu0 %v1977
      %v2129 = vpop.f32.mrf.mxu0
      %v2130 = vadd.f32 0.0, %v2129
      %v2131 = vpop.f32.mrf.mxu0
      %v2132 = vadd.f32 0.0, %v2131
      %2133 = vmatmul.bf16.gmra.mxu0 %v1979
      %v2134 = vpop.f32.mrf.mxu0
      %v2135 = vadd.f32 0.0, %v2134
      %v2136 = vpop.f32.mrf.mxu0
      %v2137 = vadd.f32 0.0, %v2136
      %2138 = vmatmul.bf16.gmra.mxu0 %v1981
      %v2139 = vpop.f32.mrf.mxu0
      %v2140 = vadd.f32 0.0, %v2139
      %v2141 = vpop.f32.mrf.mxu0
      %v2142 = vadd.f32 0.0, %v2141
      %2143 = vmatmul.bf16.gmra.mxu0 %v1983
      %v2144 = vpop.f32.mrf.mxu0
      %v2145 = vadd.f32 0.0, %v2144
      %v2146 = vpop.f32.mrf.mxu0
      %v2147 = vadd.f32 0.0, %v2146
      %2148 = vdwg.mxu0
      %v2149 = vadd.f32 %v1889, %v2060
      %v2150 = vadd.f32 %v1890, %v2062
      %v2151 = vadd.f32 %v1891, %v2065
      %v2152 = vadd.f32 %v1892, %v2067
      %v2153 = vadd.f32 %v1893, %v2070
      %v2154 = vadd.f32 %v1894, %v2072
      %v2155 = vadd.f32 %v1895, %v2075
      %v2156 = vadd.f32 %v1896, %v2077
      %v2157 = vadd.f32 %v1897, %v2080
      %v2158 = vadd.f32 %v1898, %v2082
      %v2159 = vadd.f32 %v1899, %v2085
      %v2160 = vadd.f32 %v1900, %v2087
      %v2161 = vadd.f32 %v1901, %v2090
      %v2162 = vadd.f32 %v1902, %v2092
      %v2163 = vadd.f32 %v1903, %v2095
      %v2164 = vadd.f32 %v1904, %v2097
      %v2165 = vadd.f32 %v1905, %v2100
      %v2166 = vadd.f32 %v1906, %v2102
      %v2167 = vadd.f32 %v1907, %v2105
      %v2168 = vadd.f32 %v1908, %v2107
      %v2169 = vadd.f32 %v1909, %v2110
      %v2170 = vadd.f32 %v1910, %v2112
      %v2171 = vadd.f32 %v1911, %v2115
      %v2172 = vadd.f32 %v1912, %v2117
      %v2173 = vadd.f32 %v1913, %v2120
      %v2174 = vadd.f32 %v1914, %v2122
      %v2175 = vadd.f32 %v1915, %v2125
      %v2176 = vadd.f32 %v1916, %v2127
      %v2177 = vadd.f32 %v1917, %v2130
      %v2178 = vadd.f32 %v1918, %v2132
      %v2179 = vadd.f32 %v1919, %v2135
      %v2180 = vadd.f32 %v1920, %v2137
      %v2181 = vadd.f32 %v1921, %v2140
      %v2182 = vadd.f32 %v1922, %v2142
      %v2183 = vadd.f32 %v1923, %v2145
      %v2184 = vadd.f32 %v1924, %v2147
      %v2185 = vld [vmem:[%s231 + $0x10] sm:$0xc]
      %v2186 = vld [vmem:[%s231 + $0x14] sm:$0xf]
      %v2187 = vld [vmem:[%s231 + $0x18] sm:$0xf]
      %v2188 = vld [vmem:[%s231 + $0x1c] sm:$0xf]
      %v2189 = vld [vmem:[%s231 + $0x20] sm:$0xf]
      %v2190 = vld [vmem:[%s231 + $0x24] sm:$0xf]
      %v2191 = vld [vmem:[%s231 + $0x28] sm:$0xf]
      %v2192 = vld [vmem:[%s231 + $0x2c] sm:$0xf]
      %v2193 = vld [vmem:[%s231 + $0x30] sm:$0xf]
      %v2194 = vld [vmem:[%s231 + $0x34] sm:$0xf]
      %v2195 = vld [vmem:[%s231 + $0x38] sm:$0xf]
      %v2196 = vld [vmem:[%s231 + $0x3c] sm:$0xf]
      %v2197 = vld [vmem:[%s231 + $0x40] sm:$0xf]
      %v2198 = vld [vmem:[%s231 + $0x44] sm:$0xf]
      %v2199 = vld [vmem:[%s231 + $0x48] sm:$0xf]
      %v2200 = vld [vmem:[%s231 + $0x4c] sm:$0xf]
      %v2201 = vld [vmem:[%s231 + $0x50] sm:$0xf]
      %v2202 = vld [vmem:[%s231 + $0x54] sm:$0xf]
      %v2203 = vld [vmem:[%s231 + $0x58] sm:$0xf]
      %v2204 = vld [vmem:[%s231 + $0x5c] sm:$0xf]
      %v2205 = vld [vmem:[%s231 + $0x60] sm:$0xf]
      %v2206 = vld [vmem:[%s231 + $0x64] sm:$0xf]
      %v2207 = vld [vmem:[%s231 + $0x68] sm:$0xf]
      %v2208 = vld [vmem:[%s231 + $0x6c] sm:$0xf]
      %v2209 = vld [vmem:[%s231 + $0x70] sm:$0xf]
      %v2210 = vld [vmem:[%s231 + $0x74] sm:$0xf]
      %v2211 = vld [vmem:[%s231 + $0x78] sm:$0xf]
      %v2212 = vld [vmem:[%s231 + $0x7c] sm:$0xf]
      %v2213 = vld [vmem:[%s231 + $0x80] sm:$0xf]
      %v2214 = vld [vmem:[%s231 + $0x84] sm:$0xf]
      %v2215 = vld [vmem:[%s231 + $0x88] sm:$0xf]
      %v2216 = vld [vmem:[%s231 + $0x8c] sm:$0xf]
      %v2217 = vld [vmem:[%s231 + $0x90] sm:$0xf]
      %v2218 = vld [vmem:[%s231 + $0x94] sm:$0xf]
      %v2219 = vld [vmem:[%s231 + $0x98] sm:$0xf]
      %v2220 = vld [vmem:[%s231 + $0x9c] sm:$0xf]
      %v2221 = vld [vmem:[%s231 + $0xa0] sm:$0x3]
      %s2222 = scalar_lea.vmem %s235, 384
      %v2223 = vld [vmem:[%s2222] sm:$0xf]
      %v2224 = vld [vmem:[%s2222 + $0x4] sm:$0xf]
      %v2225 = vld [vmem:[%s2222 + $0x8] sm:$0xf]
      %v2226 = vld [vmem:[%s2222 + $0xc] sm:$0xf]
      %v2227 = vld [vmem:[%s2222 + $0x10] sm:$0xf]
      %v2228 = vld [vmem:[%s2222 + $0x14] sm:$0xf]
      %v2229 = vld [vmem:[%s2222 + $0x18] sm:$0xf]
      %v2230 = vld [vmem:[%s2222 + $0x1c] sm:$0xf]
      %v2231 = vld [vmem:[%s2222 + $0x20] sm:$0xf]
      %v2232 = vld [vmem:[%s2222 + $0x24] sm:$0xf]
      %v2233 = vld [vmem:[%s2222 + $0x28] sm:$0xf]
      %v2234 = vld [vmem:[%s2222 + $0x2c] sm:$0xf]
      %v2235 = vld [vmem:[%s2222 + $0x30] sm:$0xf]
      %v2236 = vld [vmem:[%s2222 + $0x34] sm:$0xf]
      %v2237 = vld [vmem:[%s2222 + $0x38] sm:$0xf]
      %v2238 = vld [vmem:[%s2222 + $0x3c] sm:$0xf]
      %v2276 = vunpack.c.l.b16 %v2185
      %v2277 = vunpack.c.l.b16 %v2186
      %v2278 = vunpack.c.l.b16 %v2187
      %v2279 = vunpack.c.l.b16 %v2188
      %v2280 = vunpack.c.l.b16 %v2189
      %v2281 = vunpack.c.l.b16 %v2190
      %v2282 = vunpack.c.l.b16 %v2191
      %v2283 = vunpack.c.l.b16 %v2192
      %v2284 = vunpack.c.l.b16 %v2193
      %v2285 = vunpack.c.l.b16 %v2194
      %v2286 = vunpack.c.l.b16 %v2195
      %v2287 = vunpack.c.l.b16 %v2196
      %v2288 = vunpack.c.l.b16 %v2197
      %v2289 = vunpack.c.l.b16 %v2198
      %v2290 = vunpack.c.l.b16 %v2199
      %v2291 = vunpack.c.l.b16 %v2200
      %v2292 = vunpack.c.l.b16 %v2201
      %v2293 = vunpack.c.l.b16 %v2202
      %v2294 = vunpack.c.l.b16 %v2203
      %v2295 = vunpack.c.l.b16 %v2204
      %v2296 = vunpack.c.l.b16 %v2205
      %v2297 = vunpack.c.l.b16 %v2206
      %v2298 = vunpack.c.l.b16 %v2207
      %v2299 = vunpack.c.l.b16 %v2208
      %v2300 = vunpack.c.l.b16 %v2209
      %v2301 = vunpack.c.l.b16 %v2210
      %v2302 = vunpack.c.l.b16 %v2211
      %v2303 = vunpack.c.l.b16 %v2212
      %v2304 = vunpack.c.l.b16 %v2213
      %v2305 = vunpack.c.l.b16 %v2214
      %v2306 = vunpack.c.l.b16 %v2215
      %v2307 = vunpack.c.l.b16 %v2216
      %v2308 = vunpack.c.l.b16 %v2217
      %v2309 = vunpack.c.l.b16 %v2218
      %v2310 = vunpack.c.l.b16 %v2219
      %v2311 = vunpack.c.l.b16 %v2220
      %v2312 = vunpack.c.l.b16 %v2221
      %v2313 = vpack.c.b16 %v2277, %v2276
      %v2314 = vpack.c.b16 %v2279, %v2278
      %v2315 = vpack.c.b16 %v2281, %v2280
      %v2316 = vpack.c.b16 %v2283, %v2282
      %v2317 = vpack.c.b16 %v2285, %v2284
      %v2318 = vpack.c.b16 %v2287, %v2286
      %v2319 = vpack.c.b16 %v2289, %v2288
      %v2320 = vpack.c.b16 %v2291, %v2290
      %v2321 = vpack.c.b16 %v2293, %v2292
      %v2322 = vpack.c.b16 %v2295, %v2294
      %v2323 = vpack.c.b16 %v2297, %v2296
      %v2324 = vpack.c.b16 %v2299, %v2298
      %v2325 = vpack.c.b16 %v2301, %v2300
      %v2326 = vpack.c.b16 %v2303, %v2302
      %v2327 = vpack.c.b16 %v2305, %v2304
      %v2328 = vpack.c.b16 %v2307, %v2306
      %v2329 = vpack.c.b16 %v2309, %v2308
      %v2330 = vpack.c.b16 %v2311, %v2310
      %v2331 = vpack.c.b16 %v2312, %v2312
      %v2332 = vrot.slane %v2313, 2
      %v2333 = vrot.slane %v2314, 2
      %v2334 = vsel %vm1946, %v2332, %v2333
      %v2335 = vrot.slane %v2315, 2
      %v2336 = vsel %vm1946, %v2333, %v2335
      %v2337 = vrot.slane %v2316, 2
      %v2338 = vsel %vm1946, %v2335, %v2337
      %v2339 = vrot.slane %v2317, 2
      %v2340 = vsel %vm1946, %v2337, %v2339
      %v2341 = vrot.slane %v2318, 2
      %v2342 = vsel %vm1946, %v2339, %v2341
      %v2343 = vrot.slane %v2319, 2
      %v2344 = vsel %vm1946, %v2341, %v2343
      %v2345 = vrot.slane %v2320, 2
      %v2346 = vsel %vm1946, %v2343, %v2345
      %v2347 = vrot.slane %v2321, 2
      %v2348 = vsel %vm1946, %v2345, %v2347
      %v2349 = vrot.slane %v2322, 2
      %v2350 = vsel %vm1946, %v2347, %v2349
      %v2351 = vrot.slane %v2323, 2
      %v2352 = vsel %vm1946, %v2349, %v2351
      %v2353 = vrot.slane %v2324, 2
      %v2354 = vsel %vm1946, %v2351, %v2353
      %v2355 = vrot.slane %v2325, 2
      %v2356 = vsel %vm1946, %v2353, %v2355
      %v2357 = vrot.slane %v2326, 2
      %v2358 = vsel %vm1946, %v2355, %v2357
      %v2359 = vrot.slane %v2327, 2
      %v2360 = vsel %vm1946, %v2357, %v2359
      %v2361 = vrot.slane %v2328, 2
      %v2362 = vsel %vm1946, %v2359, %v2361
      %v2363 = vrot.slane %v2329, 2
      %v2364 = vsel %vm1946, %v2361, %v2363
      %v2365 = vrot.slane %v2330, 2
      %v2366 = vsel %vm1946, %v2363, %v2365
      %v2367 = vrot.slane %v2331, 2
      %v2368 = vsel %vm1946, %v2365, %v2367
      %v2403 = vunpack.c.l.b16 %v2223
      %v2404 = vunpack.c.l.b16 %v2224
      %v2405 = vunpack.c.l.b16 %v2225
      %v2406 = vunpack.c.l.b16 %v2226
      %v2407 = vunpack.c.l.b16 %v2227
      %v2408 = vunpack.c.l.b16 %v2228
      %v2409 = vunpack.c.l.b16 %v2229
      %v2410 = vunpack.c.l.b16 %v2230
      %v2411 = vunpack.c.l.b16 %v2231
      %v2412 = vunpack.c.l.b16 %v2232
      %v2413 = vunpack.c.l.b16 %v2233
      %v2414 = vunpack.c.l.b16 %v2234
      %v2415 = vunpack.c.l.b16 %v2235
      %v2416 = vunpack.c.l.b16 %v2236
      %v2417 = vunpack.c.l.b16 %v2237
      %v2418 = vunpack.c.l.b16 %v2238
      %v2419 = vpack.c.b16 %v2404, %v2403
      %v2420 = vpack.c.b16 %v2406, %v2405
      %v2421 = vpack.c.b16 %v2408, %v2407
      %v2422 = vpack.c.b16 %v2410, %v2409
      %v2423 = vpack.c.b16 %v2412, %v2411
      %v2424 = vpack.c.b16 %v2414, %v2413
      %v2425 = vpack.c.b16 %v2416, %v2415
      %v2426 = vpack.c.b16 %v2418, %v2417
      %2435 = vmatpush.bf16.msra.mxu0 %v2426
      %2436 = vmatpush.bf16.msra.mxu0 %v2425
      %2437 = vmatpush.bf16.msra.mxu0 %v2424
      %2438 = vmatpush.bf16.msra.mxu0 %v2423
      %2439 = vmatpush.bf16.msra.mxu0 %v2422
      %2440 = vmatpush.bf16.msra.mxu0 %v2421
      %2441 = vmatpush.bf16.msra.mxu0 %v2420
      %2442 = vmatpush.bf16.msra.mxu0 %v2419
      %2443 = vmatmul.bf16.gmra.mxu0 %v2334
      %v2444 = vpop.f32.mrf.mxu0
      %v2445 = vadd.f32 0.0, %v2444
      %v2446 = vpop.f32.mrf.mxu0
      %v2447 = vadd.f32 0.0, %v2446
      %2448 = vmatmul.bf16.gmra.mxu0 %v2336
      %v2449 = vpop.f32.mrf.mxu0
      %v2450 = vadd.f32 0.0, %v2449
      %v2451 = vpop.f32.mrf.mxu0
      %v2452 = vadd.f32 0.0, %v2451
      %2453 = vmatmul.bf16.gmra.mxu0 %v2338
      %v2454 = vpop.f32.mrf.mxu0
      %v2455 = vadd.f32 0.0, %v2454
      %v2456 = vpop.f32.mrf.mxu0
      %v2457 = vadd.f32 0.0, %v2456
      %2458 = vmatmul.bf16.gmra.mxu0 %v2340
      %v2459 = vpop.f32.mrf.mxu0
      %v2460 = vadd.f32 0.0, %v2459
      %v2461 = vpop.f32.mrf.mxu0
      %v2462 = vadd.f32 0.0, %v2461
      %2463 = vmatmul.bf16.gmra.mxu0 %v2342
      %v2464 = vpop.f32.mrf.mxu0
      %v2465 = vadd.f32 0.0, %v2464
      %v2466 = vpop.f32.mrf.mxu0
      %v2467 = vadd.f32 0.0, %v2466
      %2468 = vmatmul.bf16.gmra.mxu0 %v2344
      %v2469 = vpop.f32.mrf.mxu0
      %v2470 = vadd.f32 0.0, %v2469
      %v2471 = vpop.f32.mrf.mxu0
      %v2472 = vadd.f32 0.0, %v2471
      %2473 = vmatmul.bf16.gmra.mxu0 %v2346
      %v2474 = vpop.f32.mrf.mxu0
      %v2475 = vadd.f32 0.0, %v2474
      %v2476 = vpop.f32.mrf.mxu0
      %v2477 = vadd.f32 0.0, %v2476
      %2478 = vmatmul.bf16.gmra.mxu0 %v2348
      %v2479 = vpop.f32.mrf.mxu0
      %v2480 = vadd.f32 0.0, %v2479
      %v2481 = vpop.f32.mrf.mxu0
      %v2482 = vadd.f32 0.0, %v2481
      %2483 = vmatmul.bf16.gmra.mxu0 %v2350
      %v2484 = vpop.f32.mrf.mxu0
      %v2485 = vadd.f32 0.0, %v2484
      %v2486 = vpop.f32.mrf.mxu0
      %v2487 = vadd.f32 0.0, %v2486
      %2488 = vmatmul.bf16.gmra.mxu0 %v2352
      %v2489 = vpop.f32.mrf.mxu0
      %v2490 = vadd.f32 0.0, %v2489
      %v2491 = vpop.f32.mrf.mxu0
      %v2492 = vadd.f32 0.0, %v2491
      %2493 = vmatmul.bf16.gmra.mxu0 %v2354
      %v2494 = vpop.f32.mrf.mxu0
      %v2495 = vadd.f32 0.0, %v2494
      %v2496 = vpop.f32.mrf.mxu0
      %v2497 = vadd.f32 0.0, %v2496
      %2498 = vmatmul.bf16.gmra.mxu0 %v2356
      %v2499 = vpop.f32.mrf.mxu0
      %v2500 = vadd.f32 0.0, %v2499
      %v2501 = vpop.f32.mrf.mxu0
      %v2502 = vadd.f32 0.0, %v2501
      %2503 = vmatmul.bf16.gmra.mxu0 %v2358
      %v2504 = vpop.f32.mrf.mxu0
      %v2505 = vadd.f32 0.0, %v2504
      %v2506 = vpop.f32.mrf.mxu0
      %v2507 = vadd.f32 0.0, %v2506
      %2508 = vmatmul.bf16.gmra.mxu0 %v2360
      %v2509 = vpop.f32.mrf.mxu0
      %v2510 = vadd.f32 0.0, %v2509
      %v2511 = vpop.f32.mrf.mxu0
      %v2512 = vadd.f32 0.0, %v2511
      %2513 = vmatmul.bf16.gmra.mxu0 %v2362
      %v2514 = vpop.f32.mrf.mxu0
      %v2515 = vadd.f32 0.0, %v2514
      %v2516 = vpop.f32.mrf.mxu0
      %v2517 = vadd.f32 0.0, %v2516
      %2518 = vmatmul.bf16.gmra.mxu0 %v2364
      %v2519 = vpop.f32.mrf.mxu0
      %v2520 = vadd.f32 0.0, %v2519
      %v2521 = vpop.f32.mrf.mxu0
      %v2522 = vadd.f32 0.0, %v2521
      %2523 = vmatmul.bf16.gmra.mxu0 %v2366
      %v2524 = vpop.f32.mrf.mxu0
      %v2525 = vadd.f32 0.0, %v2524
      %v2526 = vpop.f32.mrf.mxu0
      %v2527 = vadd.f32 0.0, %v2526
      %2528 = vmatmul.bf16.gmra.mxu0 %v2368
      %v2529 = vpop.f32.mrf.mxu0
      %v2530 = vadd.f32 0.0, %v2529
      %v2531 = vpop.f32.mrf.mxu0
      %v2532 = vadd.f32 0.0, %v2531
      %2533 = vdwg.mxu0
      %v2534 = vadd.f32 %v2149, %v2445
      %v2535 = vadd.f32 %v2150, %v2447
      %v2536 = vadd.f32 %v2151, %v2450
      %v2537 = vadd.f32 %v2152, %v2452
      %v2538 = vadd.f32 %v2153, %v2455
      %v2539 = vadd.f32 %v2154, %v2457
      %v2540 = vadd.f32 %v2155, %v2460
      %v2541 = vadd.f32 %v2156, %v2462
      %v2542 = vadd.f32 %v2157, %v2465
      %v2543 = vadd.f32 %v2158, %v2467
      %v2544 = vadd.f32 %v2159, %v2470
      %v2545 = vadd.f32 %v2160, %v2472
      %v2546 = vadd.f32 %v2161, %v2475
      %v2547 = vadd.f32 %v2162, %v2477
      %v2548 = vadd.f32 %v2163, %v2480
      %v2549 = vadd.f32 %v2164, %v2482
      %v2550 = vadd.f32 %v2165, %v2485
      %v2551 = vadd.f32 %v2166, %v2487
      %v2552 = vadd.f32 %v2167, %v2490
      %v2553 = vadd.f32 %v2168, %v2492
      %v2554 = vadd.f32 %v2169, %v2495
      %v2555 = vadd.f32 %v2170, %v2497
      %v2556 = vadd.f32 %v2171, %v2500
      %v2557 = vadd.f32 %v2172, %v2502
      %v2558 = vadd.f32 %v2173, %v2505
      %v2559 = vadd.f32 %v2174, %v2507
      %v2560 = vadd.f32 %v2175, %v2510
      %v2561 = vadd.f32 %v2176, %v2512
      %v2562 = vadd.f32 %v2177, %v2515
      %v2563 = vadd.f32 %v2178, %v2517
      %v2564 = vadd.f32 %v2179, %v2520
      %v2565 = vadd.f32 %v2180, %v2522
      %v2566 = vadd.f32 %v2181, %v2525
      %v2567 = vadd.f32 %v2182, %v2527
      %v2568 = vadd.f32 %v2183, %v2530
      %v2569 = vadd.f32 %v2184, %v2532
      %v2570 = vld [vmem:[%s231 + $0xa0] sm:$0x7]
      %s2571 = scalar_lea.vmem %s235, 448
      %v2572 = vld [vmem:[%s2571] sm:$0xf]
      %v2573 = vld [vmem:[%s2571 + $0x4] sm:$0xf]
      %v2574 = vld [vmem:[%s2571 + $0x8] sm:$0xf]
      %v2575 = vld [vmem:[%s2571 + $0xc] sm:$0xf]
      %v2576 = vld [vmem:[%s2571 + $0x10] sm:$0xf]
      %v2577 = vld [vmem:[%s2571 + $0x14] sm:$0xf]
      %v2578 = vld [vmem:[%s2571 + $0x18] sm:$0xf]
      %v2579 = vld [vmem:[%s2571 + $0x1c] sm:$0xf]
      %v2580 = vld [vmem:[%s2571 + $0x20] sm:$0xf]
      %v2581 = vld [vmem:[%s2571 + $0x24] sm:$0xf]
      %v2582 = vld [vmem:[%s2571 + $0x28] sm:$0xf]
      %v2583 = vld [vmem:[%s2571 + $0x2c] sm:$0xf]
      %v2584 = vld [vmem:[%s2571 + $0x30] sm:$0xf]
      %v2585 = vld [vmem:[%s2571 + $0x34] sm:$0xf]
      %v2586 = vld [vmem:[%s2571 + $0x38] sm:$0xf]
      %v2587 = vld [vmem:[%s2571 + $0x3c] sm:$0xf]
      %v2589 = vunpack.c.l.b16 %v2570
      %v2590 = vpack.c.b16 %v2589, %v2589
      %vm2591 = vsmask.f32 5376
      %v2593 = vshrl.u32 %v2313, 16
      %v2595 = vrot.slane %v2593, 2
      %v2596 = vshll.u32 %v2313, 16
      %v2598 = vrot.slane %v2596, 3
      %v2599 = vor.u32 %v2595, %v2598
      %v2601 = vshrl.u32 %v2314, 16
      %v2603 = vrot.slane %v2601, 2
      %v2604 = vshll.u32 %v2314, 16
      %v2606 = vrot.slane %v2604, 3
      %v2607 = vor.u32 %v2603, %v2606
      %v2608 = vsel %vm2591, %v2599, %v2607
      %v2610 = vshrl.u32 %v2315, 16
      %v2612 = vrot.slane %v2610, 2
      %v2613 = vshll.u32 %v2315, 16
      %v2615 = vrot.slane %v2613, 3
      %v2616 = vor.u32 %v2612, %v2615
      %v2617 = vsel %vm2591, %v2607, %v2616
      %v2619 = vshrl.u32 %v2316, 16
      %v2621 = vrot.slane %v2619, 2
      %v2622 = vshll.u32 %v2316, 16
      %v2624 = vrot.slane %v2622, 3
      %v2625 = vor.u32 %v2621, %v2624
      %v2626 = vsel %vm2591, %v2616, %v2625
      %v2628 = vshrl.u32 %v2317, 16
      %v2630 = vrot.slane %v2628, 2
      %v2631 = vshll.u32 %v2317, 16
      %v2633 = vrot.slane %v2631, 3
      %v2634 = vor.u32 %v2630, %v2633
      %v2635 = vsel %vm2591, %v2625, %v2634
      %v2637 = vshrl.u32 %v2318, 16
      %v2639 = vrot.slane %v2637, 2
      %v2640 = vshll.u32 %v2318, 16
      %v2642 = vrot.slane %v2640, 3
      %v2643 = vor.u32 %v2639, %v2642
      %v2644 = vsel %vm2591, %v2634, %v2643
      %v2646 = vshrl.u32 %v2319, 16
      %v2648 = vrot.slane %v2646, 2
      %v2649 = vshll.u32 %v2319, 16
      %v2651 = vrot.slane %v2649, 3
      %v2652 = vor.u32 %v2648, %v2651
      %v2653 = vsel %vm2591, %v2643, %v2652
      %v2655 = vshrl.u32 %v2320, 16
      %v2657 = vrot.slane %v2655, 2
      %v2658 = vshll.u32 %v2320, 16
      %v2660 = vrot.slane %v2658, 3
      %v2661 = vor.u32 %v2657, %v2660
      %v2662 = vsel %vm2591, %v2652, %v2661
      %v2664 = vshrl.u32 %v2321, 16
      %v2666 = vrot.slane %v2664, 2
      %v2667 = vshll.u32 %v2321, 16
      %v2669 = vrot.slane %v2667, 3
      %v2670 = vor.u32 %v2666, %v2669
      %v2671 = vsel %vm2591, %v2661, %v2670
      %v2673 = vshrl.u32 %v2322, 16
      %v2675 = vrot.slane %v2673, 2
      %v2676 = vshll.u32 %v2322, 16
      %v2678 = vrot.slane %v2676, 3
      %v2679 = vor.u32 %v2675, %v2678
      %v2680 = vsel %vm2591, %v2670, %v2679
      %v2682 = vshrl.u32 %v2323, 16
      %v2684 = vrot.slane %v2682, 2
      %v2685 = vshll.u32 %v2323, 16
      %v2687 = vrot.slane %v2685, 3
      %v2688 = vor.u32 %v2684, %v2687
      %v2689 = vsel %vm2591, %v2679, %v2688
      %v2691 = vshrl.u32 %v2324, 16
      %v2693 = vrot.slane %v2691, 2
      %v2694 = vshll.u32 %v2324, 16
      %v2696 = vrot.slane %v2694, 3
      %v2697 = vor.u32 %v2693, %v2696
      %v2698 = vsel %vm2591, %v2688, %v2697
      %v2700 = vshrl.u32 %v2325, 16
      %v2702 = vrot.slane %v2700, 2
      %v2703 = vshll.u32 %v2325, 16
      %v2705 = vrot.slane %v2703, 3
      %v2706 = vor.u32 %v2702, %v2705
      %v2707 = vsel %vm2591, %v2697, %v2706
      %v2709 = vshrl.u32 %v2326, 16
      %v2711 = vrot.slane %v2709, 2
      %v2712 = vshll.u32 %v2326, 16
      %v2714 = vrot.slane %v2712, 3
      %v2715 = vor.u32 %v2711, %v2714
      %v2716 = vsel %vm2591, %v2706, %v2715
      %v2718 = vshrl.u32 %v2327, 16
      %v2720 = vrot.slane %v2718, 2
      %v2721 = vshll.u32 %v2327, 16
      %v2723 = vrot.slane %v2721, 3
      %v2724 = vor.u32 %v2720, %v2723
      %v2725 = vsel %vm2591, %v2715, %v2724
      %v2727 = vshrl.u32 %v2328, 16
      %v2729 = vrot.slane %v2727, 2
      %v2730 = vshll.u32 %v2328, 16
      %v2732 = vrot.slane %v2730, 3
      %v2733 = vor.u32 %v2729, %v2732
      %v2734 = vsel %vm2591, %v2724, %v2733
      %v2736 = vshrl.u32 %v2329, 16
      %v2738 = vrot.slane %v2736, 2
      %v2739 = vshll.u32 %v2329, 16
      %v2741 = vrot.slane %v2739, 3
      %v2742 = vor.u32 %v2738, %v2741
      %v2743 = vsel %vm2591, %v2733, %v2742
      %v2745 = vshrl.u32 %v2330, 16
      %v2747 = vrot.slane %v2745, 2
      %v2748 = vshll.u32 %v2330, 16
      %v2750 = vrot.slane %v2748, 3
      %v2751 = vor.u32 %v2747, %v2750
      %v2752 = vsel %vm2591, %v2742, %v2751
      %v2754 = vshrl.u32 %v2590, 16
      %v2756 = vrot.slane %v2754, 2
      %v2757 = vshll.u32 %v2590, 16
      %v2759 = vrot.slane %v2757, 3
      %v2760 = vor.u32 %v2756, %v2759
      %v2761 = vsel %vm2591, %v2751, %v2760
      %v2796 = vunpack.c.l.b16 %v2572
      %v2797 = vunpack.c.l.b16 %v2573
      %v2798 = vunpack.c.l.b16 %v2574
      %v2799 = vunpack.c.l.b16 %v2575
      %v2800 = vunpack.c.l.b16 %v2576
      %v2801 = vunpack.c.l.b16 %v2577
      %v2802 = vunpack.c.l.b16 %v2578
      %v2803 = vunpack.c.l.b16 %v2579
      %v2804 = vunpack.c.l.b16 %v2580
      %v2805 = vunpack.c.l.b16 %v2581
      %v2806 = vunpack.c.l.b16 %v2582
      %v2807 = vunpack.c.l.b16 %v2583
      %v2808 = vunpack.c.l.b16 %v2584
      %v2809 = vunpack.c.l.b16 %v2585
      %v2810 = vunpack.c.l.b16 %v2586
      %v2811 = vunpack.c.l.b16 %v2587
      %v2812 = vpack.c.b16 %v2797, %v2796
      %v2813 = vpack.c.b16 %v2799, %v2798
      %v2814 = vpack.c.b16 %v2801, %v2800
      %v2815 = vpack.c.b16 %v2803, %v2802
      %v2816 = vpack.c.b16 %v2805, %v2804
      %v2817 = vpack.c.b16 %v2807, %v2806
      %v2818 = vpack.c.b16 %v2809, %v2808
      %v2819 = vpack.c.b16 %v2811, %v2810
      %2828 = vmatpush.bf16.msra.mxu0 %v2819
      %2829 = vmatpush.bf16.msra.mxu0 %v2818
      %2830 = vmatpush.bf16.msra.mxu0 %v2817
      %2831 = vmatpush.bf16.msra.mxu0 %v2816
      %2832 = vmatpush.bf16.msra.mxu0 %v2815
      %2833 = vmatpush.bf16.msra.mxu0 %v2814
      %2834 = vmatpush.bf16.msra.mxu0 %v2813
      %2835 = vmatpush.bf16.msra.mxu0 %v2812
      %2836 = vmatmul.bf16.gmra.mxu0 %v2608
      %v2837 = vpop.f32.mrf.mxu0
      %v2838 = vadd.f32 0.0, %v2837
      %v2839 = vpop.f32.mrf.mxu0
      %v2840 = vadd.f32 0.0, %v2839
      %2841 = vmatmul.bf16.gmra.mxu0 %v2617
      %v2842 = vpop.f32.mrf.mxu0
      %v2843 = vadd.f32 0.0, %v2842
      %v2844 = vpop.f32.mrf.mxu0
      %v2845 = vadd.f32 0.0, %v2844
      %2846 = vmatmul.bf16.gmra.mxu0 %v2626
      %v2847 = vpop.f32.mrf.mxu0
      %v2848 = vadd.f32 0.0, %v2847
      %v2849 = vpop.f32.mrf.mxu0
      %v2850 = vadd.f32 0.0, %v2849
      %2851 = vmatmul.bf16.gmra.mxu0 %v2635
      %v2852 = vpop.f32.mrf.mxu0
      %v2853 = vadd.f32 0.0, %v2852
      %v2854 = vpop.f32.mrf.mxu0
      %v2855 = vadd.f32 0.0, %v2854
      %2856 = vmatmul.bf16.gmra.mxu0 %v2644
      %v2857 = vpop.f32.mrf.mxu0
      %v2858 = vadd.f32 0.0, %v2857
      %v2859 = vpop.f32.mrf.mxu0
      %v2860 = vadd.f32 0.0, %v2859
      %2861 = vmatmul.bf16.gmra.mxu0 %v2653
      %v2862 = vpop.f32.mrf.mxu0
      %v2863 = vadd.f32 0.0, %v2862
      %v2864 = vpop.f32.mrf.mxu0
      %v2865 = vadd.f32 0.0, %v2864
      %2866 = vmatmul.bf16.gmra.mxu0 %v2662
      %v2867 = vpop.f32.mrf.mxu0
      %v2868 = vadd.f32 0.0, %v2867
      %v2869 = vpop.f32.mrf.mxu0
      %v2870 = vadd.f32 0.0, %v2869
      %2871 = vmatmul.bf16.gmra.mxu0 %v2671
      %v2872 = vpop.f32.mrf.mxu0
      %v2873 = vadd.f32 0.0, %v2872
      %v2874 = vpop.f32.mrf.mxu0
      %v2875 = vadd.f32 0.0, %v2874
      %2876 = vmatmul.bf16.gmra.mxu0 %v2680
      %v2877 = vpop.f32.mrf.mxu0
      %v2878 = vadd.f32 0.0, %v2877
      %v2879 = vpop.f32.mrf.mxu0
      %v2880 = vadd.f32 0.0, %v2879
      %2881 = vmatmul.bf16.gmra.mxu0 %v2689
      %v2882 = vpop.f32.mrf.mxu0
      %v2883 = vadd.f32 0.0, %v2882
      %v2884 = vpop.f32.mrf.mxu0
      %v2885 = vadd.f32 0.0, %v2884
      %2886 = vmatmul.bf16.gmra.mxu0 %v2698
      %v2887 = vpop.f32.mrf.mxu0
      %v2888 = vadd.f32 0.0, %v2887
      %v2889 = vpop.f32.mrf.mxu0
      %v2890 = vadd.f32 0.0, %v2889
      %2891 = vmatmul.bf16.gmra.mxu0 %v2707
      %v2892 = vpop.f32.mrf.mxu0
      %v2893 = vadd.f32 0.0, %v2892
      %v2894 = vpop.f32.mrf.mxu0
      %v2895 = vadd.f32 0.0, %v2894
      %2896 = vmatmul.bf16.gmra.mxu0 %v2716
      %v2897 = vpop.f32.mrf.mxu0
      %v2898 = vadd.f32 0.0, %v2897
      %v2899 = vpop.f32.mrf.mxu0
      %v2900 = vadd.f32 0.0, %v2899
      %2901 = vmatmul.bf16.gmra.mxu0 %v2725
      %v2902 = vpop.f32.mrf.mxu0
      %v2903 = vadd.f32 0.0, %v2902
      %v2904 = vpop.f32.mrf.mxu0
      %v2905 = vadd.f32 0.0, %v2904
      %2906 = vmatmul.bf16.gmra.mxu0 %v2734
      %v2907 = vpop.f32.mrf.mxu0
      %v2908 = vadd.f32 0.0, %v2907
      %v2909 = vpop.f32.mrf.mxu0
      %v2910 = vadd.f32 0.0, %v2909
      %2911 = vmatmul.bf16.gmra.mxu0 %v2743
      %v2912 = vpop.f32.mrf.mxu0
      %v2913 = vadd.f32 0.0, %v2912
      %v2914 = vpop.f32.mrf.mxu0
      %v2915 = vadd.f32 0.0, %v2914
      %2916 = vmatmul.bf16.gmra.mxu0 %v2752
      %v2917 = vpop.f32.mrf.mxu0
      %v2918 = vadd.f32 0.0, %v2917
      %v2919 = vpop.f32.mrf.mxu0
      %v2920 = vadd.f32 0.0, %v2919
      %2921 = vmatmul.bf16.gmra.mxu0 %v2761
      %v2922 = vpop.f32.mrf.mxu0
      %v2923 = vadd.f32 0.0, %v2922
      %v2924 = vpop.f32.mrf.mxu0
      %v2925 = vadd.f32 0.0, %v2924
      %2926 = vdwg.mxu0
      %v2927 = vadd.f32 %v2534, %v2838
      %v2928 = vadd.f32 %v2535, %v2840
      %v2929 = vadd.f32 %v2536, %v2843
      %v2930 = vadd.f32 %v2537, %v2845
      %v2931 = vadd.f32 %v2538, %v2848
      %v2932 = vadd.f32 %v2539, %v2850
      %v2933 = vadd.f32 %v2540, %v2853
      %v2934 = vadd.f32 %v2541, %v2855
      %v2935 = vadd.f32 %v2542, %v2858
      %v2936 = vadd.f32 %v2543, %v2860
      %v2937 = vadd.f32 %v2544, %v2863
      %v2938 = vadd.f32 %v2545, %v2865
      %v2939 = vadd.f32 %v2546, %v2868
      %v2940 = vadd.f32 %v2547, %v2870
      %v2941 = vadd.f32 %v2548, %v2873
      %v2942 = vadd.f32 %v2549, %v2875
      %v2943 = vadd.f32 %v2550, %v2878
      %v2944 = vadd.f32 %v2551, %v2880
      %v2945 = vadd.f32 %v2552, %v2883
      %v2946 = vadd.f32 %v2553, %v2885
      %v2947 = vadd.f32 %v2554, %v2888
      %v2948 = vadd.f32 %v2555, %v2890
      %v2949 = vadd.f32 %v2556, %v2893
      %v2950 = vadd.f32 %v2557, %v2895
      %v2951 = vadd.f32 %v2558, %v2898
      %v2952 = vadd.f32 %v2559, %v2900
      %v2953 = vadd.f32 %v2560, %v2903
      %v2954 = vadd.f32 %v2561, %v2905
      %v2955 = vadd.f32 %v2562, %v2908
      %v2956 = vadd.f32 %v2563, %v2910
      %v2957 = vadd.f32 %v2564, %v2913
      %v2958 = vadd.f32 %v2565, %v2915
      %v2959 = vadd.f32 %v2566, %v2918
      %v2960 = vadd.f32 %v2567, %v2920
      %v2961 = vadd.f32 %v2568, %v2923
      %v2962 = vadd.f32 %v2569, %v2925
      %v2963 = vld [vmem:[%s231 + $0x10] sm:$0x8]
      %s2964 = scalar_lea.vmem %s235, 512
      %v2965 = vld [vmem:[%s2964] sm:$0xf]
      %v2966 = vld [vmem:[%s2964 + $0x4] sm:$0xf]
      %v2967 = vld [vmem:[%s2964 + $0x8] sm:$0xf]
      %v2968 = vld [vmem:[%s2964 + $0xc] sm:$0xf]
      %v2969 = vld [vmem:[%s2964 + $0x10] sm:$0xf]
      %v2970 = vld [vmem:[%s2964 + $0x14] sm:$0xf]
      %v2971 = vld [vmem:[%s2964 + $0x18] sm:$0xf]
      %v2972 = vld [vmem:[%s2964 + $0x1c] sm:$0xf]
      %v2973 = vld [vmem:[%s2964 + $0x20] sm:$0xf]
      %v2974 = vld [vmem:[%s2964 + $0x24] sm:$0xf]
      %v2975 = vld [vmem:[%s2964 + $0x28] sm:$0xf]
      %v2976 = vld [vmem:[%s2964 + $0x2c] sm:$0xf]
      %v2977 = vld [vmem:[%s2964 + $0x30] sm:$0xf]
      %v2978 = vld [vmem:[%s2964 + $0x34] sm:$0xf]
      %v2979 = vld [vmem:[%s2964 + $0x38] sm:$0xf]
      %v2980 = vld [vmem:[%s2964 + $0x3c] sm:$0xf]
      %v2982 = vunpack.c.l.b16 %v2963
      %v2983 = vpack.c.b16 %v2277, %v2982
      %vm2984 = vcmask 1044480
      %v2985 = vrot.slane %v2983, 3
      %v2986 = vrot.slane %v2314, 3
      %v2987 = vsel %vm2984, %v2985, %v2986
      %v2988 = vrot.slane %v2315, 3
      %v2989 = vsel %vm2984, %v2986, %v2988
      %v2990 = vrot.slane %v2316, 3
      %v2991 = vsel %vm2984, %v2988, %v2990
      %v2992 = vrot.slane %v2317, 3
      %v2993 = vsel %vm2984, %v2990, %v2992
      %v2994 = vrot.slane %v2318, 3
      %v2995 = vsel %vm2984, %v2992, %v2994
      %v2996 = vrot.slane %v2319, 3
      %v2997 = vsel %vm2984, %v2994, %v2996
      %v2998 = vrot.slane %v2320, 3
      %v2999 = vsel %vm2984, %v2996, %v2998
      %v3000 = vrot.slane %v2321, 3
      %v3001 = vsel %vm2984, %v2998, %v3000
      %v3002 = vrot.slane %v2322, 3
      %v3003 = vsel %vm2984, %v3000, %v3002
      %v3004 = vrot.slane %v2323, 3
      %v3005 = vsel %vm2984, %v3002, %v3004
      %v3006 = vrot.slane %v2324, 3
      %v3007 = vsel %vm2984, %v3004, %v3006
      %v3008 = vrot.slane %v2325, 3
      %v3009 = vsel %vm2984, %v3006, %v3008
      %v3010 = vrot.slane %v2326, 3
      %v3011 = vsel %vm2984, %v3008, %v3010
      %v3012 = vrot.slane %v2327, 3
      %v3013 = vsel %vm2984, %v3010, %v3012
      %v3014 = vrot.slane %v2328, 3
      %v3015 = vsel %vm2984, %v3012, %v3014
      %v3016 = vrot.slane %v2329, 3
      %v3017 = vsel %vm2984, %v3014, %v3016
      %v3018 = vrot.slane %v2330, 3
      %v3019 = vsel %vm2984, %v3016, %v3018
      %v3020 = vrot.slane %v2590, 3
      %v3021 = vsel %vm2984, %v3018, %v3020
      %v3056 = vunpack.c.l.b16 %v2965
      %v3057 = vunpack.c.l.b16 %v2966
      %v3058 = vunpack.c.l.b16 %v2967
      %v3059 = vunpack.c.l.b16 %v2968
      %v3060 = vunpack.c.l.b16 %v2969
      %v3061 = vunpack.c.l.b16 %v2970
      %v3062 = vunpack.c.l.b16 %v2971
      %v3063 = vunpack.c.l.b16 %v2972
      %v3064 = vunpack.c.l.b16 %v2973
      %v3065 = vunpack.c.l.b16 %v2974
      %v3066 = vunpack.c.l.b16 %v2975
      %v3067 = vunpack.c.l.b16 %v2976
      %v3068 = vunpack.c.l.b16 %v2977
      %v3069 = vunpack.c.l.b16 %v2978
      %v3070 = vunpack.c.l.b16 %v2979
      %v3071 = vunpack.c.l.b16 %v2980
      %v3072 = vpack.c.b16 %v3057, %v3056
      %v3073 = vpack.c.b16 %v3059, %v3058
      %v3074 = vpack.c.b16 %v3061, %v3060
      %v3075 = vpack.c.b16 %v3063, %v3062
      %v3076 = vpack.c.b16 %v3065, %v3064
      %v3077 = vpack.c.b16 %v3067, %v3066
      %v3078 = vpack.c.b16 %v3069, %v3068
      %v3079 = vpack.c.b16 %v3071, %v3070
      %3088 = vmatpush.bf16.msra.mxu0 %v3079
      %3089 = vmatpush.bf16.msra.mxu0 %v3078
      %3090 = vmatpush.bf16.msra.mxu0 %v3077
      %3091 = vmatpush.bf16.msra.mxu0 %v3076
      %3092 = vmatpush.bf16.msra.mxu0 %v3075
      %3093 = vmatpush.bf16.msra.mxu0 %v3074
      %3094 = vmatpush.bf16.msra.mxu0 %v3073
      %3095 = vmatpush.bf16.msra.mxu0 %v3072
      %3096 = vmatmul.bf16.gmra.mxu0 %v2987
      %v3097 = vpop.f32.mrf.mxu0
      %v3098 = vadd.f32 0.0, %v3097
      %v3099 = vpop.f32.mrf.mxu0
      %v3100 = vadd.f32 0.0, %v3099
      %3101 = vmatmul.bf16.gmra.mxu0 %v2989
      %v3102 = vpop.f32.mrf.mxu0
      %v3103 = vadd.f32 0.0, %v3102
      %v3104 = vpop.f32.mrf.mxu0
      %v3105 = vadd.f32 0.0, %v3104
      %3106 = vmatmul.bf16.gmra.mxu0 %v2991
      %v3107 = vpop.f32.mrf.mxu0
      %v3108 = vadd.f32 0.0, %v3107
      %v3109 = vpop.f32.mrf.mxu0
      %v3110 = vadd.f32 0.0, %v3109
      %3111 = vmatmul.bf16.gmra.mxu0 %v2993
      %v3112 = vpop.f32.mrf.mxu0
      %v3113 = vadd.f32 0.0, %v3112
      %v3114 = vpop.f32.mrf.mxu0
      %v3115 = vadd.f32 0.0, %v3114
      %3116 = vmatmul.bf16.gmra.mxu0 %v2995
      %v3117 = vpop.f32.mrf.mxu0
      %v3118 = vadd.f32 0.0, %v3117
      %v3119 = vpop.f32.mrf.mxu0
      %v3120 = vadd.f32 0.0, %v3119
      %3121 = vmatmul.bf16.gmra.mxu0 %v2997
      %v3122 = vpop.f32.mrf.mxu0
      %v3123 = vadd.f32 0.0, %v3122
      %v3124 = vpop.f32.mrf.mxu0
      %v3125 = vadd.f32 0.0, %v3124
      %3126 = vmatmul.bf16.gmra.mxu0 %v2999
      %v3127 = vpop.f32.mrf.mxu0
      %v3128 = vadd.f32 0.0, %v3127
      %v3129 = vpop.f32.mrf.mxu0
      %v3130 = vadd.f32 0.0, %v3129
      %3131 = vmatmul.bf16.gmra.mxu0 %v3001
      %v3132 = vpop.f32.mrf.mxu0
      %v3133 = vadd.f32 0.0, %v3132
      %v3134 = vpop.f32.mrf.mxu0
      %v3135 = vadd.f32 0.0, %v3134
      %3136 = vmatmul.bf16.gmra.mxu0 %v3003
      %v3137 = vpop.f32.mrf.mxu0
      %v3138 = vadd.f32 0.0, %v3137
      %v3139 = vpop.f32.mrf.mxu0
      %v3140 = vadd.f32 0.0, %v3139
      %3141 = vmatmul.bf16.gmra.mxu0 %v3005
      %v3142 = vpop.f32.mrf.mxu0
      %v3143 = vadd.f32 0.0, %v3142
      %v3144 = vpop.f32.mrf.mxu0
      %v3145 = vadd.f32 0.0, %v3144
      %3146 = vmatmul.bf16.gmra.mxu0 %v3007
      %v3147 = vpop.f32.mrf.mxu0
      %v3148 = vadd.f32 0.0, %v3147
      %v3149 = vpop.f32.mrf.mxu0
      %v3150 = vadd.f32 0.0, %v3149
      %3151 = vmatmul.bf16.gmra.mxu0 %v3009
      %v3152 = vpop.f32.mrf.mxu0
      %v3153 = vadd.f32 0.0, %v3152
      %v3154 = vpop.f32.mrf.mxu0
      %v3155 = vadd.f32 0.0, %v3154
      %3156 = vmatmul.bf16.gmra.mxu0 %v3011
      %v3157 = vpop.f32.mrf.mxu0
      %v3158 = vadd.f32 0.0, %v3157
      %v3159 = vpop.f32.mrf.mxu0
      %v3160 = vadd.f32 0.0, %v3159
      %3161 = vmatmul.bf16.gmra.mxu0 %v3013
      %v3162 = vpop.f32.mrf.mxu0
      %v3163 = vadd.f32 0.0, %v3162
      %v3164 = vpop.f32.mrf.mxu0
      %v3165 = vadd.f32 0.0, %v3164
      %3166 = vmatmul.bf16.gmra.mxu0 %v3015
      %v3167 = vpop.f32.mrf.mxu0
      %v3168 = vadd.f32 0.0, %v3167
      %v3169 = vpop.f32.mrf.mxu0
      %v3170 = vadd.f32 0.0, %v3169
      %3171 = vmatmul.bf16.gmra.mxu0 %v3017
      %v3172 = vpop.f32.mrf.mxu0
      %v3173 = vadd.f32 0.0, %v3172
      %v3174 = vpop.f32.mrf.mxu0
      %v3175 = vadd.f32 0.0, %v3174
      %3176 = vmatmul.bf16.gmra.mxu0 %v3019
      %v3177 = vpop.f32.mrf.mxu0
      %v3178 = vadd.f32 0.0, %v3177
      %v3179 = vpop.f32.mrf.mxu0
      %v3180 = vadd.f32 0.0, %v3179
      %3181 = vmatmul.bf16.gmra.mxu0 %v3021
      %v3182 = vpop.f32.mrf.mxu0
      %v3183 = vadd.f32 0.0, %v3182
      %v3184 = vpop.f32.mrf.mxu0
      %v3185 = vadd.f32 0.0, %v3184
      %3186 = vdwg.mxu0
      %v3187 = vadd.f32 %v2927, %v3098
      %v3188 = vadd.f32 %v2928, %v3100
      %v3189 = vadd.f32 %v2929, %v3103
      %v3190 = vadd.f32 %v2930, %v3105
      %v3191 = vadd.f32 %v2931, %v3108
      %v3192 = vadd.f32 %v2932, %v3110
      %v3193 = vadd.f32 %v2933, %v3113
      %v3194 = vadd.f32 %v2934, %v3115
      %v3195 = vadd.f32 %v2935, %v3118
      %v3196 = vadd.f32 %v2936, %v3120
      %v3197 = vadd.f32 %v2937, %v3123
      %v3198 = vadd.f32 %v2938, %v3125
      %v3199 = vadd.f32 %v2939, %v3128
      %v3200 = vadd.f32 %v2940, %v3130
      %v3201 = vadd.f32 %v2941, %v3133
      %v3202 = vadd.f32 %v2942, %v3135
      %v3203 = vadd.f32 %v2943, %v3138
      %v3204 = vadd.f32 %v2944, %v3140
      %v3205 = vadd.f32 %v2945, %v3143
      %v3206 = vadd.f32 %v2946, %v3145
      %v3207 = vadd.f32 %v2947, %v3148
      %v3208 = vadd.f32 %v2948, %v3150
      %v3209 = vadd.f32 %v2949, %v3153
      %v3210 = vadd.f32 %v2950, %v3155
      %v3211 = vadd.f32 %v2951, %v3158
      %v3212 = vadd.f32 %v2952, %v3160
      %v3213 = vadd.f32 %v2953, %v3163
      %v3214 = vadd.f32 %v2954, %v3165
      %v3215 = vadd.f32 %v2955, %v3168
      %v3216 = vadd.f32 %v2956, %v3170
      %v3217 = vadd.f32 %v2957, %v3173
      %v3218 = vadd.f32 %v2958, %v3175
      %v3219 = vadd.f32 %v2959, %v3178
      %v3220 = vadd.f32 %v2960, %v3180
      %v3221 = vadd.f32 %v2961, %v3183
      %v3222 = vadd.f32 %v2962, %v3185
      %v3223 = vld [vmem:[%s238] sm:$0x1]
      %v3225 = vperm.slane %v3223, 0
      %v3227 = vadd.f32 %v3187, %v3225
      %v3228 = vadd.f32 %v3188, %v3225
      %v3229 = vadd.f32 %v3189, %v3225
      %v3230 = vadd.f32 %v3190, %v3225
      %v3231 = vadd.f32 %v3191, %v3225
      %v3232 = vadd.f32 %v3192, %v3225
      %v3233 = vadd.f32 %v3193, %v3225
      %v3234 = vadd.f32 %v3194, %v3225
      %v3235 = vadd.f32 %v3195, %v3225
      %v3236 = vadd.f32 %v3196, %v3225
      %v3237 = vadd.f32 %v3197, %v3225
      %v3238 = vadd.f32 %v3198, %v3225
      %v3239 = vadd.f32 %v3199, %v3225
      %v3240 = vadd.f32 %v3200, %v3225
      %v3241 = vadd.f32 %v3201, %v3225
      %v3242 = vadd.f32 %v3202, %v3225
      %v3243 = vadd.f32 %v3203, %v3225
      %v3244 = vadd.f32 %v3204, %v3225
      %v3245 = vadd.f32 %v3205, %v3225
      %v3246 = vadd.f32 %v3206, %v3225
      %v3247 = vadd.f32 %v3207, %v3225
      %v3248 = vadd.f32 %v3208, %v3225
      %v3249 = vadd.f32 %v3209, %v3225
      %v3250 = vadd.f32 %v3210, %v3225
      %v3251 = vadd.f32 %v3211, %v3225
      %v3252 = vadd.f32 %v3212, %v3225
      %v3253 = vadd.f32 %v3213, %v3225
      %v3254 = vadd.f32 %v3214, %v3225
      %v3255 = vadd.f32 %v3215, %v3225
      %v3256 = vadd.f32 %v3216, %v3225
      %v3257 = vadd.f32 %v3217, %v3225
      %v3258 = vadd.f32 %v3218, %v3225
      %v3259 = vadd.f32 %v3219, %v3225
      %v3260 = vadd.f32 %v3220, %v3225
      %v3261 = vadd.f32 %v3221, %v3225
      %v3262 = vadd.f32 %v3222, %v3225
      %v3263 = vmax.f32 %v3227, 0.0
      %v3264 = vmax.f32 %v3228, 0.0
      %v3265 = vmax.f32 %v3229, 0.0
      %v3266 = vmax.f32 %v3230, 0.0
      %v3267 = vmax.f32 %v3231, 0.0
      %v3268 = vmax.f32 %v3232, 0.0
      %v3269 = vmax.f32 %v3233, 0.0
      %v3270 = vmax.f32 %v3234, 0.0
      %v3271 = vmax.f32 %v3235, 0.0
      %v3272 = vmax.f32 %v3236, 0.0
      %v3273 = vmax.f32 %v3237, 0.0
      %v3274 = vmax.f32 %v3238, 0.0
      %v3275 = vmax.f32 %v3239, 0.0
      %v3276 = vmax.f32 %v3240, 0.0
      %v3277 = vmax.f32 %v3241, 0.0
      %v3278 = vmax.f32 %v3242, 0.0
      %v3279 = vmax.f32 %v3243, 0.0
      %v3280 = vmax.f32 %v3244, 0.0
      %v3281 = vmax.f32 %v3245, 0.0
      %v3282 = vmax.f32 %v3246, 0.0
      %v3283 = vmax.f32 %v3247, 0.0
      %v3284 = vmax.f32 %v3248, 0.0
      %v3285 = vmax.f32 %v3249, 0.0
      %v3286 = vmax.f32 %v3250, 0.0
      %v3287 = vmax.f32 %v3251, 0.0
      %v3288 = vmax.f32 %v3252, 0.0
      %v3289 = vmax.f32 %v3253, 0.0
      %v3290 = vmax.f32 %v3254, 0.0
      %v3291 = vmax.f32 %v3255, 0.0
      %v3292 = vmax.f32 %v3256, 0.0
      %v3293 = vmax.f32 %v3257, 0.0
      %v3294 = vmax.f32 %v3258, 0.0
      %v3295 = vmax.f32 %v3259, 0.0
      %v3296 = vmax.f32 %v3260, 0.0
      %v3297 = vmax.f32 %v3261, 0.0
      %v3298 = vmax.f32 %v3262, 0.0
      %v3299 = vld [vmem:[%s3] sm:$0xff]
      %v3300 = vld [vmem:[%s3 + $0x8] sm:$0xff]
      %v3301 = vld [vmem:[%s3 + $0x10] sm:$0xff]
      %v3302 = vld [vmem:[%s3 + $0x18] sm:$0xff]
      %v3303 = vld [vmem:[%s3 + $0x20] sm:$0xff]
      %v3304 = vld [vmem:[%s3 + $0x28] sm:$0xff]
      %v3305 = vld [vmem:[%s3 + $0x30] sm:$0xff]
      %v3306 = vld [vmem:[%s3 + $0x38] sm:$0xff]
      %v3307 = vld [vmem:[%s3 + $0x40] sm:$0xff]
      %v3308 = vld [vmem:[%s3 + $0x48] sm:$0xff]
      %v3309 = vld [vmem:[%s3 + $0x50] sm:$0xff]
      %v3310 = vld [vmem:[%s3 + $0x58] sm:$0xff]
      %v3311 = vld [vmem:[%s3 + $0x60] sm:$0xff]
      %v3312 = vld [vmem:[%s3 + $0x68] sm:$0xff]
      %v3313 = vld [vmem:[%s3 + $0x70] sm:$0xff]
      %v3314 = vld [vmem:[%s3 + $0x78] sm:$0xff]
      %v3315 = vld [vmem:[%s3 + $0x80] sm:$0xff]
      %v3316 = vld [vmem:[%s3 + $0x88] sm:$0xff]
      %v3317 = vld [vmem:[%s3 + $0x90] sm:$0xff]
      %v3318 = vld [vmem:[%s3 + $0x98] sm:$0xff]
      %v3319 = vld [vmem:[%s3 + $0xa0] sm:$0xff]
      %v3320 = vld [vmem:[%s3 + $0xa8] sm:$0xff]
      %v3321 = vld [vmem:[%s3 + $0xb0] sm:$0xff]
      %v3322 = vld [vmem:[%s3 + $0xb8] sm:$0xff]
      %v3323 = vld [vmem:[%s3 + $0xc0] sm:$0xff]
      %v3324 = vld [vmem:[%s3 + $0xc8] sm:$0xff]
      %v3325 = vld [vmem:[%s3 + $0xd0] sm:$0xff]
      %v3326 = vld [vmem:[%s3 + $0xd8] sm:$0xff]
      %v3327 = vld [vmem:[%s3 + $0xe0] sm:$0xff]
      %v3328 = vld [vmem:[%s3 + $0xe8] sm:$0xff]
      %v3329 = vld [vmem:[%s3 + $0xf0] sm:$0xff]
      %v3330 = vld [vmem:[%s3 + $0xf8] sm:$0xff]
      %v3331 = vld [vmem:[%s3 + $0x100] sm:$0xff]
      %v3332 = vld [vmem:[%s3 + $0x108] sm:$0xff]
      %v3333 = vld [vmem:[%s3 + $0x110] sm:$0xff]
      %v3334 = vld [vmem:[%s3 + $0x118] sm:$0xff]
      %3336 = vset.pattern.permute.xlu0 0
      %3337 = vperm.xlu0 %3336, %v3299
      %v3338 = vpop.permute.xlu0 %3337
      %3341 = vset.pattern.permute.xlu0 0
      %3342 = vperm.xlu0 %3341, %v3300
      %v3343 = vpop.permute.xlu0 %3342
      %3346 = vset.pattern.permute.xlu0 0
      %3347 = vperm.xlu0 %3346, %v3301
      %v3348 = vpop.permute.xlu0 %3347
      %3351 = vset.pattern.permute.xlu0 0
      %3352 = vperm.xlu0 %3351, %v3302
      %v3353 = vpop.permute.xlu0 %3352
      %3356 = vset.pattern.permute.xlu0 0
      %3357 = vperm.xlu0 %3356, %v3303
      %v3358 = vpop.permute.xlu0 %3357
      %3361 = vset.pattern.permute.xlu0 0
      %3362 = vperm.xlu0 %3361, %v3304
      %v3363 = vpop.permute.xlu0 %3362
      %3366 = vset.pattern.permute.xlu0 0
      %3367 = vperm.xlu0 %3366, %v3305
      %v3368 = vpop.permute.xlu0 %3367
      %3371 = vset.pattern.permute.xlu0 0
      %3372 = vperm.xlu0 %3371, %v3306
      %v3373 = vpop.permute.xlu0 %3372
      %3376 = vset.pattern.permute.xlu0 0
      %3377 = vperm.xlu0 %3376, %v3307
      %v3378 = vpop.permute.xlu0 %3377
      %3381 = vset.pattern.permute.xlu0 0
      %3382 = vperm.xlu0 %3381, %v3308
      %v3383 = vpop.permute.xlu0 %3382
      %3386 = vset.pattern.permute.xlu0 0
      %3387 = vperm.xlu0 %3386, %v3309
      %v3388 = vpop.permute.xlu0 %3387
      %3391 = vset.pattern.permute.xlu0 0
      %3392 = vperm.xlu0 %3391, %v3310
      %v3393 = vpop.permute.xlu0 %3392
      %3396 = vset.pattern.permute.xlu0 0
      %3397 = vperm.xlu0 %3396, %v3311
      %v3398 = vpop.permute.xlu0 %3397
      %3401 = vset.pattern.permute.xlu0 0
      %3402 = vperm.xlu0 %3401, %v3312
      %v3403 = vpop.permute.xlu0 %3402
      %3406 = vset.pattern.permute.xlu0 0
      %3407 = vperm.xlu0 %3406, %v3313
      %v3408 = vpop.permute.xlu0 %3407
      %3411 = vset.pattern.permute.xlu0 0
      %3412 = vperm.xlu0 %3411, %v3314
      %v3413 = vpop.permute.xlu0 %3412
      %3416 = vset.pattern.permute.xlu0 0
      %3417 = vperm.xlu0 %3416, %v3315
      %v3418 = vpop.permute.xlu0 %3417
      %3421 = vset.pattern.permute.xlu0 0
      %3422 = vperm.xlu0 %3421, %v3316
      %v3423 = vpop.permute.xlu0 %3422
      %3426 = vset.pattern.permute.xlu0 0
      %3427 = vperm.xlu0 %3426, %v3317
      %v3428 = vpop.permute.xlu0 %3427
      %3431 = vset.pattern.permute.xlu0 0
      %3432 = vperm.xlu0 %3431, %v3318
      %v3433 = vpop.permute.xlu0 %3432
      %3436 = vset.pattern.permute.xlu0 0
      %3437 = vperm.xlu0 %3436, %v3319
      %v3438 = vpop.permute.xlu0 %3437
      %3441 = vset.pattern.permute.xlu0 0
      %3442 = vperm.xlu0 %3441, %v3320
      %v3443 = vpop.permute.xlu0 %3442
      %3446 = vset.pattern.permute.xlu0 0
      %3447 = vperm.xlu0 %3446, %v3321
      %v3448 = vpop.permute.xlu0 %3447
      %3451 = vset.pattern.permute.xlu0 0
      %3452 = vperm.xlu0 %3451, %v3322
      %v3453 = vpop.permute.xlu0 %3452
      %3456 = vset.pattern.permute.xlu0 0
      %3457 = vperm.xlu0 %3456, %v3323
      %v3458 = vpop.permute.xlu0 %3457
      %3461 = vset.pattern.permute.xlu0 0
      %3462 = vperm.xlu0 %3461, %v3324
      %v3463 = vpop.permute.xlu0 %3462
      %3466 = vset.pattern.permute.xlu0 0
      %3467 = vperm.xlu0 %3466, %v3325
      %v3468 = vpop.permute.xlu0 %3467
      %3471 = vset.pattern.permute.xlu0 0
      %3472 = vperm.xlu0 %3471, %v3326
      %v3473 = vpop.permute.xlu0 %3472
      %3476 = vset.pattern.permute.xlu0 0
      %3477 = vperm.xlu0 %3476, %v3327
      %v3478 = vpop.permute.xlu0 %3477
      %3481 = vset.pattern.permute.xlu0 0
      %3482 = vperm.xlu0 %3481, %v3328
      %v3483 = vpop.permute.xlu0 %3482
      %3486 = vset.pattern.permute.xlu0 0
      %3487 = vperm.xlu0 %3486, %v3329
      %v3488 = vpop.permute.xlu0 %3487
      %3491 = vset.pattern.permute.xlu0 0
      %3492 = vperm.xlu0 %3491, %v3330
      %v3493 = vpop.permute.xlu0 %3492
      %3496 = vset.pattern.permute.xlu0 0
      %3497 = vperm.xlu0 %3496, %v3331
      %v3498 = vpop.permute.xlu0 %3497
      %3501 = vset.pattern.permute.xlu0 0
      %3502 = vperm.xlu0 %3501, %v3332
      %v3503 = vpop.permute.xlu0 %3502
      %3506 = vset.pattern.permute.xlu0 0
      %3507 = vperm.xlu0 %3506, %v3333
      %v3508 = vpop.permute.xlu0 %3507
      %3511 = vset.pattern.permute.xlu0 0
      %3512 = vperm.xlu0 %3511, %v3334
      %v3513 = vpop.permute.xlu0 %3512
      %v3515 = vmul.f32 %v3263, %v3338
      %v3516 = vmul.f32 %v3264, %v3343
      %v3517 = vmul.f32 %v3265, %v3348
      %v3518 = vmul.f32 %v3266, %v3353
      %v3519 = vmul.f32 %v3267, %v3358
      %v3520 = vmul.f32 %v3268, %v3363
      %v3521 = vmul.f32 %v3269, %v3368
      %v3522 = vmul.f32 %v3270, %v3373
      %v3523 = vmul.f32 %v3271, %v3378
      %v3524 = vmul.f32 %v3272, %v3383
      %v3525 = vmul.f32 %v3273, %v3388
      %v3526 = vmul.f32 %v3274, %v3393
      %v3527 = vmul.f32 %v3275, %v3398
      %v3528 = vmul.f32 %v3276, %v3403
      %v3529 = vmul.f32 %v3277, %v3408
      %v3530 = vmul.f32 %v3278, %v3413
      %v3531 = vmul.f32 %v3279, %v3418
      %v3532 = vmul.f32 %v3280, %v3423
      %v3533 = vmul.f32 %v3281, %v3428
      %v3534 = vmul.f32 %v3282, %v3433
      %v3535 = vmul.f32 %v3283, %v3438
      %v3536 = vmul.f32 %v3284, %v3443
      %v3537 = vmul.f32 %v3285, %v3448
      %v3538 = vmul.f32 %v3286, %v3453
      %v3539 = vmul.f32 %v3287, %v3458
      %v3540 = vmul.f32 %v3288, %v3463
      %v3541 = vmul.f32 %v3289, %v3468
      %v3542 = vmul.f32 %v3290, %v3473
      %v3543 = vmul.f32 %v3291, %v3478
      %v3544 = vmul.f32 %v3292, %v3483
      %v3545 = vmul.f32 %v3293, %v3488
      %v3546 = vmul.f32 %v3294, %v3493
      %v3547 = vmul.f32 %v3295, %v3498
      %v3548 = vmul.f32 %v3296, %v3503
      %v3549 = vmul.f32 %v3297, %v3508
      %v3550 = vmul.f32 %v3298, %v3513
      %v3551 = vadd.f32 %v3515, %v3516
      %v3552 = vadd.f32 %v3551, %v3517
      %v3553 = vadd.f32 %v3552, %v3518
      %v3554 = vadd.f32 %v3553, %v3519
      %v3555 = vadd.f32 %v3554, %v3520
      %v3556 = vadd.f32 %v3555, %v3521
      %v3557 = vadd.f32 %v3556, %v3522
      %v3558 = vadd.f32 %v3557, %v3523
      %v3559 = vadd.f32 %v3558, %v3524
      %v3560 = vadd.f32 %v3559, %v3525
      %v3561 = vadd.f32 %v3560, %v3526
      %v3562 = vadd.f32 %v3561, %v3527
      %v3563 = vadd.f32 %v3562, %v3528
      %v3564 = vadd.f32 %v3563, %v3529
      %v3565 = vadd.f32 %v3564, %v3530
      %v3566 = vadd.f32 %v3565, %v3531
      %v3567 = vadd.f32 %v3566, %v3532
      %v3568 = vadd.f32 %v3567, %v3533
      %v3569 = vadd.f32 %v3568, %v3534
      %v3570 = vadd.f32 %v3569, %v3535
      %v3571 = vadd.f32 %v3570, %v3536
      %v3572 = vadd.f32 %v3571, %v3537
      %v3573 = vadd.f32 %v3572, %v3538
      %v3574 = vadd.f32 %v3573, %v3539
      %v3575 = vadd.f32 %v3574, %v3540
      %v3576 = vadd.f32 %v3575, %v3541
      %v3577 = vadd.f32 %v3576, %v3542
      %v3578 = vadd.f32 %v3577, %v3543
      %v3579 = vadd.f32 %v3578, %v3544
      %v3580 = vadd.f32 %v3579, %v3545
      %v3581 = vadd.f32 %v3580, %v3546
      %v3582 = vadd.f32 %v3581, %v3547
      %v3583 = vadd.f32 %v3582, %v3548
      %v3584 = vadd.f32 %v3583, %v3549
      %v3585 = vadd.f32 %v3584, %v3550
      %v3586 = vrot.slane %v3585, 4
      %v3587 = vadd.f32 %v3585, %v3586
      %v3588 = vrot.slane %v3587, 2
      %v3589 = vadd.f32 %v3587, %v3588
      %v3590 = vrot.slane %v3589, 1
      %v3591 = vadd.f32 %v3589, %v3590
      %v3592 = vmul.f32 %v3591, 0.00390625
      %3593 = vst [vmem:[%s244] sm:$0x1] %v3592
      %p3594 = scmp.lt.s32.totalorder %s19, 1
      %s3595 = scalar_select %p3594, %s19, 1
      %p3596 = scmp.lt.s32.totalorder %s20, 0
      %s3597 = scalar_select %p3596, %s20, 0
      %s3598 = sadd.s32 %s3597, %s3595
      %s3599 = scalar_lea.vmem %s4, %s3598
      // Predicated region
      $region37: #{encoder_cnn_forward.4} parent=35 // pred_check
        %p3600 = pneg %p146
      $region38: #{encoder_cnn_forward.4} parent=35 // pred_check_branch
        %3602 = sbr.rel (%p3600) target = $region40
      $region39: #{encoder_cnn_forward.4} parent=35 // pred_region
        _
      $region40: #{encoder_cnn_forward.4} parent=35 // pred_fallthru
        _
    $region36: #{encoder_cnn_forward.4} parent=5 // pred_fallthru
      _
    %p3603 = scmp.le.s32.totalorder 2, %s10
    // Predicated region
    $region41: #{encoder_cnn_forward.4} parent=5 // pred_check
      %p3604 = pneg %p3603
    $region42: #{encoder_cnn_forward.4} parent=5 // pred_check_branch
      %3606 = sbr.rel (%p3604) target = $region44
    $region43: #{encoder_cnn_forward.4} parent=5 // pred_region
      %s3607 = ssub.s32 %s10, 2
      // Predicated region
      $region45: #{encoder_cnn_forward.4} parent=43 // pred_check
        %p3608 = pneg %p152
      $region46: #{encoder_cnn_forward.4} parent=43 // pred_check_branch
        %3610 = sbr.rel (%p3608) target = $region48
      $region47: #{encoder_cnn_forward.4} parent=43 // pred_region
        %p3611 = scmp.lt.s32.totalorder %s21, 1
        %s3612 = scalar_select %p3611, %s21, 1
        %p3613 = scmp.lt.s32.totalorder %s22, 0
        %s3614 = scalar_select %p3613, %s22, 0
        %s3615 = sadd.s32 %s3614, %s3612
        %s3616 = scalar_lea.vmem %s4, %s3615
      $region48: #{encoder_cnn_forward.4} parent=43 // pred_fallthru
        _
    $region44: #{encoder_cnn_forward.4} parent=5 // pred_fallthru
      _
  $region6: #{encoder_cnn_forward.4} parent=0 // loop_footer
    %s14 = sadd.s32 1, %s10
  $region7: #{encoder_cnn_forward.4} parent=0 // loop_footer_branch
    %9 = sbr.rel target = $region3
  $region8: #{encoder_cnn_forward.4} parent=0 // loop_exit
    _

</llo_original>
